<compile_context>
chip_gen: v5e
topology: v5e:2x2
jax: 0.10.0
libtpu: 0.0.40
codegen_flags: <defaults>
</compile_context>

<pallas_src>
import functools
import math

import numpy as np
import jax
import jax.numpy as jnp
from jax.experimental import pallas as pl
from jax.experimental.pallas import tpu as pltpu

# fp32 contraction on the MXU keeps the 1e-4 reference tolerances and the exact
# nearest-downsample selection.
# TODO(synk): Precision.HIGH halves MXU passes and is likely sufficient once
# planes are large enough to be MXU-bound (v5e first); kept HIGHEST for safety.
_PREC = jax.lax.Precision.HIGHEST


# --------------------------------------------------------------------------- #
# Host-side construction of the banded blur / downsample matrices.
# --------------------------------------------------------------------------- #
def _gaussian_kernel1d(ksize: int, sigma: float) -> np.ndarray:
    """kornia.filters.get_gaussian_kernel1d semantics (normalized to sum 1)."""
    x = np.arange(ksize, dtype=np.float64) - ksize // 2
    if ksize % 2 == 0:
        x = x + 0.5
    g = np.exp(-(x ** 2) / (2.0 * float(sigma) ** 2))
    return g / g.sum()


def _reflect_index(p: int, n: int) -> int:
    """'reflect' (no edge repeat) index folding; matches torch/np reflect pad."""
    if n == 1:
        return 0
    period = 2 * (n - 1)
    p = p % period
    if p >= n:
        p = period - p
    return p


def _blur_matrices(h: int, w: int, ksize: int, sigma: float):
    """Banded matrices Gv (h,h), GhT (w,w) so that blur(X) = Gv @ X @ GhT with
    reflect border handling baked in."""
    g = _gaussian_kernel1d(ksize, sigma)
    pad = (ksize - 1) // 2
    gv = np.zeros((h, h), np.float64)
    for i in range(h):
        for k in range(ksize):
            gv[i, _reflect_index(i + k - pad, h)] += g[k]
    ght = np.zeros((w, w), np.float64)
    for j in range(w):
        for k in range(ksize):
            ght[_reflect_index(j + k - pad, w), j] += g[k]
    return gv.astype(np.float32), ght.astype(np.float32)


@functools.lru_cache(maxsize=None)
def _downsample_matrices(h: int, w: int):
    """Selection matrices for F.interpolate(scale_factor=0.5, mode='nearest')."""
    hh, wh = h // 2, w // 2
    sv = np.zeros((hh, h), np.float32)
    sv[np.arange(hh), 2 * np.arange(hh)] = 1.0
    sh = np.zeros((w, wh), np.float32)
    sh[2 * np.arange(wh), np.arange(wh)] = 1.0
    return sv, sh


@functools.lru_cache(maxsize=None)
def _octave_matrices_np(h, w, nl, start_sigma, sigma_step, first_blur):
    """Stacked (nl,h,h)/(nl,w,w) blur matrices for one octave plus the per-level
    cumulative sigmas (entry 0 is the octave-entry sigma)."""
    if first_blur is not None:
        gv0, ght0 = _blur_matrices(h, w, first_blur[0], first_blur[1])
    else:
        gv0, ght0 = np.eye(h, dtype=np.float32), np.eye(w, dtype=np.float32)
    gv_list, ght_list = [gv0], [ght0]
    level_sigmas = [start_sigma]
    sig = start_sigma
    for _lvl in range(1, nl):
        sigma = sig * math.sqrt(sigma_step ** 2 - 1.0)
        ksize = int(2.0 * 4.0 * sigma + 1.0)
        if ksize % 2 == 0:
            ksize += 1
        ksize = min(ksize, min(h, w))
        if ksize % 2 == 0:
            ksize += 1
        gv, ght = _blur_matrices(h, w, ksize, sigma)
        gv_list.append(gv)
        ght_list.append(ght)
        sig *= sigma_step
        level_sigmas.append(sig)
    return np.stack(gv_list), np.stack(ght_list), tuple(level_sigmas)


# --------------------------------------------------------------------------- #
# Generation-aware sizing.
# --------------------------------------------------------------------------- #
@functools.lru_cache(maxsize=None)
def _tpu_limits():
    """Best-effort (per-core VMEM capacity bytes, TensorCores per chip)."""
    vmem_cap = 64 * 2 ** 20          # conservative default (v7x per-core VMEM)
    try:
        info = pltpu.get_tpu_info()
        cap = getattr(info, "vmem_capacity_bytes", None)
        if cap:
            vmem_cap = int(cap)
    except Exception:
        pass
    # Heuristic: v7x exposes ~64 MiB / TensorCore and has 2 TCs per chip,
    # v5e/v6e have 128 MiB and a single TC.
    cores = 2 if vmem_cap <= 80 * 2 ** 20 else 1
    return vmem_cap, cores


def _pick_bc_tile(n_planes, per_plane_bytes, budget_bytes, cores):
    best = 1
    for t in range(1, n_planes + 1):
        if n_planes % t:
            continue                 # TODO(synk): pad planes for prime B*C
        if t > 64:
            continue                 # bound the unrolled per-plane matmul loop
        if t * per_plane_bytes > budget_bytes:
            continue
        if cores >= 2 and n_planes >= 2 and n_planes // t < 2:
            continue                 # keep >= 2 plane tiles on 2-TC chips only
        best = t
    return best


def _single_buffer_spec(block_shape, index_map):
    """Grid-invariant weight input: request a single pipeline buffer."""
    try:
        return pl.BlockSpec(block_shape, index_map, pipeline_mode=pl.Buffered(1))
    except TypeError:                # pipeline_mode not supported -> default
        return pl.BlockSpec(block_shape, index_map)


# --------------------------------------------------------------------------- #
# Pallas kernel: one grid step == one (plane-tile, level) pair.
# --------------------------------------------------------------------------- #
def _make_octave_kernel(bc_tile, apply_first, ds_level, with_ds):
    f32 = jnp.float32

    def _body(x_ref, gv_ref, ght_ref, pyr_ref, cur_ref,
              sv_ref=None, sh_ref=None, ds_ref=None):
        lvl = pl.program_id(1)

        # Level 0: seed the running plane from the input planes.
        @pl.when(lvl == 0)
        def _():
            cur_ref[...] = x_ref[...].astype(f32)

        def _blur():
            cur = cur_ref[...]                       # (bc, h, w), stays f32
            bc, h, w = cur.shape
            # Horizontal pass: all planes merged into the MXU M dimension.
            tmp = jnp.dot(cur.reshape(bc * h, w), ght_ref[...],
                          precision=_PREC, preferred_element_type=f32)
            tmp = tmp.reshape(bc, h, w)
            # Vertical pass: (h, h) @ (h, w) per plane.
            for p in range(bc_tile):
                cur_ref[p] = jnp.dot(gv_ref[...], tmp[p],
                                     precision=_PREC, preferred_element_type=f32)

        if apply_first:              # first octave: level 0 is also blurred
            _blur()
        else:                        # later octaves: level 0 is a plain copy
            pl.when(lvl > 0)(_blur)

        # Stream this level's planes back (overlaps next level's matmuls).
        pyr_ref[...] = cur_ref[...].astype(pyr_ref.dtype)

        if with_ds:
            # Nearest 0.5x downsample of level ds_level seeds the next octave.
            @pl.when(lvl == ds_level)
            def _():
                for p in range(bc_tile):
                    d = jnp.dot(sv_ref[...], cur_ref[p],
                                precision=_PREC, preferred_element_type=f32)
                    ds_ref[p] = jnp.dot(d, sh_ref[...],
                                        precision=_PREC,
                                        preferred_element_type=f32
                                        ).astype(ds_ref.dtype)

    if with_ds:
        def kernel(x_ref, gv_ref, ght_ref, sv_ref, sh_ref, pyr_ref, ds_ref, cur_ref):
            _body(x_ref, gv_ref, ght_ref, pyr_ref, cur_ref, sv_ref, sh_ref, ds_ref)
    else:
        def kernel(x_ref, gv_ref, ght_ref, pyr_ref, cur_ref):
            _body(x_ref, gv_ref, ght_ref, pyr_ref, cur_ref)
    return kernel


@functools.lru_cache(maxsize=None)
def _build_octave_call(n_planes, nl, h, w, apply_first, ds_level, dtype_name, with_ds):
    dtype = np.dtype(dtype_name)
    item = dtype.itemsize
    hh, wh = h // 2, w // 2
    vmem_cap, cores = _tpu_limits()

    # Per-plane resident VMEM: x block + per-level pyramid block (both double
    # buffered), persistent f32 running plane, optional ds output block.
    per_plane = item * h * w * 4 + 4 * h * w
    if with_ds:
        per_plane += item * hh * wh * 2
    budget = max(16 * 2 ** 20, vmem_cap // 3)
    bc_tile = _pick_bc_tile(n_planes, per_plane, budget, cores)
    grid = (n_planes // bc_tile, nl)

    weight_bytes = 2 * 4 * (h * h + w * w)            # per-level gv/ght, 2 buffers
    if with_ds:
        weight_bytes += 4 * (hh * h + w * wh)         # sv/sh, single buffer
    needed = weight_bytes + bc_tile * per_plane
    cap = min(max(vmem_cap - 16 * 2 ** 20, 16 * 2 ** 20), 100 * 2 ** 20)
    vmem_limit = int(min(max(2 * needed + (2 << 20), 16 * 2 ** 20), cap))

    in_specs = [
        pl.BlockSpec((bc_tile, h, w), lambda i, l: (i, 0, 0)),   # fetched once per i
        pl.BlockSpec((None, h, h), lambda i, l: (l, 0, 0)),      # per-level Gv
        pl.BlockSpec((None, w, w), lambda i, l: (l, 0, 0)),      # per-level GhT
    ]
    out_shapes = [jax.ShapeDtypeStruct((n_planes, nl, h, w), dtype)]
    out_specs = [pl.BlockSpec((bc_tile, None, h, w), lambda i, l: (i, l, 0, 0))]
    if with_ds:
        in_specs += [_single_buffer_spec((hh, h), lambda i, l: (0, 0)),
                     _single_buffer_spec((w, wh), lambda i, l: (0, 0))]
        out_shapes.append(jax.ShapeDtypeStruct((n_planes, hh, wh), dtype))
        out_specs.append(pl.BlockSpec((bc_tile, hh, wh), lambda i, l: (i, 0, 0)))

    return pl.pallas_call(
        _make_octave_kernel(bc_tile, apply_first, ds_level, with_ds),
        out_shape=tuple(out_shapes) if with_ds else out_shapes[0],
        grid=grid,
        in_specs=in_specs,
        out_specs=tuple(out_specs) if with_ds else out_specs[0],
        scratch_shapes=[pltpu.VMEM((bc_tile, h, w), jnp.float32)],
        compiler_params=pltpu.CompilerParams(
            dimension_semantics=("parallel", "arbitrary"),
            vmem_limit_bytes=vmem_limit),
    )


# --------------------------------------------------------------------------- #
# Module wrapper.
# --------------------------------------------------------------------------- #
class ScalePyramidPallas:
    """JAX/Pallas re-implementation of kornia ScalePyramid.forward."""

    def __init__(self, n_levels: int = 3, init_sigma: float = 1.6,
                 min_size: int = 15, double_image: bool = False):
        self.n_levels = n_levels
        self.extra_levels = 3
        self.init_sigma = init_sigma
        self.min_size = min_size
        self.border = min_size // 2 - 1
        self.sigma_step = 2 ** (1.0 / float(n_levels))
        self.double_image = double_image
        self._fwd_cache = {}

    def get_kernel_size(self, sigma: float) -> int:
        ksize = int(2.0 * 4.0 * sigma + 1.0)
        if ksize % 2 == 0:
            ksize += 1
        return ksize

    def _build_forward(self, b, c, h, w, dtype):
        nl = self.n_levels + self.extra_levels
        pixel_distance = 1.0
        cur_sigma = 0.5
        if self.double_image:
            # TODO(synk): 2x bilinear (align_corners=False) upsample for double_image=True
            raise NotImplementedError("double_image=True path not implemented")
        if self.init_sigma > cur_sigma:
            first_sigma = max(math.sqrt(self.init_sigma ** 2 - cur_sigma ** 2), 0.01)
            first_blur = (self.get_kernel_size(first_sigma), float(first_sigma))
            cur_sigma = self.init_sigma
        else:
            first_blur = None

        n_planes = b * c
        ds_level = self.n_levels
        octaves, sigmas_list, pd_list = [], [], []
        ph, pw, pd, oct_idx = h, w, pixel_distance, 0
        while True:
            fb = first_blur if oct_idx == 0 else None
            gv, ght, level_sigmas = _octave_matrices_np(
                ph, pw, nl, float(cur_sigma), float(self.sigma_step), fb)
            is_last = min(ph // 2, pw // 2) <= self.min_size
            octave = dict(h=ph, w=pw, apply_first=fb is not None, is_last=is_last,
                          gv=jnp.asarray(gv), ght=jnp.asarray(ght))
            if not is_last:
                sv, sh = _downsample_matrices(ph, pw)
                octave["sv"] = jnp.asarray(sv)
                octave["sh"] = jnp.asarray(sh)
            octaves.append(octave)
            sigmas_list.append(
                jnp.tile(jnp.asarray(level_sigmas, dtype)[None, :], (b, 1)))
            pd_list.append(jnp.full((b, nl), pd, dtype))
            if is_last:
                break
            ph, pw = ph // 2, pw // 2
            pd *= 2.0
            cur_sigma = self.init_sigma
            oct_idx += 1

        dtype_name = np.dtype(dtype).name

        def fwd(x):
            planes = x.reshape(n_planes, h, w)
            outs = []
            for oc in octaves:
                call = _build_octave_call(n_planes, nl, oc["h"], oc["w"],
                                          oc["apply_first"], ds_level,
                                          dtype_name, not oc["is_last"])
                if oc["is_last"]:
                    pyr_planes = call(planes, oc["gv"], oc["ght"])
                else:
                    pyr_planes, planes = call(planes, oc["gv"], oc["ght"],
                                              oc["sv"], oc["sh"])
                outs.append(pyr_planes.reshape(b, c, nl, oc["h"], oc["w"]))
            return tuple(outs)

        return jax.jit(fwd), sigmas_list, pd_list

    def __call__(self, x):
        b, c, h, w = x.shape
        dtype = np.dtype(x.dtype)
        key = (b, c, h, w, dtype.name)
        if key not in self._fwd_cache:
            self._fwd_cache[key] = self._build_forward(b, c, h, w, dtype)
        fwd, sigmas, pds = self._fwd_cache[key]
        pyr = fwd(x)
        return list(pyr), list(sigmas), list(pds)


# --------------------------------------------------------------------------- #
# Pure-JAX reference (for self-checks only).
# --------------------------------------------------------------------------- #
def _ref_gaussian_blur(x, ksize, sigma):
    """Pure-JAX separable reflect-pad Gaussian blur (reference)."""
    g = jnp.asarray(_gaussian_kernel1d(ksize, sigma), jnp.float32)
    pad = (ksize - 1) // 2
    xp = jnp.pad(x, ((0, 0), (0, 0), (pad, pad), (pad, pad)), mode="reflect")
    hh, ww = x.shape[-2], x.shape[-1]
    tmp = sum(xp[:, :, :, k:k + ww] * g[k] for k in range(ksize))
    return sum(tmp[:, :, k:k + hh, :] * g[k] for k in range(ksize))


if __name__ == "__main__":
    key = jax.random.PRNGKey(0)
    x = jax.random.uniform(key, (2, 4, 32, 32), dtype=jnp.float32)

    sp = ScalePyramidPallas(n_levels=3, init_sigma=1.6, min_size=15,
                            double_image=False)
    pyr, sigmas, pds = sp(x)
    for arr in pyr + sigmas + pds:
        jax.block_until_ready(arr)

    nl = sp.n_levels + sp.extra_levels
    # 32x32 -> two octaves (32, 16) before the min_size stop
    assert len(pyr) == 2 and len(sigmas) == 2 and len(pds) == 2
    assert pyr[0].shape == (2, 4, nl, 32, 32)
    assert pyr[1].shape == (2, 4, nl, 16, 16)
    assert sigmas[0].shape == (2, nl) and pds[0].shape == (2, nl)
    assert abs(float(sigmas[0][0, 0]) - 1.6) < 1e-5
    assert abs(float(sigmas[0][0, 1]) - 1.6 * sp.sigma_step) < 1e-5
    assert float(pds[0][0, 0]) == 1.0 and float(pds[1][0, 0]) == 2.0

    # octave 0, level 0 == initial blur of the input
    s0 = math.sqrt(sp.init_sigma ** 2 - 0.5 ** 2)
    k0 = sp.get_kernel_size(s0)
    ref0 = _ref_gaussian_blur(x, k0, s0)
    assert jnp.allclose(pyr[0][:, :, 0], ref0, atol=1e-4, rtol=1e-4)

    # octave 0, level 1 == one more in-octave blur applied to level 0
    s1 = sp.init_sigma * math.sqrt(sp.sigma_step ** 2 - 1.0)
    k1 = min(sp.get_kernel_size(s1), 32)
    if k1 % 2 == 0:
        k1 += 1
    ref1 = _ref_gaussian_blur(ref0, k1, s1)
    assert jnp.allclose(pyr[0][:, :, 1], ref1, atol=1e-4, rtol=1e-4)

    # octave 1, level 0 == nearest 0.5x downsample of octave 0, level n_levels
    ref_ds = pyr[0][:, :, sp.n_levels, ::2, ::2]
    assert jnp.allclose(pyr[1][:, :, 0], ref_ds, atol=1e-5, rtol=1e-5)

    print("KERNEL_OK")
</pallas_src>

<mosaic_0001>
module attributes {stable_mosaic.version = 11 : i64} {
  func.func @kernel(%arg0: i32, %arg1: i32, %arg2: memref<4x16x16xf32, #tpu.memory_space<vmem>>, %arg3: memref<1x16x16xf32, #tpu.memory_space<vmem>>, %arg4: memref<1x16x16xf32, #tpu.memory_space<vmem>>, %arg5: memref<4x1x16x16xf32, #tpu.memory_space<vmem>>, %arg6: memref<4x16x16xf32, #tpu.memory_space<vmem>>) attributes {dimension_semantics = [#tpu.dimension_semantics<parallel>, #tpu.dimension_semantics<arbitrary>], iteration_bounds = array<i64: 2, 6>, scalar_prefetch = 0 : i64, scratch_operands = 1 : i64, tpu.core_type = #tpu.core_type<tc>, window_params = [{transform_indices = @transform_0, window_bounds = array<i64: 4, 16, 16>}, {transform_indices = @transform_1, window_bounds = array<i64: 1, 16, 16>}, {transform_indices = @transform_2, window_bounds = array<i64: 1, 16, 16>}, {transform_indices = @transform_3, window_bounds = array<i64: 4, 1, 16, 16>}]} {
    %c0_i32 = arith.constant 0 : i32
    %0 = arith.cmpi eq, %arg1, %c0_i32 : i32
    %1 = arith.extui %0 : i1 to i32
    %c0_i32_0 = arith.constant 0 : i32
    %2 = arith.cmpi ne, %1, %c0_i32_0 : i32
    scf.if %2 {
      %c0_9 = arith.constant 0 : index
      %c0_10 = arith.constant 0 : index
      %c0_11 = arith.constant 0 : index
      %10 = vector.load %arg2[%c0_9, %c0_10, %c0_11] : memref<4x16x16xf32, #tpu.memory_space<vmem>>, vector<4x16x16xf32>
      %c0_12 = arith.constant 0 : index
      %c0_13 = arith.constant 0 : index
      %c0_14 = arith.constant 0 : index
      %11 = vector.load %arg6[%c0_12, %c0_13, %c0_14] : memref<4x16x16xf32, #tpu.memory_space<vmem>>, vector<4x16x16xf32>
      tpu.vector_store %arg6[%c0_12, %c0_13, %c0_14], %10 {strides = array<i32>} : memref<4x16x16xf32, #tpu.memory_space<vmem>>, vector<4x16x16xf32>,
    } else {
    }
    %c0_i32_1 = arith.constant 0 : i32
    %3 = arith.cmpi sgt, %arg1, %c0_i32_1 : i32
    %4 = arith.extui %3 : i1 to i32
    %c0_i32_2 = arith.constant 0 : i32
    %5 = arith.cmpi ne, %4, %c0_i32_2 : i32
    scf.if %5 {
      %c0_9 = arith.constant 0 : index
      %c0_10 = arith.constant 0 : index
      %c0_11 = arith.constant 0 : index
      %10 = vector.load %arg6[%c0_9, %c0_10, %c0_11] : memref<4x16x16xf32, #tpu.memory_space<vmem>>, vector<4x16x16xf32>
      %11 = vector.shape_cast %10 : vector<4x16x16xf32> to vector<64x16xf32>
      %c0_12 = arith.constant 0 : index
      %c0_13 = arith.constant 0 : index
      %c0_14 = arith.constant 0 : index
      %12 = vector.load %arg4[%c0_12, %c0_13, %c0_14] : memref<1x16x16xf32, #tpu.memory_space<vmem>>, vector<1x16x16xf32>
      %13 = vector.shape_cast %12 : vector<1x16x16xf32> to vector<16x16xf32>
      %cst = arith.constant dense<0.000000e+00> : vector<64x16xf32>
      %14 = tpu.matmul %11, %13, %cst {dimension_numbers = #tpu.dot_dimension_numbers<[1], [0], [0], [1], [0, 0, 1, 1], [], []>, precision = #tpu.contract_precision<fp32>} : vector<64x16xf32>, vector<16x16xf32>, vector<64x16xf32> -> vector<64x16xf32>
      %15 = vector.shape_cast %14 : vector<64x16xf32> to vector<4x16x16xf32>
      %c0_15 = arith.constant 0 : index
      %c0_16 = arith.constant 0 : index
      %c0_17 = arith.constant 0 : index
      %16 = vector.load %arg3[%c0_15, %c0_16, %c0_17] : memref<1x16x16xf32, #tpu.memory_space<vmem>>, vector<1x16x16xf32>
      %17 = vector.shape_cast %16 : vector<1x16x16xf32> to vector<16x16xf32>
      %18 = vector.extract_strided_slice %15 {offsets = [0, 0, 0], sizes = [1, 16, 16], strides = [1, 1, 1]} : vector<4x16x16xf32> to vector<1x16x16xf32>
      %19 = vector.shape_cast %18 : vector<1x16x16xf32> to vector<16x16xf32>
      %cst_18 = arith.constant dense<0.000000e+00> : vector<16x16xf32>
      %20 = tpu.matmul %17, %19, %cst_18 {dimension_numbers = #tpu.dot_dimension_numbers<[1], [0], [0], [1], [0, 0, 1, 1], [], []>, precision = #tpu.contract_precision<fp32>} : vector<16x16xf32>, vector<16x16xf32>, vector<16x16xf32> -> vector<16x16xf32>
      %c0_19 = arith.constant 0 : index
      %c0_20 = arith.constant 0 : index
      %c0_21 = arith.constant 0 : index
      %21 = vector.load %arg6[%c0_19, %c0_20, %c0_21] : memref<4x16x16xf32, #tpu.memory_space<vmem>>, vector<1x16x16xf32>
      %22 = vector.shape_cast %21 : vector<1x16x16xf32> to vector<16x16xf32>
      %23 = vector.shape_cast %20 : vector<16x16xf32> to vector<1x16x16xf32>
      tpu.vector_store %arg6[%c0_19, %c0_20, %c0_21], %23 {strides = array<i32>} : memref<4x16x16xf32, #tpu.memory_space<vmem>>, vector<1x16x16xf32>,
      %c0_22 = arith.constant 0 : index
      %c0_23 = arith.constant 0 : index
      %c0_24 = arith.constant 0 : index
      %24 = vector.load %arg3[%c0_22, %c0_23, %c0_24] : memref<1x16x16xf32, #tpu.memory_space<vmem>>, vector<1x16x16xf32>
      %25 = vector.shape_cast %24 : vector<1x16x16xf32> to vector<16x16xf32>
      %26 = vector.extract_strided_slice %15 {offsets = [1, 0, 0], sizes = [1, 16, 16], strides = [1, 1, 1]} : vector<4x16x16xf32> to vector<1x16x16xf32>
      %27 = vector.shape_cast %26 : vector<1x16x16xf32> to vector<16x16xf32>
      %cst_25 = arith.constant dense<0.000000e+00> : vector<16x16xf32>
      %28 = tpu.matmul %25, %27, %cst_25 {dimension_numbers = #tpu.dot_dimension_numbers<[1], [0], [0], [1], [0, 0, 1, 1], [], []>, precision = #tpu.contract_precision<fp32>} : vector<16x16xf32>, vector<16x16xf32>, vector<16x16xf32> -> vector<16x16xf32>
      %c1 = arith.constant 1 : index
      %c0_26 = arith.constant 0 : index
      %c0_27 = arith.constant 0 : index
      %29 = vector.load %arg6[%c1, %c0_26, %c0_27] : memref<4x16x16xf32, #tpu.memory_space<vmem>>, vector<1x16x16xf32>
      %30 = vector.shape_cast %29 : vector<1x16x16xf32> to vector<16x16xf32>
      %31 = vector.shape_cast %28 : vector<16x16xf32> to vector<1x16x16xf32>
      tpu.vector_store %arg6[%c1, %c0_26, %c0_27], %31 {strides = array<i32>} : memref<4x16x16xf32, #tpu.memory_space<vmem>>, vector<1x16x16xf32>,
      %c0_28 = arith.constant 0 : index
      %c0_29 = arith.constant 0 : index
      %c0_30 = arith.constant 0 : index
      %32 = vector.load %arg3[%c0_28, %c0_29, %c0_30] : memref<1x16x16xf32, #tpu.memory_space<vmem>>, vector<1x16x16xf32>
      %33 = vector.shape_cast %32 : vector<1x16x16xf32> to vector<16x16xf32>
      %34 = vector.extract_strided_slice %15 {offsets = [2, 0, 0], sizes = [1, 16, 16], strides = [1, 1, 1]} : vector<4x16x16xf32> to vector<1x16x16xf32>
      %35 = vector.shape_cast %34 : vector<1x16x16xf32> to vector<16x16xf32>
      %cst_31 = arith.constant dense<0.000000e+00> : vector<16x16xf32>
      %36 = tpu.matmul %33, %35, %cst_31 {dimension_numbers = #tpu.dot_dimension_numbers<[1], [0], [0], [1], [0, 0, 1, 1], [], []>, precision = #tpu.contract_precision<fp32>} : vector<16x16xf32>, vector<16x16xf32>, vector<16x16xf32> -> vector<16x16xf32>
      %c2 = arith.constant 2 : index
      %c0_32 = arith.constant 0 : index
      %c0_33 = arith.constant 0 : index
      %37 = vector.load %arg6[%c2, %c0_32, %c0_33] : memref<4x16x16xf32, #tpu.memory_space<vmem>>, vector<1x16x16xf32>
      %38 = vector.shape_cast %37 : vector<1x16x16xf32> to vector<16x16xf32>
      %39 = vector.shape_cast %36 : vector<16x16xf32> to vector<1x16x16xf32>
      tpu.vector_store %arg6[%c2, %c0_32, %c0_33], %39 {strides = array<i32>} : memref<4x16x16xf32, #tpu.memory_space<vmem>>, vector<1x16x16xf32>,
      %c0_34 = arith.constant 0 : index
      %c0_35 = arith.constant 0 : index
      %c0_36 = arith.constant 0 : index
      %40 = vector.load %arg3[%c0_34, %c0_35, %c0_36] : memref<1x16x16xf32, #tpu.memory_space<vmem>>, vector<1x16x16xf32>
      %41 = vector.shape_cast %40 : vector<1x16x16xf32> to vector<16x16xf32>
      %42 = vector.extract_strided_slice %15 {offsets = [3, 0, 0], sizes = [1, 16, 16], strides = [1, 1, 1]} : vector<4x16x16xf32> to vector<1x16x16xf32>
      %43 = vector.shape_cast %42 : vector<1x16x16xf32> to vector<16x16xf32>
      %cst_37 = arith.constant dense<0.000000e+00> : vector<16x16xf32>
      %44 = tpu.matmul %41, %43, %cst_37 {dimension_numbers = #tpu.dot_dimension_numbers<[1], [0], [0], [1], [0, 0, 1, 1], [], []>, precision = #tpu.contract_precision<fp32>} : vector<16x16xf32>, vector<16x16xf32>, vector<16x16xf32> -> vector<16x16xf32>
      %c3 = arith.constant 3 : index
      %c0_38 = arith.constant 0 : index
      %c0_39 = arith.constant 0 : index
      %45 = vector.load %arg6[%c3, %c0_38, %c0_39] : memref<4x16x16xf32, #tpu.memory_space<vmem>>, vector<1x16x16xf32>
      %46 = vector.shape_cast %45 : vector<1x16x16xf32> to vector<16x16xf32>
      %47 = vector.shape_cast %44 : vector<16x16xf32> to vector<1x16x16xf32>
      tpu.vector_store %arg6[%c3, %c0_38, %c0_39], %47 {strides = array<i32>} : memref<4x16x16xf32, #tpu.memory_space<vmem>>, vector<1x16x16xf32>,
    } else {
    }
    %c0 = arith.constant 0 : index
    %c0_3 = arith.constant 0 : index
    %c0_4 = arith.constant 0 : index
    %6 = vector.load %arg6[%c0, %c0_3, %c0_4] : memref<4x16x16xf32, #tpu.memory_space<vmem>>, vector<4x16x16xf32>
    %c0_5 = arith.constant 0 : index
    %c0_6 = arith.constant 0 : index
    %c0_7 = arith.constant 0 : index
    %c0_8 = arith.constant 0 : index
    %7 = vector.load %arg5[%c0_5, %c0_6, %c0_7, %c0_8] : memref<4x1x16x16xf32, #tpu.memory_space<vmem>>, vector<4x1x16x16xf32>
    %8 = vector.shape_cast %7 : vector<4x1x16x16xf32> to vector<4x16x16xf32>
    %9 = vector.shape_cast %6 : vector<4x16x16xf32> to vector<4x1x16x16xf32>
    tpu.vector_store %arg5[%c0_5, %c0_6, %c0_7, %c0_8], %9 {strides = array<i32>} : memref<4x1x16x16xf32, #tpu.memory_space<vmem>>, vector<4x1x16x16xf32>,
    return
  }
  func.func @transform_0(%arg0: i32, %arg1: i32) -> (i32, i32, i32) {
    %c0_i32 = arith.constant 0 : i32
    %c0_i32_0 = arith.constant 0 : i32
    %c0_i32_1 = arith.constant 0 : i32
    return %arg0, %c0_i32, %c0_i32_0 : i32, i32, i32
  }
  func.func @transform_1(%arg0: i32, %arg1: i32) -> (i32, i32, i32) {
    %c0_i32 = arith.constant 0 : i32
    %c0_i32_0 = arith.constant 0 : i32
    %c0_i32_1 = arith.constant 0 : i32
    return %arg1, %c0_i32, %c0_i32_0 : i32, i32, i32
  }
  func.func @transform_2(%arg0: i32, %arg1: i32) -> (i32, i32, i32) {
    %c0_i32 = arith.constant 0 : i32
    %c0_i32_0 = arith.constant 0 : i32
    %c0_i32_1 = arith.constant 0 : i32
    return %arg1, %c0_i32, %c0_i32_0 : i32, i32, i32
  }
  func.func @transform_3(%arg0: i32, %arg1: i32) -> (i32, i32, i32, i32) {
    %c0_i32 = arith.constant 0 : i32
    %c0_i32_0 = arith.constant 0 : i32
    %c0_i32_1 = arith.constant 0 : i32
    return %arg0, %arg1, %c0_i32, %c0_i32_0 : i32, i32, i32, i32
  }
}

module attributes {stable_mosaic.version = 11 : i64} {
  func.func @kernel(%arg0: i32, %arg1: i32, %arg2: memref<4x32x32xf32, #tpu.memory_space<vmem>>, %arg3: memref<1x32x32xf32, #tpu.memory_space<vmem>>, %arg4: memref<1x32x32xf32, #tpu.memory_space<vmem>>, %arg5: memref<16x32xf32, #tpu.memory_space<vmem>>, %arg6: memref<32x16xf32, #tpu.memory_space<vmem>>, %arg7: memref<4x1x32x32xf32, #tpu.memory_space<vmem>>, %arg8: memref<4x16x16xf32, #tpu.memory_space<vmem>>, %arg9: memref<4x32x32xf32, #tpu.memory_space<vmem>>) attributes {dimension_semantics = [#tpu.dimension_semantics<parallel>, #tpu.dimension_semantics<arbitrary>], iteration_bounds = array<i64: 2, 6>, scalar_prefetch = 0 : i64, scratch_operands = 1 : i64, tpu.core_type = #tpu.core_type<tc>, window_params = [{transform_indices = @transform_0, window_bounds = array<i64: 4, 32, 32>}, {transform_indices = @transform_1, window_bounds = array<i64: 1, 32, 32>}, {transform_indices = @transform_2, window_bounds = array<i64: 1, 32, 32>}, {pipeline_mode = #tpu.pipeline_mode<synchronous>, transform_indices = @transform_3, window_bounds = array<i64: 16, 32>}, {pipeline_mode = #tpu.pipeline_mode<synchronous>, transform_indices = @transform_4, window_bounds = array<i64: 32, 16>}, {transform_indices = @transform_5, window_bounds = array<i64: 4, 1, 32, 32>}, {transform_indices = @transform_6, window_bounds = array<i64: 4, 16, 16>}]} {
    %c0_i32 = arith.constant 0 : i32
    %0 = arith.cmpi eq, %arg1, %c0_i32 : i32
    %1 = arith.extui %0 : i1 to i32
    %c0_i32_0 = arith.constant 0 : i32
    %2 = arith.cmpi ne, %1, %c0_i32_0 : i32
    scf.if %2 {
      %c0_39 = arith.constant 0 : index
      %c0_40 = arith.constant 0 : index
      %c0_41 = arith.constant 0 : index
      %48 = vector.load %arg2[%c0_39, %c0_40, %c0_41] : memref<4x32x32xf32, #tpu.memory_space<vmem>>, vector<4x32x32xf32>
      %c0_42 = arith.constant 0 : index
      %c0_43 = arith.constant 0 : index
      %c0_44 = arith.constant 0 : index
      %49 = vector.load %arg9[%c0_42, %c0_43, %c0_44] : memref<4x32x32xf32, #tpu.memory_space<vmem>>, vector<4x32x32xf32>
      tpu.vector_store %arg9[%c0_42, %c0_43, %c0_44], %48 {strides = array<i32>} : memref<4x32x32xf32, #tpu.memory_space<vmem>>, vector<4x32x32xf32>,
    } else {
    }
    %c0 = arith.constant 0 : index
    %c0_1 = arith.constant 0 : index
    %c0_2 = arith.constant 0 : index
    %3 = vector.load %arg9[%c0, %c0_1, %c0_2] : memref<4x32x32xf32, #tpu.memory_space<vmem>>, vector<4x32x32xf32>
    %4 = vector.shape_cast %3 : vector<4x32x32xf32> to vector<128x32xf32>
    %c0_3 = arith.constant 0 : index
    %c0_4 = arith.constant 0 : index
    %c0_5 = arith.constant 0 : index
    %5 = vector.load %arg4[%c0_3, %c0_4, %c0_5] : memref<1x32x32xf32, #tpu.memory_space<vmem>>, vector<1x32x32xf32>
    %6 = vector.shape_cast %5 : vector<1x32x32xf32> to vector<32x32xf32>
    %cst = arith.constant dense<0.000000e+00> : vector<128x32xf32>
    %7 = tpu.matmul %4, %6, %cst {dimension_numbers = #tpu.dot_dimension_numbers<[1], [0], [0], [1], [0, 0, 1, 1], [], []>, precision = #tpu.contract_precision<fp32>} : vector<128x32xf32>, vector<32x32xf32>, vector<128x32xf32> -> vector<128x32xf32>
    %8 = vector.shape_cast %7 : vector<128x32xf32> to vector<4x32x32xf32>
    %c0_6 = arith.constant 0 : index
    %c0_7 = arith.constant 0 : index
    %c0_8 = arith.constant 0 : index
    %9 = vector.load %arg3[%c0_6, %c0_7, %c0_8] : memref<1x32x32xf32, #tpu.memory_space<vmem>>, vector<1x32x32xf32>
    %10 = vector.shape_cast %9 : vector<1x32x32xf32> to vector<32x32xf32>
    %11 = vector.extract_strided_slice %8 {offsets = [0, 0, 0], sizes = [1, 32, 32], strides = [1, 1, 1]} : vector<4x32x32xf32> to vector<1x32x32xf32>
    %12 = vector.shape_cast %11 : vector<1x32x32xf32> to vector<32x32xf32>
    %cst_9 = arith.constant dense<0.000000e+00> : vector<32x32xf32>
    %13 = tpu.matmul %10, %12, %cst_9 {dimension_numbers = #tpu.dot_dimension_numbers<[1], [0], [0], [1], [0, 0, 1, 1], [], []>, precision = #tpu.contract_precision<fp32>} : vector<32x32xf32>, vector<32x32xf32>, vector<32x32xf32> -> vector<32x32xf32>
    %c0_10 = arith.constant 0 : index
    %c0_11 = arith.constant 0 : index
    %c0_12 = arith.constant 0 : index
    %14 = vector.load %arg9[%c0_10, %c0_11, %c0_12] : memref<4x32x32xf32, #tpu.memory_space<vmem>>, vector<1x32x32xf32>
    %15 = vector.shape_cast %14 : vector<1x32x32xf32> to vector<32x32xf32>
    %16 = vector.shape_cast %13 : vector<32x32xf32> to vector<1x32x32xf32>
    tpu.vector_store %arg9[%c0_10, %c0_11, %c0_12], %16 {strides = array<i32>} : memref<4x32x32xf32, #tpu.memory_space<vmem>>, vector<1x32x32xf32>,
    %c0_13 = arith.constant 0 : index
    %c0_14 = arith.constant 0 : index
    %c0_15 = arith.constant 0 : index
    %17 = vector.load %arg3[%c0_13, %c0_14, %c0_15] : memref<1x32x32xf32, #tpu.memory_space<vmem>>, vector<1x32x32xf32>
    %18 = vector.shape_cast %17 : vector<1x32x32xf32> to vector<32x32xf32>
    %19 = vector.extract_strided_slice %8 {offsets = [1, 0, 0], sizes = [1, 32, 32], strides = [1, 1, 1]} : vector<4x32x32xf32> to vector<1x32x32xf32>
    %20 = vector.shape_cast %19 : vector<1x32x32xf32> to vector<32x32xf32>
    %cst_16 = arith.constant dense<0.000000e+00> : vector<32x32xf32>
    %21 = tpu.matmul %18, %20, %cst_16 {dimension_numbers = #tpu.dot_dimension_numbers<[1], [0], [0], [1], [0, 0, 1, 1], [], []>, precision = #tpu.contract_precision<fp32>} : vector<32x32xf32>, vector<32x32xf32>, vector<32x32xf32> -> vector<32x32xf32>
    %c1 = arith.constant 1 : index
    %c0_17 = arith.constant 0 : index
    %c0_18 = arith.constant 0 : index
    %22 = vector.load %arg9[%c1, %c0_17, %c0_18] : memref<4x32x32xf32, #tpu.memory_space<vmem>>, vector<1x32x32xf32>
    %23 = vector.shape_cast %22 : vector<1x32x32xf32> to vector<32x32xf32>
    %24 = vector.shape_cast %21 : vector<32x32xf32> to vector<1x32x32xf32>
    tpu.vector_store %arg9[%c1, %c0_17, %c0_18], %24 {strides = array<i32>} : memref<4x32x32xf32, #tpu.memory_space<vmem>>, vector<1x32x32xf32>,
    %c0_19 = arith.constant 0 : index
    %c0_20 = arith.constant 0 : index
    %c0_21 = arith.constant 0 : index
    %25 = vector.load %arg3[%c0_19, %c0_20, %c0_21] : memref<1x32x32xf32, #tpu.memory_space<vmem>>, vector<1x32x32xf32>
    %26 = vector.shape_cast %25 : vector<1x32x32xf32> to vector<32x32xf32>
    %27 = vector.extract_strided_slice %8 {offsets = [2, 0, 0], sizes = [1, 32, 32], strides = [1, 1, 1]} : vector<4x32x32xf32> to vector<1x32x32xf32>
    %28 = vector.shape_cast %27 : vector<1x32x32xf32> to vector<32x32xf32>
    %cst_22 = arith.constant dense<0.000000e+00> : vector<32x32xf32>
    %29 = tpu.matmul %26, %28, %cst_22 {dimension_numbers = #tpu.dot_dimension_numbers<[1], [0], [0], [1], [0, 0, 1, 1], [], []>, precision = #tpu.contract_precision<fp32>} : vector<32x32xf32>, vector<32x32xf32>, vector<32x32xf32> -> vector<32x32xf32>
    %c2 = arith.constant 2 : index
    %c0_23 = arith.constant 0 : index
    %c0_24 = arith.constant 0 : index
    %30 = vector.load %arg9[%c2, %c0_23, %c0_24] : memref<4x32x32xf32, #tpu.memory_space<vmem>>, vector<1x32x32xf32>
    %31 = vector.shape_cast %30 : vector<1x32x32xf32> to vector<32x32xf32>
    %32 = vector.shape_cast %29 : vector<32x32xf32> to vector<1x32x32xf32>
    tpu.vector_store %arg9[%c2, %c0_23, %c0_24], %32 {strides = array<i32>} : memref<4x32x32xf32, #tpu.memory_space<vmem>>, vector<1x32x32xf32>,
    %c0_25 = arith.constant 0 : index
    %c0_26 = arith.constant 0 : index
    %c0_27 = arith.constant 0 : index
    %33 = vector.load %arg3[%c0_25, %c0_26, %c0_27] : memref<1x32x32xf32, #tpu.memory_space<vmem>>, vector<1x32x32xf32>
    %34 = vector.shape_cast %33 : vector<1x32x32xf32> to vector<32x32xf32>
    %35 = vector.extract_strided_slice %8 {offsets = [3, 0, 0], sizes = [1, 32, 32], strides = [1, 1, 1]} : vector<4x32x32xf32> to vector<1x32x32xf32>
    %36 = vector.shape_cast %35 : vector<1x32x32xf32> to vector<32x32xf32>
    %cst_28 = arith.constant dense<0.000000e+00> : vector<32x32xf32>
    %37 = tpu.matmul %34, %36, %cst_28 {dimension_numbers = #tpu.dot_dimension_numbers<[1], [0], [0], [1], [0, 0, 1, 1], [], []>, precision = #tpu.contract_precision<fp32>} : vector<32x32xf32>, vector<32x32xf32>, vector<32x32xf32> -> vector<32x32xf32>
    %c3 = arith.constant 3 : index
    %c0_29 = arith.constant 0 : index
    %c0_30 = arith.constant 0 : index
    %38 = vector.load %arg9[%c3, %c0_29, %c0_30] : memref<4x32x32xf32, #tpu.memory_space<vmem>>, vector<1x32x32xf32>
    %39 = vector.shape_cast %38 : vector<1x32x32xf32> to vector<32x32xf32>
    %40 = vector.shape_cast %37 : vector<32x32xf32> to vector<1x32x32xf32>
    tpu.vector_store %arg9[%c3, %c0_29, %c0_30], %40 {strides = array<i32>} : memref<4x32x32xf32, #tpu.memory_space<vmem>>, vector<1x32x32xf32>,
    %c0_31 = arith.constant 0 : index
    %c0_32 = arith.constant 0 : index
    %c0_33 = arith.constant 0 : index
    %41 = vector.load %arg9[%c0_31, %c0_32, %c0_33] : memref<4x32x32xf32, #tpu.memory_space<vmem>>, vector<4x32x32xf32>
    %c0_34 = arith.constant 0 : index
    %c0_35 = arith.constant 0 : index
    %c0_36 = arith.constant 0 : index
    %c0_37 = arith.constant 0 : index
    %42 = vector.load %arg7[%c0_34, %c0_35, %c0_36, %c0_37] : memref<4x1x32x32xf32, #tpu.memory_space<vmem>>, vector<4x1x32x32xf32>
    %43 = vector.shape_cast %42 : vector<4x1x32x32xf32> to vector<4x32x32xf32>
    %44 = vector.shape_cast %41 : vector<4x32x32xf32> to vector<4x1x32x32xf32>
    tpu.vector_store %arg7[%c0_34, %c0_35, %c0_36, %c0_37], %44 {strides = array<i32>} : memref<4x1x32x32xf32, #tpu.memory_space<vmem>>, vector<4x1x32x32xf32>,
    %c3_i32 = arith.constant 3 : i32
    %45 = arith.cmpi eq, %arg1, %c3_i32 : i32
    %46 = arith.extui %45 : i1 to i32
    %c0_i32_38 = arith.constant 0 : i32
    %47 = arith.cmpi ne, %46, %c0_i32_38 : i32
    scf.if %47 {
      %c0_39 = arith.constant 0 : index
      %c0_40 = arith.constant 0 : index
      %48 = vector.load %arg5[%c0_39, %c0_40] : memref<16x32xf32, #tpu.memory_space<vmem>>, vector<16x32xf32>
      %c0_41 = arith.constant 0 : index
      %c0_42 = arith.constant 0 : index
      %c0_43 = arith.constant 0 : index
      %49 = vector.load %arg9[%c0_41, %c0_42, %c0_43] : memref<4x32x32xf32, #tpu.memory_space<vmem>>, vector<1x32x32xf32>
      %50 = vector.shape_cast %49 : vector<1x32x32xf32> to vector<32x32xf32>
      %cst_44 = arith.constant dense<0.000000e+00> : vector<16x32xf32>
      %51 = tpu.matmul %48, %50, %cst_44 {dimension_numbers = #tpu.dot_dimension_numbers<[1], [0], [0], [1], [0, 0, 1, 1], [], []>, precision = #tpu.contract_precision<fp32>} : vector<16x32xf32>, vector<32x32xf32>, vector<16x32xf32> -> vector<16x32xf32>
      %c0_45 = arith.constant 0 : index
      %c0_46 = arith.constant 0 : index
      %52 = vector.load %arg6[%c0_45, %c0_46] : memref<32x16xf32, #tpu.memory_space<vmem>>, vector<32x16xf32>
      %cst_47 = arith.constant dense<0.000000e+00> : vector<16x16xf32>
      %53 = tpu.matmul %51, %52, %cst_47 {dimension_numbers = #tpu.dot_dimension_numbers<[1], [0], [0], [1], [0, 0, 1, 1], [], []>, precision = #tpu.contract_precision<fp32>} : vector<16x32xf32>, vector<32x16xf32>, vector<16x16xf32> -> vector<16x16xf32>
      %c0_48 = arith.constant 0 : index
      %c0_49 = arith.constant 0 : index
      %c0_50 = arith.constant 0 : index
      %54 = vector.load %arg8[%c0_48, %c0_49, %c0_50] : memref<4x16x16xf32, #tpu.memory_space<vmem>>, vector<1x16x16xf32>
      %55 = vector.shape_cast %54 : vector<1x16x16xf32> to vector<16x16xf32>
      %56 = vector.shape_cast %53 : vector<16x16xf32> to vector<1x16x16xf32>
      tpu.vector_store %arg8[%c0_48, %c0_49, %c0_50], %56 {strides = array<i32>} : memref<4x16x16xf32, #tpu.memory_space<vmem>>, vector<1x16x16xf32>,
      %c0_51 = arith.constant 0 : index
      %c0_52 = arith.constant 0 : index
      %57 = vector.load %arg5[%c0_51, %c0_52] : memref<16x32xf32, #tpu.memory_space<vmem>>, vector<16x32xf32>
      %c1_53 = arith.constant 1 : index
      %c0_54 = arith.constant 0 : index
      %c0_55 = arith.constant 0 : index
      %58 = vector.load %arg9[%c1_53, %c0_54, %c0_55] : memref<4x32x32xf32, #tpu.memory_space<vmem>>, vector<1x32x32xf32>
      %59 = vector.shape_cast %58 : vector<1x32x32xf32> to vector<32x32xf32>
      %cst_56 = arith.constant dense<0.000000e+00> : vector<16x32xf32>
      %60 = tpu.matmul %57, %59, %cst_56 {dimension_numbers = #tpu.dot_dimension_numbers<[1], [0], [0], [1], [0, 0, 1, 1], [], []>, precision = #tpu.contract_precision<fp32>} : vector<16x32xf32>, vector<32x32xf32>, vector<16x32xf32> -> vector<16x32xf32>
      %c0_57 = arith.constant 0 : index
      %c0_58 = arith.constant 0 : index
      %61 = vector.load %arg6[%c0_57, %c0_58] : memref<32x16xf32, #tpu.memory_space<vmem>>, vector<32x16xf32>
      %cst_59 = arith.constant dense<0.000000e+00> : vector<16x16xf32>
      %62 = tpu.matmul %60, %61, %cst_59 {dimension_numbers = #tpu.dot_dimension_numbers<[1], [0], [0], [1], [0, 0, 1, 1], [], []>, precision = #tpu.contract_precision<fp32>} : vector<16x32xf32>, vector<32x16xf32>, vector<16x16xf32> -> vector<16x16xf32>
      %c1_60 = arith.constant 1 : index
      %c0_61 = arith.constant 0 : index
      %c0_62 = arith.constant 0 : index
      %63 = vector.load %arg8[%c1_60, %c0_61, %c0_62] : memref<4x16x16xf32, #tpu.memory_space<vmem>>, vector<1x16x16xf32>
      %64 = vector.shape_cast %63 : vector<1x16x16xf32> to vector<16x16xf32>
      %65 = vector.shape_cast %62 : vector<16x16xf32> to vector<1x16x16xf32>
      tpu.vector_store %arg8[%c1_60, %c0_61, %c0_62], %65 {strides = array<i32>} : memref<4x16x16xf32, #tpu.memory_space<vmem>>, vector<1x16x16xf32>,
      %c0_63 = arith.constant 0 : index
      %c0_64 = arith.constant 0 : index
      %66 = vector.load %arg5[%c0_63, %c0_64] : memref<16x32xf32, #tpu.memory_space<vmem>>, vector<16x32xf32>
      %c2_65 = arith.constant 2 : index
      %c0_66 = arith.constant 0 : index
      %c0_67 = arith.constant 0 : index
      %67 = vector.load %arg9[%c2_65, %c0_66, %c0_67] : memref<4x32x32xf32, #tpu.memory_space<vmem>>, vector<1x32x32xf32>
      %68 = vector.shape_cast %67 : vector<1x32x32xf32> to vector<32x32xf32>
      %cst_68 = arith.constant dense<0.000000e+00> : vector<16x32xf32>
      %69 = tpu.matmul %66, %68, %cst_68 {dimension_numbers = #tpu.dot_dimension_numbers<[1], [0], [0], [1], [0, 0, 1, 1], [], []>, precision = #tpu.contract_precision<fp32>} : vector<16x32xf32>, vector<32x32xf32>, vector<16x32xf32> -> vector<16x32xf32>
      %c0_69 = arith.constant 0 : index
      %c0_70 = arith.constant 0 : index
      %70 = vector.load %arg6[%c0_69, %c0_70] : memref<32x16xf32, #tpu.memory_space<vmem>>, vector<32x16xf32>
      %cst_71 = arith.constant dense<0.000000e+00> : vector<16x16xf32>
      %71 = tpu.matmul %69, %70, %cst_71 {dimension_numbers = #tpu.dot_dimension_numbers<[1], [0], [0], [1], [0, 0, 1, 1], [], []>, precision = #tpu.contract_precision<fp32>} : vector<16x32xf32>, vector<32x16xf32>, vector<16x16xf32> -> vector<16x16xf32>
      %c2_72 = arith.constant 2 : index
      %c0_73 = arith.constant 0 : index
      %c0_74 = arith.constant 0 : index
      %72 = vector.load %arg8[%c2_72, %c0_73, %c0_74] : memref<4x16x16xf32, #tpu.memory_space<vmem>>, vector<1x16x16xf32>
      %73 = vector.shape_cast %72 : vector<1x16x16xf32> to vector<16x16xf32>
      %74 = vector.shape_cast %71 : vector<16x16xf32> to vector<1x16x16xf32>
      tpu.vector_store %arg8[%c2_72, %c0_73, %c0_74], %74 {strides = array<i32>} : memref<4x16x16xf32, #tpu.memory_space<vmem>>, vector<1x16x16xf32>,
      %c0_75 = arith.constant 0 : index
      %c0_76 = arith.constant 0 : index
      %75 = vector.load %arg5[%c0_75, %c0_76] : memref<16x32xf32, #tpu.memory_space<vmem>>, vector<16x32xf32>
      %c3_77 = arith.constant 3 : index
      %c0_78 = arith.constant 0 : index
      %c0_79 = arith.constant 0 : index
      %76 = vector.load %arg9[%c3_77, %c0_78, %c0_79] : memref<4x32x32xf32, #tpu.memory_space<vmem>>, vector<1x32x32xf32>
      %77 = vector.shape_cast %76 : vector<1x32x32xf32> to vector<32x32xf32>
      %cst_80 = arith.constant dense<0.000000e+00> : vector<16x32xf32>
      %78 = tpu.matmul %75, %77, %cst_80 {dimension_numbers = #tpu.dot_dimension_numbers<[1], [0], [0], [1], [0, 0, 1, 1], [], []>, precision = #tpu.contract_precision<fp32>} : vector<16x32xf32>, vector<32x32xf32>, vector<16x32xf32> -> vector<16x32xf32>
      %c0_81 = arith.constant 0 : index
      %c0_82 = arith.constant 0 : index
      %79 = vector.load %arg6[%c0_81, %c0_82] : memref<32x16xf32, #tpu.memory_space<vmem>>, vector<32x16xf32>
      %cst_83 = arith.constant dense<0.000000e+00> : vector<16x16xf32>
      %80 = tpu.matmul %78, %79, %cst_83 {dimension_numbers = #tpu.dot_dimension_numbers<[1], [0], [0], [1], [0, 0, 1, 1], [], []>, precision = #tpu.contract_precision<fp32>} : vector<16x32xf32>, vector<32x16xf32>, vector<16x16xf32> -> vector<16x16xf32>
      %c3_84 = arith.constant 3 : index
      %c0_85 = arith.constant 0 : index
      %c0_86 = arith.constant 0 : index
      %81 = vector.load %arg8[%c3_84, %c0_85, %c0_86] : memref<4x16x16xf32, #tpu.memory_space<vmem>>, vector<1x16x16xf32>
      %82 = vector.shape_cast %81 : vector<1x16x16xf32> to vector<16x16xf32>
      %83 = vector.shape_cast %80 : vector<16x16xf32> to vector<1x16x16xf32>
      tpu.vector_store %arg8[%c3_84, %c0_85, %c0_86], %83 {strides = array<i32>} : memref<4x16x16xf32, #tpu.memory_space<vmem>>, vector<1x16x16xf32>,
    } else {
    }
    return
  }
  func.func @transform_0(%arg0: i32, %arg1: i32) -> (i32, i32, i32) {
    %c0_i32 = arith.constant 0 : i32
    %c0_i32_0 = arith.constant 0 : i32
    %c0_i32_1 = arith.constant 0 : i32
    return %arg0, %c0_i32, %c0_i32_0 : i32, i32, i32
  }
  func.func @transform_1(%arg0: i32, %arg1: i32) -> (i32, i32, i32) {
    %c0_i32 = arith.constant 0 : i32
    %c0_i32_0 = arith.constant 0 : i32
    %c0_i32_1 = arith.constant 0 : i32
    return %arg1, %c0_i32, %c0_i32_0 : i32, i32, i32
  }
  func.func @transform_2(%arg0: i32, %arg1: i32) -> (i32, i32, i32) {
    %c0_i32 = arith.constant 0 : i32
    %c0_i32_0 = arith.constant 0 : i32
    %c0_i32_1 = arith.constant 0 : i32
    return %arg1, %c0_i32, %c0_i32_0 : i32, i32, i32
  }
  func.func @transform_3(%arg0: i32, %arg1: i32) -> (i32, i32) {
    %c0_i32 = arith.constant 0 : i32
    %c0_i32_0 = arith.constant 0 : i32
    %c0_i32_1 = arith.constant 0 : i32
    return %c0_i32, %c0_i32_0 : i32, i32
  }
  func.func @transform_4(%arg0: i32, %arg1: i32) -> (i32, i32) {
    %c0_i32 = arith.constant 0 : i32
    %c0_i32_0 = arith.constant 0 : i32
    %c0_i32_1 = arith.constant 0 : i32
    return %c0_i32, %c0_i32_0 : i32, i32
  }
  func.func @transform_5(%arg0: i32, %arg1: i32) -> (i32, i32, i32, i32) {
    %c0_i32 = arith.constant 0 : i32
    %c0_i32_0 = arith.constant 0 : i32
    %c0_i32_1 = arith.constant 0 : i32
    return %arg0, %arg1, %c0_i32, %c0_i32_0 : i32, i32, i32, i32
  }
  func.func @transform_6(%arg0: i32, %arg1: i32) -> (i32, i32, i32) {
    %c0_i32 = arith.constant 0 : i32
    %c0_i32_0 = arith.constant 0 : i32
    %c0_i32_1 = arith.constant 0 : i32
    return %arg0, %c0_i32, %c0_i32_0 : i32, i32, i32
  }
}

</mosaic_0001>

<llo_original>
// kernel: fwd.3
$region0: #{fwd.3}
  #allocation0 [shape = 'u32[]', space=smem, size = 0x4, offset = 0x4, fixed_abs, tag = 'smem constant byte address 0x4 - core index']
  #allocation1 [shape = 'u32[72,128]{1,0:T(1,128)}', space=vmem, size = 0x9000, scoped, tag = 'internal scratch']
  #allocation2 [shape = 'f32[4,16,16]{2,1,0:T(8,128)}', space=vmem, size = 0x8000, scoped, tag = 'scratch operand']
  #allocation9 [shape = 's32[]', space=sflag, size = 0x4, offset = 0, fixed_abs, tag = 'sflag constant byte address 0x0 - dummy sync flag']
  %s0 = inlined_call_operand.vmem [shape: f32[8,16,16], index: 0, kind: input, shape index: {}]
  %s1 = inlined_call_operand.hbm [shape: f32[6,16,16], index: 1, kind: input, shape index: {}]
  %s2 = inlined_call_operand.hbm [shape: f32[6,16,16], index: 2, kind: input, shape index: {}]
  %s3 = inlined_call_operand.hbm [shape: f32[8,6,16,16], index: 3, kind: output, shape index: {}]
  %s4 = sld [smem:[#allocation0]]
  $region61: #{fwd.3} parent=0
    _
  %s6 = ssub.s32 1, %s4
  %s7 = scalar_select 0, %s6, %s4
  $region1: #{fwd.3} parent=0
    #allocation3 [shape = 'u8[16384]{0}', space=vmem, size = 0x4000, scoped, tag = 'input window, operand 1']
    #allocation4 [shape = 's32[2]{0}', space=sflag, size = 0x8, scoped, tag = 'scoped memory for fwd.3']
    #allocation5 [shape = 's32[2]{0}', space=sflag, size = 0x8, scoped, tag = 'scoped memory for fwd.3']
    #allocation6 [shape = 'u8[16384]{0}', space=vmem, size = 0x4000, scoped, tag = 'input window, operand 2']
    #allocation7 [shape = 's32[2]{0}', space=sflag, size = 0x8, scoped, tag = 'scoped memory for fwd.3']
    #allocation8 [shape = 'u8[65536]{0}', space=vmem, size = 0x10000, scoped, tag = 'output window, operand 0']
    %8 = vsyncpa [#allocation4], 0
    %s9 = scalar_lea.sflag [#allocation4], 1
    %10 = vsyncpa %s9, 0
    %11 = vsyncpa [#allocation7], 0
    %s12 = scalar_lea.sflag [#allocation7], 1
    %13 = vsyncpa %s12, 0
    %14 = vsyncpa [#allocation5], 0
    %s15 = scalar_lea.sflag [#allocation5], 1
    %16 = vsyncpa %s15, 0
    loop: start=0, step=1, limit=14
    $region2: #{fwd.3} parent=1 // loop_pre_header
      _
    $region3: #{fwd.3} parent=1 // loop_header
      %s18 = sphi 0, %s22
      %p19 = scmp.ge.s32.totalorder %s18, 14
      %s25 = sphi 0, %s37
      %s26 = sphi 0, %s33
      %s27 = sphi 0, %s25
      %s28 = sphi 0, %s26
      %s29 = sphi 0, %s27
      %s30 = sphi 0, %s28
      %s40 = sphi 0, %s42
      %s43 = sphi 0, %s40
      %s44 = sphi 0, %s43
      %s60 = sphi 0, %s44
      %s66 = sphi 0, %s68
      %s69 = sphi 0, %s66
      %s70 = sphi 0, %s69
      %s86 = sphi 0, %s70
      %s92 = sphi 0, %s94
      %s95 = sphi 0, %s92
      %s96 = sphi 0, %s95
      %s112 = sphi 0, %s96
      %s120 = sphi 0, %s122
      %s123 = sphi 0, %s120
      %s124 = sphi 0, %s123
      %s140 = sphi 0, %s124
    $region4: #{fwd.3} parent=1 // loop_header_branch
      %21 = sbr.rel (%p19) target = $region8
    $region5: #{fwd.3} parent=1 // loop_body
      %s23 = ssub.s32 %s18, 1
      %s24 = ssub.s32 %s18, 2
      %s31 = sadd.s32 1, %s26
      %p32 = scmp.ge.s32.totalorder %s31, 6
      %s33 = scalar_select %p32, 0, %s31
      %s34 = sadd.s32 1, %s25
      %s35 = scalar_select %p32, %s34, %s25
      %p36 = scmp.ge.s32.totalorder %s35, 2
      %s37 = scalar_select %p36, 0, %s35
      %s38 = ssub.s32 %s25, %s37
      %p39 = scmp.eq.s32.totalorder %s38, 0
      %s41 = sadd.s32 %s40, 1
      %s42 = scalar_select %p39, %s40, %s41
      %p45 = pneg %p39
      %p46 = scmp.eq.s32.totalorder %s18, 11
      %p47 = por %p45, %p46
      %p48 = scmp.ne.s32.totalorder %s40, %s43
      %p49 = scmp.eq.s32.totalorder %s18, 0
      %p50 = por %p48, %p49
      %p51 = scmp.ne.s32.totalorder %s40, %s43
      %p52 = scmp.eq.s32.totalorder %s23, 11
      %p53 = por %p51, %p52
      %p54 = scmp.ne.s32.totalorder %s43, %s44
      %p55 = scmp.eq.s32.totalorder %s23, 0
      %p56 = por %p54, %p55
      %p57 = scmp.ne.s32.totalorder %s43, %s44
      %p58 = scmp.eq.s32.totalorder %s24, 11
      %p59 = por %p57, %p58
      %p61 = scmp.ne.s32.totalorder %s44, %s60
      %p62 = scmp.eq.s32.totalorder %s24, 0
      %p63 = por %p61, %p62
      %s64 = ssub.s32 %s26, %s33
      %p65 = scmp.eq.s32.totalorder %s64, 0
      %s67 = sadd.s32 %s66, 1
      %s68 = scalar_select %p65, %s66, %s67
      %p71 = pneg %p65
      %p72 = scmp.eq.s32.totalorder %s18, 11
      %p73 = por %p71, %p72
      %p74 = scmp.ne.s32.totalorder %s66, %s69
      %p75 = scmp.eq.s32.totalorder %s18, 0
      %p76 = por %p74, %p75
      %p77 = scmp.ne.s32.totalorder %s66, %s69
      %p78 = scmp.eq.s32.totalorder %s23, 11
      %p79 = por %p77, %p78
      %p80 = scmp.ne.s32.totalorder %s69, %s70
      %p81 = scmp.eq.s32.totalorder %s23, 0
      %p82 = por %p80, %p81
      %p83 = scmp.ne.s32.totalorder %s69, %s70
      %p84 = scmp.eq.s32.totalorder %s24, 11
      %p85 = por %p83, %p84
      %p87 = scmp.ne.s32.totalorder %s70, %s86
      %p88 = scmp.eq.s32.totalorder %s24, 0
      %p89 = por %p87, %p88
      %s90 = ssub.s32 %s26, %s33
      %p91 = scmp.eq.s32.totalorder %s90, 0
      %s93 = sadd.s32 %s92, 1
      %s94 = scalar_select %p91, %s92, %s93
      %p97 = pneg %p91
      %p98 = scmp.eq.s32.totalorder %s18, 11
      %p99 = por %p97, %p98
      %p100 = scmp.ne.s32.totalorder %s92, %s95
      %p101 = scmp.eq.s32.totalorder %s18, 0
      %p102 = por %p100, %p101
      %p103 = scmp.ne.s32.totalorder %s92, %s95
      %p104 = scmp.eq.s32.totalorder %s23, 11
      %p105 = por %p103, %p104
      %p106 = scmp.ne.s32.totalorder %s95, %s96
      %p107 = scmp.eq.s32.totalorder %s23, 0
      %p108 = por %p106, %p107
      %p109 = scmp.ne.s32.totalorder %s95, %s96
      %p110 = scmp.eq.s32.totalorder %s24, 11
      %p111 = por %p109, %p110
      %p113 = scmp.ne.s32.totalorder %s96, %s112
      %p114 = scmp.eq.s32.totalorder %s24, 0
      %p115 = por %p113, %p114
      %s116 = ssub.s32 %s25, %s37
      %s117 = ssub.s32 %s26, %s33
      %s118 = sor.u32 %s116, %s117
      %p119 = scmp.eq.s32.totalorder %s118, 0
      %s121 = sadd.s32 %s120, 1
      %s122 = scalar_select %p119, %s120, %s121
      %p125 = pneg %p119
      %p126 = scmp.eq.s32.totalorder %s18, 11
      %p127 = por %p125, %p126
      %p128 = scmp.ne.s32.totalorder %s120, %s123
      %p129 = scmp.eq.s32.totalorder %s18, 0
      %p130 = por %p128, %p129
      %p131 = scmp.ne.s32.totalorder %s120, %s123
      %p132 = scmp.eq.s32.totalorder %s23, 11
      %p133 = por %p131, %p132
      %p134 = scmp.ne.s32.totalorder %s123, %s124
      %p135 = scmp.eq.s32.totalorder %s23, 0
      %p136 = por %p134, %p135
      %p137 = scmp.ne.s32.totalorder %s123, %s124
      %p138 = scmp.eq.s32.totalorder %s24, 11
      %p139 = por %p137, %p138
      %p141 = scmp.ne.s32.totalorder %s124, %s140
      %p142 = scmp.eq.s32.totalorder %s24, 0
      %p143 = por %p141, %p142
      %p144 = scmp.le.s32.totalorder 1, %s18
      %p145 = scmp.lt.s32.totalorder %s18, 13
      %p146 = pnand %p144, %p145
      %p147 = pneg %p146
      // Predicated region
      $region9: #{fwd.3} parent=5 // pred_check
        _
      $region10: #{fwd.3} parent=5 // pred_check_branch
        %149 = sbr.rel (%p146) target = $region12
      $region11: #{fwd.3} parent=5 // pred_region
        %s150 = ssub.s32 %s18, 1
      $region12: #{fwd.3} parent=5 // pred_fallthru
        _
      %p151 = scmp.lt.s32.totalorder %s18, 12
      // Predicated region
      $region13: #{fwd.3} parent=5 // pred_check
        %p152 = pneg %p151
      $region14: #{fwd.3} parent=5 // pred_check_branch
        %154 = sbr.rel (%p152) target = $region16
      $region15: #{fwd.3} parent=5 // pred_region
        // Predicated region
        $region17: #{fwd.3} parent=15 // pred_check
          %p155 = pneg %p50
        $region18: #{fwd.3} parent=15 // pred_check_branch
          %157 = sbr.rel (%p155) target = $region20
        $region19: #{fwd.3} parent=15 // pred_region
          %s158 = smul.u32 4, %s25
          %p159 = scmp.lt.s32.totalorder %s158, 7
          %s160 = scalar_select %p159, %s158, 7
          %s161 = smul.addr %s160, 2
          %s162 = smul.addr %s161, 8
          %s163 = scalar_lea.vmem %s0, %s162
          %s164 = smul.u32 4, %s25
        $region20: #{fwd.3} parent=15 // pred_fallthru
          _
        // Predicated region
        $region21: #{fwd.3} parent=15 // pred_check
          %p165 = pneg %p76
        $region22: #{fwd.3} parent=15 // pred_check_branch
          %167 = sbr.rel (%p165) target = $region24
        $region23: #{fwd.3} parent=15 // pred_region
          %s168 = sand.u32 %s66, 1
          %s169 = scalar_lea.sflag [#allocation4], %s168
          %s170 = sand.u32 %s66, 1
          %s171 = smul.addr %s170, 16
          %s172 = scalar_lea.vmem [#allocation3], %s171
          %174 = vsyncadd %s169, 0
          %s175 = smul.addr %s26, 2
          %s176 = smul.addr %s175, 8
          %s177 = scalar_lea.hbm %s1, %s176
          %s178 = sshll.u32 %s177, 4
          %s179 = int_to_ptr.hbm [resolvable:$true] %s178
          %s180 = sshll.u32 %s172, 4
          %s181 = int_to_ptr.vmem [resolvable:$true] %s180
          %186 = dma.hbm_to_vmem [thread:$0]  %s179, 256, %s181, %s169, 128, 128, 8
        $region24: #{fwd.3} parent=15 // pred_fallthru
          _
        // Predicated region
        $region25: #{fwd.3} parent=15 // pred_check
          %p187 = pneg %p102
        $region26: #{fwd.3} parent=15 // pred_check_branch
          %189 = sbr.rel (%p187) target = $region28
        $region27: #{fwd.3} parent=15 // pred_region
          %s190 = sand.u32 %s92, 1
          %s191 = scalar_lea.sflag [#allocation7], %s190
          %s192 = sand.u32 %s92, 1
          %s193 = smul.addr %s192, 16
          %s194 = scalar_lea.vmem [#allocation6], %s193
          %196 = vsyncadd %s191, 0
          %s197 = smul.addr %s26, 2
          %s198 = smul.addr %s197, 8
          %s199 = scalar_lea.hbm %s2, %s198
          %s200 = sshll.u32 %s199, 4
          %s201 = int_to_ptr.hbm [resolvable:$true] %s200
          %s202 = sshll.u32 %s194, 4
          %s203 = int_to_ptr.vmem [resolvable:$true] %s202
          %208 = dma.hbm_to_vmem [thread:$0]  %s201, 256, %s203, %s191, 128, 128, 8
        $region28: #{fwd.3} parent=15 // pred_fallthru
          _
      $region16: #{fwd.3} parent=5 // pred_fallthru
        _
      %p209 = scmp.le.s32.totalorder 1, %s18
      %p210 = scmp.lt.s32.totalorder %s18, 13
      %p211 = pnand %p209, %p210
      %p212 = pneg %p211
      // Predicated region
      $region29: #{fwd.3} parent=5 // pred_check
        _
      $region30: #{fwd.3} parent=5 // pred_check_branch
        %214 = sbr.rel (%p211) target = $region32
      $region31: #{fwd.3} parent=5 // pred_region
        %s215 = ssub.s32 %s18, 1
        %s216 = sand.u32 %s69, 1
        %s217 = scalar_lea.sflag [#allocation4], %s216
        %s218 = sand.u32 %s69, 1
        %s219 = smul.addr %s218, 16
        %s220 = scalar_lea.vmem [#allocation3], %s219
        // Predicated region
        $region33: #{fwd.3} parent=31 // pred_check
          %p221 = pneg %p82
        $region34: #{fwd.3} parent=31 // pred_check_branch
          %223 = sbr.rel (%p221) target = $region36
        $region35: #{fwd.3} parent=31 // pred_region
          %225 = dma.done %s217, 256
        $region36: #{fwd.3} parent=31 // pred_fallthru
          _
        %s226 = sand.u32 %s95, 1
        %s227 = scalar_lea.sflag [#allocation7], %s226
        %s228 = sand.u32 %s95, 1
        %s229 = smul.addr %s228, 16
        %s230 = scalar_lea.vmem [#allocation6], %s229
        // Predicated region
        $region37: #{fwd.3} parent=31 // pred_check
          %p231 = pneg %p108
        $region38: #{fwd.3} parent=31 // pred_check_branch
          %233 = sbr.rel (%p231) target = $region40
        $region39: #{fwd.3} parent=31 // pred_region
          %235 = dma.done %s227, 256
        $region40: #{fwd.3} parent=31 // pred_fallthru
          _
        %s236 = smul.u32 4, %s27
        %p237 = scmp.lt.s32.totalorder %s236, 7
        %s238 = scalar_select %p237, %s236, 7
        %s239 = smul.addr %s238, 2
        %s240 = smul.addr %s239, 8
        %s241 = scalar_lea.vmem %s0, %s240
        %p242 = pneg %p56
        %p243 = pneg %p53
        %s244 = sand.u32 %s69, 1
        %s245 = scalar_lea.sflag [#allocation4], %s244
        %s246 = sand.u32 %s69, 1
        %s247 = smul.addr %s246, 16
        %s248 = scalar_lea.vmem [#allocation3], %s247
        %p249 = pneg %p82
        %p250 = pneg %p79
        %s251 = sand.u32 %s95, 1
        %s252 = scalar_lea.sflag [#allocation7], %s251
        %s253 = sand.u32 %s95, 1
        %s254 = smul.addr %s253, 16
        %s255 = scalar_lea.vmem [#allocation6], %s254
        %p256 = pneg %p108
        %p257 = pneg %p105
        %p258 = pneg %p136
        %p259 = pneg %p133
        %s260 = sand.u32 %s123, 1
        %s261 = scalar_lea.sflag [#allocation5], %s260
        %s262 = sand.u32 %s123, 1
        %s263 = smul.addr %s262, 64
        %s264 = scalar_lea.vmem [#allocation8], %s263
        %s265 = smul.u32 4, %s27
        %p266 = scmp.lt.s32.totalorder %s265, 7
        %s267 = scalar_select %p266, %s265, 7
        %s268 = smul.addr %s267, 2
        %s269 = smul.addr %s268, 8
        %s270 = scalar_lea.vmem %s0, %s269
        %s271 = smul.u32 4, %s27
        %s272 = smul.u32 4, %s27
        %p273 = scmp.eq.s32.totalorder %s28, 0
        // Predicated region
        $region41: #{fwd.3} parent=31 // pred_check
          %p274 = pneg %p273
        $region42: #{fwd.3} parent=31 // pred_check_branch
          %276 = sbr.rel (%p274) target = $region44
        $region43: #{fwd.3} parent=31 // pred_region
          %v277 = vld [vmem:[%s270] sm:$0xff]
          %v278 = vld [vmem:[%s270 + $0x8] sm:$0xff]
          %v279 = vld [vmem:[%s270 + $0x10] sm:$0xff]
          %v280 = vld [vmem:[%s270 + $0x18] sm:$0xff]
          %v281 = vld [vmem:[%s270 + $0x20] sm:$0xff]
          %v282 = vld [vmem:[%s270 + $0x28] sm:$0xff]
          %v283 = vld [vmem:[%s270 + $0x30] sm:$0xff]
          %v284 = vld [vmem:[%s270 + $0x38] sm:$0xff]
          %vm285 = vcmask 130048
          %286 = vst.msk [vmem:[#allocation2] sm:$0xff] %vm285, %v277
          %287 = vst.msk [vmem:[#allocation2 + $0x8] sm:$0xff] %vm285, %v278
          %288 = vst.msk [vmem:[#allocation2 + $0x10] sm:$0xff] %vm285, %v279
          %289 = vst.msk [vmem:[#allocation2 + $0x18] sm:$0xff] %vm285, %v280
          %290 = vst.msk [vmem:[#allocation2 + $0x20] sm:$0xff] %vm285, %v281
          %291 = vst.msk [vmem:[#allocation2 + $0x28] sm:$0xff] %vm285, %v282
          %292 = vst.msk [vmem:[#allocation2 + $0x30] sm:$0xff] %vm285, %v283
          %293 = vst.msk [vmem:[#allocation2 + $0x38] sm:$0xff] %vm285, %v284
        $region44: #{fwd.3} parent=31 // pred_fallthru
          _
        %p294 = scmp.gt.s32.totalorder %s28, 0
        // Predicated region
        $region45: #{fwd.3} parent=31 // pred_check
          %p295 = pneg %p294
        $region46: #{fwd.3} parent=31 // pred_check_branch
          %297 = sbr.rel (%p295) target = $region48
        $region47: #{fwd.3} parent=31 // pred_region
          %v298 = vld [vmem:[#allocation2] sm:$0xff]
          %v299 = vld [vmem:[#allocation2 + $0x8] sm:$0xff]
          %v300 = vld [vmem:[#allocation2 + $0x10] sm:$0xff]
          %v301 = vld [vmem:[#allocation2 + $0x18] sm:$0xff]
          %v302 = vld [vmem:[#allocation2 + $0x20] sm:$0xff]
          %v303 = vld [vmem:[#allocation2 + $0x28] sm:$0xff]
          %v304 = vld [vmem:[#allocation2 + $0x30] sm:$0xff]
          %v305 = vld [vmem:[#allocation2 + $0x38] sm:$0xff]
          %v306 = vld [vmem:[%s230] sm:$0xff]
          %v307 = vld [vmem:[%s230 + $0x8] sm:$0xff]
          %vm308 = vcmask 130048
          %v310 = vsel %vm308, %v298, 0
          %v313 = vsel %vm308, %v299, 0
          %v316 = vsel %vm308, %v300, 0
          %v319 = vsel %vm308, %v301, 0
          %v322 = vsel %vm308, %v302, 0
          %v325 = vsel %vm308, %v303, 0
          %v328 = vsel %vm308, %v304, 0
          %v331 = vsel %vm308, %v305, 0
          %333 = vmatpush.msra.mxu0 0.0
          %334 = vmatpush.msra.mxu0 0.0
          %335 = vmatpush.msra.mxu0 0.0
          %336 = vmatpush.msra.mxu0 0.0
          %337 = vmatpush.msra.mxu0 0.0
          %338 = vmatpush.msra.mxu0 0.0
          %339 = vmatpush.msra.mxu0 0.0
          %340 = vmatpush.msra.mxu0 0.0
          %341 = vmatpush.msra.mxu0 0.0
          %342 = vmatpush.msra.mxu0 0.0
          %343 = vmatpush.msra.mxu0 0.0
          %344 = vmatpush.msra.mxu0 0.0
          %345 = vmatpush.msra.mxu0 0.0
          %346 = vmatpush.msra.mxu0 0.0
          %v347 = vand.u32 %v307, 4294901760
          %348 = vmatpush.msra.mxu0 %v347
          %v349 = vand.u32 %v306, 4294901760
          %350 = vmatpush.msra.mxu0 %v349
          %v351 = vand.u32 %v310, 4294901760
          %v352 = vsub.f32 %v310, %v351
          %v353 = vand.u32 %v352, 4294901760
          %v354 = vsub.f32 %v352, %v353
          %v355 = vand.u32 %v354, 4294901760
          %356 = vmatmul.f32.gmra.mxu0 %v355
          %v357 = vpop.f32.mrf.mxu0
          %v358 = vadd.f32 0.0, %v357
          %v359 = vand.u32 %v313, 4294901760
          %v360 = vsub.f32 %v313, %v359
          %v361 = vand.u32 %v360, 4294901760
          %v362 = vsub.f32 %v360, %v361
          %v363 = vand.u32 %v362, 4294901760
          %364 = vmatmul.f32.gmra.mxu0 %v363
          %v365 = vpop.f32.mrf.mxu0
          %v366 = vadd.f32 0.0, %v365
          %v367 = vand.u32 %v316, 4294901760
          %v368 = vsub.f32 %v316, %v367
          %v369 = vand.u32 %v368, 4294901760
          %v370 = vsub.f32 %v368, %v369
          %v371 = vand.u32 %v370, 4294901760
          %372 = vmatmul.f32.gmra.mxu0 %v371
          %v373 = vpop.f32.mrf.mxu0
          %v374 = vadd.f32 0.0, %v373
          %v375 = vand.u32 %v319, 4294901760
          %v376 = vsub.f32 %v319, %v375
          %v377 = vand.u32 %v376, 4294901760
          %v378 = vsub.f32 %v376, %v377
          %v379 = vand.u32 %v378, 4294901760
          %380 = vmatmul.f32.gmra.mxu0 %v379
          %v381 = vpop.f32.mrf.mxu0
          %v382 = vadd.f32 0.0, %v381
          %v383 = vand.u32 %v322, 4294901760
          %v384 = vsub.f32 %v322, %v383
          %v385 = vand.u32 %v384, 4294901760
          %v386 = vsub.f32 %v384, %v385
          %v387 = vand.u32 %v386, 4294901760
          %388 = vmatmul.f32.gmra.mxu0 %v387
          %v389 = vpop.f32.mrf.mxu0
          %v390 = vadd.f32 0.0, %v389
          %v391 = vand.u32 %v325, 4294901760
          %v392 = vsub.f32 %v325, %v391
          %v393 = vand.u32 %v392, 4294901760
          %v394 = vsub.f32 %v392, %v393
          %v395 = vand.u32 %v394, 4294901760
          %396 = vmatmul.f32.gmra.mxu0 %v395
          %v397 = vpop.f32.mrf.mxu0
          %v398 = vadd.f32 0.0, %v397
          %v399 = vand.u32 %v328, 4294901760
          %v400 = vsub.f32 %v328, %v399
          %v401 = vand.u32 %v400, 4294901760
          %v402 = vsub.f32 %v400, %v401
          %v403 = vand.u32 %v402, 4294901760
          %404 = vmatmul.f32.gmra.mxu0 %v403
          %v405 = vpop.f32.mrf.mxu0
          %v406 = vadd.f32 0.0, %v405
          %v407 = vand.u32 %v331, 4294901760
          %v408 = vsub.f32 %v331, %v407
          %v409 = vand.u32 %v408, 4294901760
          %v410 = vsub.f32 %v408, %v409
          %v411 = vand.u32 %v410, 4294901760
          %412 = vmatmul.f32.gmra.mxu0 %v411
          %v413 = vpop.f32.mrf.mxu0
          %v414 = vadd.f32 0.0, %v413
          %415 = vdwg.mxu0
          %416 = vmatpush.msra.mxu0 0.0
          %417 = vmatpush.msra.mxu0 0.0
          %418 = vmatpush.msra.mxu0 0.0
          %419 = vmatpush.msra.mxu0 0.0
          %420 = vmatpush.msra.mxu0 0.0
          %421 = vmatpush.msra.mxu0 0.0
          %422 = vmatpush.msra.mxu0 0.0
          %423 = vmatpush.msra.mxu0 0.0
          %424 = vmatpush.msra.mxu0 0.0
          %425 = vmatpush.msra.mxu0 0.0
          %426 = vmatpush.msra.mxu0 0.0
          %427 = vmatpush.msra.mxu0 0.0
          %428 = vmatpush.msra.mxu0 0.0
          %429 = vmatpush.msra.mxu0 0.0
          %v430 = vand.u32 %v307, 4294901760
          %v431 = vsub.f32 %v307, %v430
          %v432 = vand.u32 %v431, 4294901760
          %v433 = vsub.f32 %v431, %v432
          %v434 = vand.u32 %v433, 4294901760
          %435 = vmatpush.msra.mxu0 %v434
          %v436 = vand.u32 %v306, 4294901760
          %v437 = vsub.f32 %v306, %v436
          %v438 = vand.u32 %v437, 4294901760
          %v439 = vsub.f32 %v437, %v438
          %v440 = vand.u32 %v439, 4294901760
          %441 = vmatpush.msra.mxu0 %v440
          %v442 = vand.u32 %v310, 4294901760
          %443 = vmatmul.f32.gmra.mxu0 %v442
          %v444 = vpop.f32.mrf.mxu0
          %v445 = vadd.f32 %v358, %v444
          %v446 = vand.u32 %v313, 4294901760
          %447 = vmatmul.f32.gmra.mxu0 %v446
          %v448 = vpop.f32.mrf.mxu0
          %v449 = vadd.f32 %v366, %v448
          %v450 = vand.u32 %v316, 4294901760
          %451 = vmatmul.f32.gmra.mxu0 %v450
          %v452 = vpop.f32.mrf.mxu0
          %v453 = vadd.f32 %v374, %v452
          %v454 = vand.u32 %v319, 4294901760
          %455 = vmatmul.f32.gmra.mxu0 %v454
          %v456 = vpop.f32.mrf.mxu0
          %v457 = vadd.f32 %v382, %v456
          %v458 = vand.u32 %v322, 4294901760
          %459 = vmatmul.f32.gmra.mxu0 %v458
          %v460 = vpop.f32.mrf.mxu0
          %v461 = vadd.f32 %v390, %v460
          %v462 = vand.u32 %v325, 4294901760
          %463 = vmatmul.f32.gmra.mxu0 %v462
          %v464 = vpop.f32.mrf.mxu0
          %v465 = vadd.f32 %v398, %v464
          %v466 = vand.u32 %v328, 4294901760
          %467 = vmatmul.f32.gmra.mxu0 %v466
          %v468 = vpop.f32.mrf.mxu0
          %v469 = vadd.f32 %v406, %v468
          %v470 = vand.u32 %v331, 4294901760
          %471 = vmatmul.f32.gmra.mxu0 %v470
          %v472 = vpop.f32.mrf.mxu0
          %v473 = vadd.f32 %v414, %v472
          %474 = vdwg.mxu0
          %475 = vmatpush.msra.mxu0 0.0
          %476 = vmatpush.msra.mxu0 0.0
          %477 = vmatpush.msra.mxu0 0.0
          %478 = vmatpush.msra.mxu0 0.0
          %479 = vmatpush.msra.mxu0 0.0
          %480 = vmatpush.msra.mxu0 0.0
          %481 = vmatpush.msra.mxu0 0.0
          %482 = vmatpush.msra.mxu0 0.0
          %483 = vmatpush.msra.mxu0 0.0
          %484 = vmatpush.msra.mxu0 0.0
          %485 = vmatpush.msra.mxu0 0.0
          %486 = vmatpush.msra.mxu0 0.0
          %487 = vmatpush.msra.mxu0 0.0
          %488 = vmatpush.msra.mxu0 0.0
          %v489 = vand.u32 %v307, 4294901760
          %v490 = vsub.f32 %v307, %v489
          %491 = vmatpush.msra.mxu0 %v490
          %v492 = vand.u32 %v306, 4294901760
          %v493 = vsub.f32 %v306, %v492
          %494 = vmatpush.msra.mxu0 %v493
          %v495 = vand.u32 %v310, 4294901760
          %v496 = vsub.f32 %v310, %v495
          %497 = vmatmul.f32.gmra.mxu0 %v496
          %v498 = vpop.f32.mrf.mxu0
          %v499 = vadd.f32 %v445, %v498
          %v500 = vand.u32 %v313, 4294901760
          %v501 = vsub.f32 %v313, %v500
          %502 = vmatmul.f32.gmra.mxu0 %v501
          %v503 = vpop.f32.mrf.mxu0
          %v504 = vadd.f32 %v449, %v503
          %v505 = vand.u32 %v316, 4294901760
          %v506 = vsub.f32 %v316, %v505
          %507 = vmatmul.f32.gmra.mxu0 %v506
          %v508 = vpop.f32.mrf.mxu0
          %v509 = vadd.f32 %v453, %v508
          %v510 = vand.u32 %v319, 4294901760
          %v511 = vsub.f32 %v319, %v510
          %512 = vmatmul.f32.gmra.mxu0 %v511
          %v513 = vpop.f32.mrf.mxu0
          %v514 = vadd.f32 %v457, %v513
          %v515 = vand.u32 %v322, 4294901760
          %v516 = vsub.f32 %v322, %v515
          %517 = vmatmul.f32.gmra.mxu0 %v516
          %v518 = vpop.f32.mrf.mxu0
          %v519 = vadd.f32 %v461, %v518
          %v520 = vand.u32 %v325, 4294901760
          %v521 = vsub.f32 %v325, %v520
          %522 = vmatmul.f32.gmra.mxu0 %v521
          %v523 = vpop.f32.mrf.mxu0
          %v524 = vadd.f32 %v465, %v523
          %v525 = vand.u32 %v328, 4294901760
          %v526 = vsub.f32 %v328, %v525
          %527 = vmatmul.f32.gmra.mxu0 %v526
          %v528 = vpop.f32.mrf.mxu0
          %v529 = vadd.f32 %v469, %v528
          %v530 = vand.u32 %v331, 4294901760
          %v531 = vsub.f32 %v331, %v530
          %532 = vmatmul.f32.gmra.mxu0 %v531
          %v533 = vpop.f32.mrf.mxu0
          %v534 = vadd.f32 %v473, %v533
          %535 = vdwg.mxu0
          %536 = vmatpush.msra.mxu0 0.0
          %537 = vmatpush.msra.mxu0 0.0
          %538 = vmatpush.msra.mxu0 0.0
          %539 = vmatpush.msra.mxu0 0.0
          %540 = vmatpush.msra.mxu0 0.0
          %541 = vmatpush.msra.mxu0 0.0
          %542 = vmatpush.msra.mxu0 0.0
          %543 = vmatpush.msra.mxu0 0.0
          %544 = vmatpush.msra.mxu0 0.0
          %545 = vmatpush.msra.mxu0 0.0
          %546 = vmatpush.msra.mxu0 0.0
          %547 = vmatpush.msra.mxu0 0.0
          %548 = vmatpush.msra.mxu0 0.0
          %549 = vmatpush.msra.mxu0 0.0
          %v550 = vand.u32 %v307, 4294901760
          %551 = vmatpush.msra.mxu0 %v550
          %v552 = vand.u32 %v306, 4294901760
          %553 = vmatpush.msra.mxu0 %v552
          %v554 = vand.u32 %v310, 4294901760
          %v555 = vsub.f32 %v310, %v554
          %v556 = vand.u32 %v555, 4294901760
          %557 = vmatmul.f32.gmra.mxu0 %v556
          %v558 = vpop.f32.mrf.mxu0
          %v559 = vadd.f32 %v499, %v558
          %v560 = vand.u32 %v313, 4294901760
          %v561 = vsub.f32 %v313, %v560
          %v562 = vand.u32 %v561, 4294901760
          %563 = vmatmul.f32.gmra.mxu0 %v562
          %v564 = vpop.f32.mrf.mxu0
          %v565 = vadd.f32 %v504, %v564
          %v566 = vand.u32 %v316, 4294901760
          %v567 = vsub.f32 %v316, %v566
          %v568 = vand.u32 %v567, 4294901760
          %569 = vmatmul.f32.gmra.mxu0 %v568
          %v570 = vpop.f32.mrf.mxu0
          %v571 = vadd.f32 %v509, %v570
          %v572 = vand.u32 %v319, 4294901760
          %v573 = vsub.f32 %v319, %v572
          %v574 = vand.u32 %v573, 4294901760
          %575 = vmatmul.f32.gmra.mxu0 %v574
          %v576 = vpop.f32.mrf.mxu0
          %v577 = vadd.f32 %v514, %v576
          %v578 = vand.u32 %v322, 4294901760
          %v579 = vsub.f32 %v322, %v578
          %v580 = vand.u32 %v579, 4294901760
          %581 = vmatmul.f32.gmra.mxu0 %v580
          %v582 = vpop.f32.mrf.mxu0
          %v583 = vadd.f32 %v519, %v582
          %v584 = vand.u32 %v325, 4294901760
          %v585 = vsub.f32 %v325, %v584
          %v586 = vand.u32 %v585, 4294901760
          %587 = vmatmul.f32.gmra.mxu0 %v586
          %v588 = vpop.f32.mrf.mxu0
          %v589 = vadd.f32 %v524, %v588
          %v590 = vand.u32 %v328, 4294901760
          %v591 = vsub.f32 %v328, %v590
          %v592 = vand.u32 %v591, 4294901760
          %593 = vmatmul.f32.gmra.mxu0 %v592
          %v594 = vpop.f32.mrf.mxu0
          %v595 = vadd.f32 %v529, %v594
          %v596 = vand.u32 %v331, 4294901760
          %v597 = vsub.f32 %v331, %v596
          %v598 = vand.u32 %v597, 4294901760
          %599 = vmatmul.f32.gmra.mxu0 %v598
          %v600 = vpop.f32.mrf.mxu0
          %v601 = vadd.f32 %v534, %v600
          %602 = vdwg.mxu0
          %603 = vmatpush.msra.mxu0 0.0
          %604 = vmatpush.msra.mxu0 0.0
          %605 = vmatpush.msra.mxu0 0.0
          %606 = vmatpush.msra.mxu0 0.0
          %607 = vmatpush.msra.mxu0 0.0
          %608 = vmatpush.msra.mxu0 0.0
          %609 = vmatpush.msra.mxu0 0.0
          %610 = vmatpush.msra.mxu0 0.0
          %611 = vmatpush.msra.mxu0 0.0
          %612 = vmatpush.msra.mxu0 0.0
          %613 = vmatpush.msra.mxu0 0.0
          %614 = vmatpush.msra.mxu0 0.0
          %615 = vmatpush.msra.mxu0 0.0
          %616 = vmatpush.msra.mxu0 0.0
          %v617 = vand.u32 %v307, 4294901760
          %v618 = vsub.f32 %v307, %v617
          %v619 = vand.u32 %v618, 4294901760
          %620 = vmatpush.msra.mxu0 %v619
          %v621 = vand.u32 %v306, 4294901760
          %v622 = vsub.f32 %v306, %v621
          %v623 = vand.u32 %v622, 4294901760
          %624 = vmatpush.msra.mxu0 %v623
          %v625 = vand.u32 %v310, 4294901760
          %626 = vmatmul.f32.gmra.mxu0 %v625
          %v627 = vpop.f32.mrf.mxu0
          %v628 = vadd.f32 %v559, %v627
          %v629 = vand.u32 %v313, 4294901760
          %630 = vmatmul.f32.gmra.mxu0 %v629
          %v631 = vpop.f32.mrf.mxu0
          %v632 = vadd.f32 %v565, %v631
          %v633 = vand.u32 %v316, 4294901760
          %634 = vmatmul.f32.gmra.mxu0 %v633
          %v635 = vpop.f32.mrf.mxu0
          %v636 = vadd.f32 %v571, %v635
          %v637 = vand.u32 %v319, 4294901760
          %638 = vmatmul.f32.gmra.mxu0 %v637
          %v639 = vpop.f32.mrf.mxu0
          %v640 = vadd.f32 %v577, %v639
          %v641 = vand.u32 %v322, 4294901760
          %642 = vmatmul.f32.gmra.mxu0 %v641
          %v643 = vpop.f32.mrf.mxu0
          %v644 = vadd.f32 %v583, %v643
          %v645 = vand.u32 %v325, 4294901760
          %646 = vmatmul.f32.gmra.mxu0 %v645
          %v647 = vpop.f32.mrf.mxu0
          %v648 = vadd.f32 %v589, %v647
          %v649 = vand.u32 %v328, 4294901760
          %650 = vmatmul.f32.gmra.mxu0 %v649
          %v651 = vpop.f32.mrf.mxu0
          %v652 = vadd.f32 %v595, %v651
          %v653 = vand.u32 %v331, 4294901760
          %654 = vmatmul.f32.gmra.mxu0 %v653
          %v655 = vpop.f32.mrf.mxu0
          %v656 = vadd.f32 %v601, %v655
          %657 = vdwg.mxu0
          %658 = vmatpush.msra.mxu0 0.0
          %659 = vmatpush.msra.mxu0 0.0
          %660 = vmatpush.msra.mxu0 0.0
          %661 = vmatpush.msra.mxu0 0.0
          %662 = vmatpush.msra.mxu0 0.0
          %663 = vmatpush.msra.mxu0 0.0
          %664 = vmatpush.msra.mxu0 0.0
          %665 = vmatpush.msra.mxu0 0.0
          %666 = vmatpush.msra.mxu0 0.0
          %667 = vmatpush.msra.mxu0 0.0
          %668 = vmatpush.msra.mxu0 0.0
          %669 = vmatpush.msra.mxu0 0.0
          %670 = vmatpush.msra.mxu0 0.0
          %671 = vmatpush.msra.mxu0 0.0
          %v672 = vand.u32 %v307, 4294901760
          %673 = vmatpush.msra.mxu0 %v672
          %v674 = vand.u32 %v306, 4294901760
          %675 = vmatpush.msra.mxu0 %v674
          %v676 = vand.u32 %v310, 4294901760
          %677 = vmatmul.f32.gmra.mxu0 %v676
          %v678 = vpop.f32.mrf.mxu0
          %v679 = vadd.f32 %v628, %v678
          %v680 = vand.u32 %v313, 4294901760
          %681 = vmatmul.f32.gmra.mxu0 %v680
          %v682 = vpop.f32.mrf.mxu0
          %v683 = vadd.f32 %v632, %v682
          %v684 = vand.u32 %v316, 4294901760
          %685 = vmatmul.f32.gmra.mxu0 %v684
          %v686 = vpop.f32.mrf.mxu0
          %v687 = vadd.f32 %v636, %v686
          %v688 = vand.u32 %v319, 4294901760
          %689 = vmatmul.f32.gmra.mxu0 %v688
          %v690 = vpop.f32.mrf.mxu0
          %v691 = vadd.f32 %v640, %v690
          %v692 = vand.u32 %v322, 4294901760
          %693 = vmatmul.f32.gmra.mxu0 %v692
          %v694 = vpop.f32.mrf.mxu0
          %v695 = vadd.f32 %v644, %v694
          %v696 = vand.u32 %v325, 4294901760
          %697 = vmatmul.f32.gmra.mxu0 %v696
          %v698 = vpop.f32.mrf.mxu0
          %v699 = vadd.f32 %v648, %v698
          %v700 = vand.u32 %v328, 4294901760
          %701 = vmatmul.f32.gmra.mxu0 %v700
          %v702 = vpop.f32.mrf.mxu0
          %v703 = vadd.f32 %v652, %v702
          %v704 = vand.u32 %v331, 4294901760
          %705 = vmatmul.f32.gmra.mxu0 %v704
          %v706 = vpop.f32.mrf.mxu0
          %v707 = vadd.f32 %v656, %v706
          %708 = vdwg.mxu0
          %v709 = vld [vmem:[%s220] sm:$0xff]
          %v710 = vld [vmem:[%s220 + $0x8] sm:$0xff]
          %v712 = vsel %vm308, %v709, 0
          %v715 = vsel %vm308, %v710, 0
          %717 = vmatpush.msra.mxu0 0.0
          %718 = vmatpush.msra.mxu0 0.0
          %719 = vmatpush.msra.mxu0 0.0
          %720 = vmatpush.msra.mxu0 0.0
          %721 = vmatpush.msra.mxu0 0.0
          %722 = vmatpush.msra.mxu0 0.0
          %723 = vmatpush.msra.mxu0 0.0
          %724 = vmatpush.msra.mxu0 0.0
          %725 = vmatpush.msra.mxu0 0.0
          %726 = vmatpush.msra.mxu0 0.0
          %727 = vmatpush.msra.mxu0 0.0
          %728 = vmatpush.msra.mxu0 0.0
          %729 = vmatpush.msra.mxu0 0.0
          %730 = vmatpush.msra.mxu0 0.0
          %v731 = vand.u32 %v683, 4294901760
          %732 = vmatpush.msra.mxu0 %v731
          %v733 = vand.u32 %v679, 4294901760
          %734 = vmatpush.msra.mxu0 %v733
          %v735 = vand.u32 %v712, 4294901760
          %v736 = vsub.f32 %v712, %v735
          %v737 = vand.u32 %v736, 4294901760
          %v738 = vsub.f32 %v736, %v737
          %v739 = vand.u32 %v738, 4294901760
          %740 = vmatmul.f32.gmra.mxu0 %v739
          %v741 = vpop.f32.mrf.mxu0
          %v742 = vadd.f32 0.0, %v741
          %v743 = vand.u32 %v715, 4294901760
          %v744 = vsub.f32 %v715, %v743
          %v745 = vand.u32 %v744, 4294901760
          %v746 = vsub.f32 %v744, %v745
          %v747 = vand.u32 %v746, 4294901760
          %748 = vmatmul.f32.gmra.mxu0 %v747
          %v749 = vpop.f32.mrf.mxu0
          %v750 = vadd.f32 0.0, %v749
          %751 = vdwg.mxu0
          %752 = vmatpush.msra.mxu0 0.0
          %753 = vmatpush.msra.mxu0 0.0
          %754 = vmatpush.msra.mxu0 0.0
          %755 = vmatpush.msra.mxu0 0.0
          %756 = vmatpush.msra.mxu0 0.0
          %757 = vmatpush.msra.mxu0 0.0
          %758 = vmatpush.msra.mxu0 0.0
          %759 = vmatpush.msra.mxu0 0.0
          %760 = vmatpush.msra.mxu0 0.0
          %761 = vmatpush.msra.mxu0 0.0
          %762 = vmatpush.msra.mxu0 0.0
          %763 = vmatpush.msra.mxu0 0.0
          %764 = vmatpush.msra.mxu0 0.0
          %765 = vmatpush.msra.mxu0 0.0
          %v766 = vand.u32 %v683, 4294901760
          %v767 = vsub.f32 %v683, %v766
          %v768 = vand.u32 %v767, 4294901760
          %v769 = vsub.f32 %v767, %v768
          %v770 = vand.u32 %v769, 4294901760
          %771 = vmatpush.msra.mxu0 %v770
          %v772 = vand.u32 %v679, 4294901760
          %v773 = vsub.f32 %v679, %v772
          %v774 = vand.u32 %v773, 4294901760
          %v775 = vsub.f32 %v773, %v774
          %v776 = vand.u32 %v775, 4294901760
          %777 = vmatpush.msra.mxu0 %v776
          %v778 = vand.u32 %v712, 4294901760
          %779 = vmatmul.f32.gmra.mxu0 %v778
          %v780 = vpop.f32.mrf.mxu0
          %v781 = vadd.f32 %v742, %v780
          %v782 = vand.u32 %v715, 4294901760
          %783 = vmatmul.f32.gmra.mxu0 %v782
          %v784 = vpop.f32.mrf.mxu0
          %v785 = vadd.f32 %v750, %v784
          %786 = vdwg.mxu0
          %787 = vmatpush.msra.mxu0 0.0
          %788 = vmatpush.msra.mxu0 0.0
          %789 = vmatpush.msra.mxu0 0.0
          %790 = vmatpush.msra.mxu0 0.0
          %791 = vmatpush.msra.mxu0 0.0
          %792 = vmatpush.msra.mxu0 0.0
          %793 = vmatpush.msra.mxu0 0.0
          %794 = vmatpush.msra.mxu0 0.0
          %795 = vmatpush.msra.mxu0 0.0
          %796 = vmatpush.msra.mxu0 0.0
          %797 = vmatpush.msra.mxu0 0.0
          %798 = vmatpush.msra.mxu0 0.0
          %799 = vmatpush.msra.mxu0 0.0
          %800 = vmatpush.msra.mxu0 0.0
          %v801 = vand.u32 %v683, 4294901760
          %v802 = vsub.f32 %v683, %v801
          %803 = vmatpush.msra.mxu0 %v802
          %v804 = vand.u32 %v679, 4294901760
          %v805 = vsub.f32 %v679, %v804
          %806 = vmatpush.msra.mxu0 %v805
          %v807 = vand.u32 %v712, 4294901760
          %v808 = vsub.f32 %v712, %v807
          %809 = vmatmul.f32.gmra.mxu0 %v808
          %v810 = vpop.f32.mrf.mxu0
          %v811 = vadd.f32 %v781, %v810
          %v812 = vand.u32 %v715, 4294901760
          %v813 = vsub.f32 %v715, %v812
          %814 = vmatmul.f32.gmra.mxu0 %v813
          %v815 = vpop.f32.mrf.mxu0
          %v816 = vadd.f32 %v785, %v815
          %817 = vdwg.mxu0
          %818 = vmatpush.msra.mxu0 0.0
          %819 = vmatpush.msra.mxu0 0.0
          %820 = vmatpush.msra.mxu0 0.0
          %821 = vmatpush.msra.mxu0 0.0
          %822 = vmatpush.msra.mxu0 0.0
          %823 = vmatpush.msra.mxu0 0.0
          %824 = vmatpush.msra.mxu0 0.0
          %825 = vmatpush.msra.mxu0 0.0
          %826 = vmatpush.msra.mxu0 0.0
          %827 = vmatpush.msra.mxu0 0.0
          %828 = vmatpush.msra.mxu0 0.0
          %829 = vmatpush.msra.mxu0 0.0
          %830 = vmatpush.msra.mxu0 0.0
          %831 = vmatpush.msra.mxu0 0.0
          %v832 = vand.u32 %v683, 4294901760
          %833 = vmatpush.msra.mxu0 %v832
          %v834 = vand.u32 %v679, 4294901760
          %835 = vmatpush.msra.mxu0 %v834
          %v836 = vand.u32 %v712, 4294901760
          %v837 = vsub.f32 %v712, %v836
          %v838 = vand.u32 %v837, 4294901760
          %839 = vmatmul.f32.gmra.mxu0 %v838
          %v840 = vpop.f32.mrf.mxu0
          %v841 = vadd.f32 %v811, %v840
          %v842 = vand.u32 %v715, 4294901760
          %v843 = vsub.f32 %v715, %v842
          %v844 = vand.u32 %v843, 4294901760
          %845 = vmatmul.f32.gmra.mxu0 %v844
          %v846 = vpop.f32.mrf.mxu0
          %v847 = vadd.f32 %v816, %v846
          %848 = vdwg.mxu0
          %849 = vmatpush.msra.mxu0 0.0
          %850 = vmatpush.msra.mxu0 0.0
          %851 = vmatpush.msra.mxu0 0.0
          %852 = vmatpush.msra.mxu0 0.0
          %853 = vmatpush.msra.mxu0 0.0
          %854 = vmatpush.msra.mxu0 0.0
          %855 = vmatpush.msra.mxu0 0.0
          %856 = vmatpush.msra.mxu0 0.0
          %857 = vmatpush.msra.mxu0 0.0
          %858 = vmatpush.msra.mxu0 0.0
          %859 = vmatpush.msra.mxu0 0.0
          %860 = vmatpush.msra.mxu0 0.0
          %861 = vmatpush.msra.mxu0 0.0
          %862 = vmatpush.msra.mxu0 0.0
          %v863 = vand.u32 %v683, 4294901760
          %v864 = vsub.f32 %v683, %v863
          %v865 = vand.u32 %v864, 4294901760
          %866 = vmatpush.msra.mxu0 %v865
          %v867 = vand.u32 %v679, 4294901760
          %v868 = vsub.f32 %v679, %v867
          %v869 = vand.u32 %v868, 4294901760
          %870 = vmatpush.msra.mxu0 %v869
          %v871 = vand.u32 %v712, 4294901760
          %872 = vmatmul.f32.gmra.mxu0 %v871
          %v873 = vpop.f32.mrf.mxu0
          %v874 = vadd.f32 %v841, %v873
          %v875 = vand.u32 %v715, 4294901760
          %876 = vmatmul.f32.gmra.mxu0 %v875
          %v877 = vpop.f32.mrf.mxu0
          %v878 = vadd.f32 %v847, %v877
          %879 = vdwg.mxu0
          %880 = vmatpush.msra.mxu0 0.0
          %881 = vmatpush.msra.mxu0 0.0
          %882 = vmatpush.msra.mxu0 0.0
          %883 = vmatpush.msra.mxu0 0.0
          %884 = vmatpush.msra.mxu0 0.0
          %885 = vmatpush.msra.mxu0 0.0
          %886 = vmatpush.msra.mxu0 0.0
          %887 = vmatpush.msra.mxu0 0.0
          %888 = vmatpush.msra.mxu0 0.0
          %889 = vmatpush.msra.mxu0 0.0
          %890 = vmatpush.msra.mxu0 0.0
          %891 = vmatpush.msra.mxu0 0.0
          %892 = vmatpush.msra.mxu0 0.0
          %893 = vmatpush.msra.mxu0 0.0
          %v894 = vand.u32 %v683, 4294901760
          %895 = vmatpush.msra.mxu0 %v894
          %v896 = vand.u32 %v679, 4294901760
          %897 = vmatpush.msra.mxu0 %v896
          %v898 = vand.u32 %v712, 4294901760
          %899 = vmatmul.f32.gmra.mxu0 %v898
          %v900 = vpop.f32.mrf.mxu0
          %v901 = vadd.f32 %v874, %v900
          %v902 = vand.u32 %v715, 4294901760
          %903 = vmatmul.f32.gmra.mxu0 %v902
          %v904 = vpop.f32.mrf.mxu0
          %v905 = vadd.f32 %v878, %v904
          %906 = vdwg.mxu0
          %907 = vst.msk [vmem:[#allocation2] sm:$0xff] %vm308, %v901
          %908 = vst.msk [vmem:[#allocation2 + $0x8] sm:$0xff] %vm308, %v905
          %v909 = vld [vmem:[%s220] sm:$0xff]
          %v910 = vld [vmem:[%s220 + $0x8] sm:$0xff]
          %v912 = vsel %vm308, %v909, 0
          %v915 = vsel %vm308, %v910, 0
          %917 = vmatpush.msra.mxu0 0.0
          %918 = vmatpush.msra.mxu0 0.0
          %919 = vmatpush.msra.mxu0 0.0
          %920 = vmatpush.msra.mxu0 0.0
          %921 = vmatpush.msra.mxu0 0.0
          %922 = vmatpush.msra.mxu0 0.0
          %923 = vmatpush.msra.mxu0 0.0
          %924 = vmatpush.msra.mxu0 0.0
          %925 = vmatpush.msra.mxu0 0.0
          %926 = vmatpush.msra.mxu0 0.0
          %927 = vmatpush.msra.mxu0 0.0
          %928 = vmatpush.msra.mxu0 0.0
          %929 = vmatpush.msra.mxu0 0.0
          %930 = vmatpush.msra.mxu0 0.0
          %v931 = vand.u32 %v691, 4294901760
          %932 = vmatpush.msra.mxu0 %v931
          %v933 = vand.u32 %v687, 4294901760
          %934 = vmatpush.msra.mxu0 %v933
          %v935 = vand.u32 %v912, 4294901760
          %v936 = vsub.f32 %v912, %v935
          %v937 = vand.u32 %v936, 4294901760
          %v938 = vsub.f32 %v936, %v937
          %v939 = vand.u32 %v938, 4294901760
          %940 = vmatmul.f32.gmra.mxu0 %v939
          %v941 = vpop.f32.mrf.mxu0
          %v942 = vadd.f32 0.0, %v941
          %v943 = vand.u32 %v915, 4294901760
          %v944 = vsub.f32 %v915, %v943
          %v945 = vand.u32 %v944, 4294901760
          %v946 = vsub.f32 %v944, %v945
          %v947 = vand.u32 %v946, 4294901760
          %948 = vmatmul.f32.gmra.mxu0 %v947
          %v949 = vpop.f32.mrf.mxu0
          %v950 = vadd.f32 0.0, %v949
          %951 = vdwg.mxu0
          %952 = vmatpush.msra.mxu0 0.0
          %953 = vmatpush.msra.mxu0 0.0
          %954 = vmatpush.msra.mxu0 0.0
          %955 = vmatpush.msra.mxu0 0.0
          %956 = vmatpush.msra.mxu0 0.0
          %957 = vmatpush.msra.mxu0 0.0
          %958 = vmatpush.msra.mxu0 0.0
          %959 = vmatpush.msra.mxu0 0.0
          %960 = vmatpush.msra.mxu0 0.0
          %961 = vmatpush.msra.mxu0 0.0
          %962 = vmatpush.msra.mxu0 0.0
          %963 = vmatpush.msra.mxu0 0.0
          %964 = vmatpush.msra.mxu0 0.0
          %965 = vmatpush.msra.mxu0 0.0
          %v966 = vand.u32 %v691, 4294901760
          %v967 = vsub.f32 %v691, %v966
          %v968 = vand.u32 %v967, 4294901760
          %v969 = vsub.f32 %v967, %v968
          %v970 = vand.u32 %v969, 4294901760
          %971 = vmatpush.msra.mxu0 %v970
          %v972 = vand.u32 %v687, 4294901760
          %v973 = vsub.f32 %v687, %v972
          %v974 = vand.u32 %v973, 4294901760
          %v975 = vsub.f32 %v973, %v974
          %v976 = vand.u32 %v975, 4294901760
          %977 = vmatpush.msra.mxu0 %v976
          %v978 = vand.u32 %v912, 4294901760
          %979 = vmatmul.f32.gmra.mxu0 %v978
          %v980 = vpop.f32.mrf.mxu0
          %v981 = vadd.f32 %v942, %v980
          %v982 = vand.u32 %v915, 4294901760
          %983 = vmatmul.f32.gmra.mxu0 %v982
          %v984 = vpop.f32.mrf.mxu0
          %v985 = vadd.f32 %v950, %v984
          %986 = vdwg.mxu0
          %987 = vmatpush.msra.mxu0 0.0
          %988 = vmatpush.msra.mxu0 0.0
          %989 = vmatpush.msra.mxu0 0.0
          %990 = vmatpush.msra.mxu0 0.0
          %991 = vmatpush.msra.mxu0 0.0
          %992 = vmatpush.msra.mxu0 0.0
          %993 = vmatpush.msra.mxu0 0.0
          %994 = vmatpush.msra.mxu0 0.0
          %995 = vmatpush.msra.mxu0 0.0
          %996 = vmatpush.msra.mxu0 0.0
          %997 = vmatpush.msra.mxu0 0.0
          %998 = vmatpush.msra.mxu0 0.0
          %999 = vmatpush.msra.mxu0 0.0
          %1000 = vmatpush.msra.mxu0 0.0
          %v1001 = vand.u32 %v691, 4294901760
          %v1002 = vsub.f32 %v691, %v1001
          %1003 = vmatpush.msra.mxu0 %v1002
          %v1004 = vand.u32 %v687, 4294901760
          %v1005 = vsub.f32 %v687, %v1004
          %1006 = vmatpush.msra.mxu0 %v1005
          %v1007 = vand.u32 %v912, 4294901760
          %v1008 = vsub.f32 %v912, %v1007
          %1009 = vmatmul.f32.gmra.mxu0 %v1008
          %v1010 = vpop.f32.mrf.mxu0
          %v1011 = vadd.f32 %v981, %v1010
          %v1012 = vand.u32 %v915, 4294901760
          %v1013 = vsub.f32 %v915, %v1012
          %1014 = vmatmul.f32.gmra.mxu0 %v1013
          %v1015 = vpop.f32.mrf.mxu0
          %v1016 = vadd.f32 %v985, %v1015
          %1017 = vdwg.mxu0
          %1018 = vmatpush.msra.mxu0 0.0
          %1019 = vmatpush.msra.mxu0 0.0
          %1020 = vmatpush.msra.mxu0 0.0
          %1021 = vmatpush.msra.mxu0 0.0
          %1022 = vmatpush.msra.mxu0 0.0
          %1023 = vmatpush.msra.mxu0 0.0
          %1024 = vmatpush.msra.mxu0 0.0
          %1025 = vmatpush.msra.mxu0 0.0
          %1026 = vmatpush.msra.mxu0 0.0
          %1027 = vmatpush.msra.mxu0 0.0
          %1028 = vmatpush.msra.mxu0 0.0
          %1029 = vmatpush.msra.mxu0 0.0
          %1030 = vmatpush.msra.mxu0 0.0
          %1031 = vmatpush.msra.mxu0 0.0
          %v1032 = vand.u32 %v691, 4294901760
          %1033 = vmatpush.msra.mxu0 %v1032
          %v1034 = vand.u32 %v687, 4294901760
          %1035 = vmatpush.msra.mxu0 %v1034
          %v1036 = vand.u32 %v912, 4294901760
          %v1037 = vsub.f32 %v912, %v1036
          %v1038 = vand.u32 %v1037, 4294901760
          %1039 = vmatmul.f32.gmra.mxu0 %v1038
          %v1040 = vpop.f32.mrf.mxu0
          %v1041 = vadd.f32 %v1011, %v1040
          %v1042 = vand.u32 %v915, 4294901760
          %v1043 = vsub.f32 %v915, %v1042
          %v1044 = vand.u32 %v1043, 4294901760
          %1045 = vmatmul.f32.gmra.mxu0 %v1044
          %v1046 = vpop.f32.mrf.mxu0
          %v1047 = vadd.f32 %v1016, %v1046
          %1048 = vdwg.mxu0
          %1049 = vmatpush.msra.mxu0 0.0
          %1050 = vmatpush.msra.mxu0 0.0
          %1051 = vmatpush.msra.mxu0 0.0
          %1052 = vmatpush.msra.mxu0 0.0
          %1053 = vmatpush.msra.mxu0 0.0
          %1054 = vmatpush.msra.mxu0 0.0
          %1055 = vmatpush.msra.mxu0 0.0
          %1056 = vmatpush.msra.mxu0 0.0
          %1057 = vmatpush.msra.mxu0 0.0
          %1058 = vmatpush.msra.mxu0 0.0
          %1059 = vmatpush.msra.mxu0 0.0
          %1060 = vmatpush.msra.mxu0 0.0
          %1061 = vmatpush.msra.mxu0 0.0
          %1062 = vmatpush.msra.mxu0 0.0
          %v1063 = vand.u32 %v691, 4294901760
          %v1064 = vsub.f32 %v691, %v1063
          %v1065 = vand.u32 %v1064, 4294901760
          %1066 = vmatpush.msra.mxu0 %v1065
          %v1067 = vand.u32 %v687, 4294901760
          %v1068 = vsub.f32 %v687, %v1067
          %v1069 = vand.u32 %v1068, 4294901760
          %1070 = vmatpush.msra.mxu0 %v1069
          %v1071 = vand.u32 %v912, 4294901760
          %1072 = vmatmul.f32.gmra.mxu0 %v1071
          %v1073 = vpop.f32.mrf.mxu0
          %v1074 = vadd.f32 %v1041, %v1073
          %v1075 = vand.u32 %v915, 4294901760
          %1076 = vmatmul.f32.gmra.mxu0 %v1075
          %v1077 = vpop.f32.mrf.mxu0
          %v1078 = vadd.f32 %v1047, %v1077
          %1079 = vdwg.mxu0
          %1080 = vmatpush.msra.mxu0 0.0
          %1081 = vmatpush.msra.mxu0 0.0
          %1082 = vmatpush.msra.mxu0 0.0
          %1083 = vmatpush.msra.mxu0 0.0
          %1084 = vmatpush.msra.mxu0 0.0
          %1085 = vmatpush.msra.mxu0 0.0
          %1086 = vmatpush.msra.mxu0 0.0
          %1087 = vmatpush.msra.mxu0 0.0
          %1088 = vmatpush.msra.mxu0 0.0
          %1089 = vmatpush.msra.mxu0 0.0
          %1090 = vmatpush.msra.mxu0 0.0
          %1091 = vmatpush.msra.mxu0 0.0
          %1092 = vmatpush.msra.mxu0 0.0
          %1093 = vmatpush.msra.mxu0 0.0
          %v1094 = vand.u32 %v691, 4294901760
          %1095 = vmatpush.msra.mxu0 %v1094
          %v1096 = vand.u32 %v687, 4294901760
          %1097 = vmatpush.msra.mxu0 %v1096
          %v1098 = vand.u32 %v912, 4294901760
          %1099 = vmatmul.f32.gmra.mxu0 %v1098
          %v1100 = vpop.f32.mrf.mxu0
          %v1101 = vadd.f32 %v1074, %v1100
          %v1102 = vand.u32 %v915, 4294901760
          %1103 = vmatmul.f32.gmra.mxu0 %v1102
          %v1104 = vpop.f32.mrf.mxu0
          %v1105 = vadd.f32 %v1078, %v1104
          %1106 = vdwg.mxu0
          %s1107 = scalar_lea.vmem [#allocation2], 16
          %1108 = vst.msk [vmem:[%s1107] sm:$0xff] %vm308, %v1101
          %1109 = vst.msk [vmem:[%s1107 + $0x8] sm:$0xff] %vm308, %v1105
          %v1110 = vld [vmem:[%s220] sm:$0xff]
          %v1111 = vld [vmem:[%s220 + $0x8] sm:$0xff]
          %v1113 = vsel %vm308, %v1110, 0
          %v1116 = vsel %vm308, %v1111, 0
          %1118 = vmatpush.msra.mxu0 0.0
          %1119 = vmatpush.msra.mxu0 0.0
          %1120 = vmatpush.msra.mxu0 0.0
          %1121 = vmatpush.msra.mxu0 0.0
          %1122 = vmatpush.msra.mxu0 0.0
          %1123 = vmatpush.msra.mxu0 0.0
          %1124 = vmatpush.msra.mxu0 0.0
          %1125 = vmatpush.msra.mxu0 0.0
          %1126 = vmatpush.msra.mxu0 0.0
          %1127 = vmatpush.msra.mxu0 0.0
          %1128 = vmatpush.msra.mxu0 0.0
          %1129 = vmatpush.msra.mxu0 0.0
          %1130 = vmatpush.msra.mxu0 0.0
          %1131 = vmatpush.msra.mxu0 0.0
          %v1132 = vand.u32 %v699, 4294901760
          %1133 = vmatpush.msra.mxu0 %v1132
          %v1134 = vand.u32 %v695, 4294901760
          %1135 = vmatpush.msra.mxu0 %v1134
          %v1136 = vand.u32 %v1113, 4294901760
          %v1137 = vsub.f32 %v1113, %v1136
          %v1138 = vand.u32 %v1137, 4294901760
          %v1139 = vsub.f32 %v1137, %v1138
          %v1140 = vand.u32 %v1139, 4294901760
          %1141 = vmatmul.f32.gmra.mxu0 %v1140
          %v1142 = vpop.f32.mrf.mxu0
          %v1143 = vadd.f32 0.0, %v1142
          %v1144 = vand.u32 %v1116, 4294901760
          %v1145 = vsub.f32 %v1116, %v1144
          %v1146 = vand.u32 %v1145, 4294901760
          %v1147 = vsub.f32 %v1145, %v1146
          %v1148 = vand.u32 %v1147, 4294901760
          %1149 = vmatmul.f32.gmra.mxu0 %v1148
          %v1150 = vpop.f32.mrf.mxu0
          %v1151 = vadd.f32 0.0, %v1150
          %1152 = vdwg.mxu0
          %1153 = vmatpush.msra.mxu0 0.0
          %1154 = vmatpush.msra.mxu0 0.0
          %1155 = vmatpush.msra.mxu0 0.0
          %1156 = vmatpush.msra.mxu0 0.0
          %1157 = vmatpush.msra.mxu0 0.0
          %1158 = vmatpush.msra.mxu0 0.0
          %1159 = vmatpush.msra.mxu0 0.0
          %1160 = vmatpush.msra.mxu0 0.0
          %1161 = vmatpush.msra.mxu0 0.0
          %1162 = vmatpush.msra.mxu0 0.0
          %1163 = vmatpush.msra.mxu0 0.0
          %1164 = vmatpush.msra.mxu0 0.0
          %1165 = vmatpush.msra.mxu0 0.0
          %1166 = vmatpush.msra.mxu0 0.0
          %v1167 = vand.u32 %v699, 4294901760
          %v1168 = vsub.f32 %v699, %v1167
          %v1169 = vand.u32 %v1168, 4294901760
          %v1170 = vsub.f32 %v1168, %v1169
          %v1171 = vand.u32 %v1170, 4294901760
          %1172 = vmatpush.msra.mxu0 %v1171
          %v1173 = vand.u32 %v695, 4294901760
          %v1174 = vsub.f32 %v695, %v1173
          %v1175 = vand.u32 %v1174, 4294901760
          %v1176 = vsub.f32 %v1174, %v1175
          %v1177 = vand.u32 %v1176, 4294901760
          %1178 = vmatpush.msra.mxu0 %v1177
          %v1179 = vand.u32 %v1113, 4294901760
          %1180 = vmatmul.f32.gmra.mxu0 %v1179
          %v1181 = vpop.f32.mrf.mxu0
          %v1182 = vadd.f32 %v1143, %v1181
          %v1183 = vand.u32 %v1116, 4294901760
          %1184 = vmatmul.f32.gmra.mxu0 %v1183
          %v1185 = vpop.f32.mrf.mxu0
          %v1186 = vadd.f32 %v1151, %v1185
          %1187 = vdwg.mxu0
          %1188 = vmatpush.msra.mxu0 0.0
          %1189 = vmatpush.msra.mxu0 0.0
          %1190 = vmatpush.msra.mxu0 0.0
          %1191 = vmatpush.msra.mxu0 0.0
          %1192 = vmatpush.msra.mxu0 0.0
          %1193 = vmatpush.msra.mxu0 0.0
          %1194 = vmatpush.msra.mxu0 0.0
          %1195 = vmatpush.msra.mxu0 0.0
          %1196 = vmatpush.msra.mxu0 0.0
          %1197 = vmatpush.msra.mxu0 0.0
          %1198 = vmatpush.msra.mxu0 0.0
          %1199 = vmatpush.msra.mxu0 0.0
          %1200 = vmatpush.msra.mxu0 0.0
          %1201 = vmatpush.msra.mxu0 0.0
          %v1202 = vand.u32 %v699, 4294901760
          %v1203 = vsub.f32 %v699, %v1202
          %1204 = vmatpush.msra.mxu0 %v1203
          %v1205 = vand.u32 %v695, 4294901760
          %v1206 = vsub.f32 %v695, %v1205
          %1207 = vmatpush.msra.mxu0 %v1206
          %v1208 = vand.u32 %v1113, 4294901760
          %v1209 = vsub.f32 %v1113, %v1208
          %1210 = vmatmul.f32.gmra.mxu0 %v1209
          %v1211 = vpop.f32.mrf.mxu0
          %v1212 = vadd.f32 %v1182, %v1211
          %v1213 = vand.u32 %v1116, 4294901760
          %v1214 = vsub.f32 %v1116, %v1213
          %1215 = vmatmul.f32.gmra.mxu0 %v1214
          %v1216 = vpop.f32.mrf.mxu0
          %v1217 = vadd.f32 %v1186, %v1216
          %1218 = vdwg.mxu0
          %1219 = vmatpush.msra.mxu0 0.0
          %1220 = vmatpush.msra.mxu0 0.0
          %1221 = vmatpush.msra.mxu0 0.0
          %1222 = vmatpush.msra.mxu0 0.0
          %1223 = vmatpush.msra.mxu0 0.0
          %1224 = vmatpush.msra.mxu0 0.0
          %1225 = vmatpush.msra.mxu0 0.0
          %1226 = vmatpush.msra.mxu0 0.0
          %1227 = vmatpush.msra.mxu0 0.0
          %1228 = vmatpush.msra.mxu0 0.0
          %1229 = vmatpush.msra.mxu0 0.0
          %1230 = vmatpush.msra.mxu0 0.0
          %1231 = vmatpush.msra.mxu0 0.0
          %1232 = vmatpush.msra.mxu0 0.0
          %v1233 = vand.u32 %v699, 4294901760
          %1234 = vmatpush.msra.mxu0 %v1233
          %v1235 = vand.u32 %v695, 4294901760
          %1236 = vmatpush.msra.mxu0 %v1235
          %v1237 = vand.u32 %v1113, 4294901760
          %v1238 = vsub.f32 %v1113, %v1237
          %v1239 = vand.u32 %v1238, 4294901760
          %1240 = vmatmul.f32.gmra.mxu0 %v1239
          %v1241 = vpop.f32.mrf.mxu0
          %v1242 = vadd.f32 %v1212, %v1241
          %v1243 = vand.u32 %v1116, 4294901760
          %v1244 = vsub.f32 %v1116, %v1243
          %v1245 = vand.u32 %v1244, 4294901760
          %1246 = vmatmul.f32.gmra.mxu0 %v1245
          %v1247 = vpop.f32.mrf.mxu0
          %v1248 = vadd.f32 %v1217, %v1247
          %1249 = vdwg.mxu0
          %1250 = vmatpush.msra.mxu0 0.0
          %1251 = vmatpush.msra.mxu0 0.0
          %1252 = vmatpush.msra.mxu0 0.0
          %1253 = vmatpush.msra.mxu0 0.0
          %1254 = vmatpush.msra.mxu0 0.0
          %1255 = vmatpush.msra.mxu0 0.0
          %1256 = vmatpush.msra.mxu0 0.0
          %1257 = vmatpush.msra.mxu0 0.0
          %1258 = vmatpush.msra.mxu0 0.0
          %1259 = vmatpush.msra.mxu0 0.0
          %1260 = vmatpush.msra.mxu0 0.0
          %1261 = vmatpush.msra.mxu0 0.0
          %1262 = vmatpush.msra.mxu0 0.0
          %1263 = vmatpush.msra.mxu0 0.0
          %v1264 = vand.u32 %v699, 4294901760
          %v1265 = vsub.f32 %v699, %v1264
          %v1266 = vand.u32 %v1265, 4294901760
          %1267 = vmatpush.msra.mxu0 %v1266
          %v1268 = vand.u32 %v695, 4294901760
          %v1269 = vsub.f32 %v695, %v1268
          %v1270 = vand.u32 %v1269, 4294901760
          %1271 = vmatpush.msra.mxu0 %v1270
          %v1272 = vand.u32 %v1113, 4294901760
          %1273 = vmatmul.f32.gmra.mxu0 %v1272
          %v1274 = vpop.f32.mrf.mxu0
          %v1275 = vadd.f32 %v1242, %v1274
          %v1276 = vand.u32 %v1116, 4294901760
          %1277 = vmatmul.f32.gmra.mxu0 %v1276
          %v1278 = vpop.f32.mrf.mxu0
          %v1279 = vadd.f32 %v1248, %v1278
          %1280 = vdwg.mxu0
          %1281 = vmatpush.msra.mxu0 0.0
          %1282 = vmatpush.msra.mxu0 0.0
          %1283 = vmatpush.msra.mxu0 0.0
          %1284 = vmatpush.msra.mxu0 0.0
          %1285 = vmatpush.msra.mxu0 0.0
          %1286 = vmatpush.msra.mxu0 0.0
          %1287 = vmatpush.msra.mxu0 0.0
          %1288 = vmatpush.msra.mxu0 0.0
          %1289 = vmatpush.msra.mxu0 0.0
          %1290 = vmatpush.msra.mxu0 0.0
          %1291 = vmatpush.msra.mxu0 0.0
          %1292 = vmatpush.msra.mxu0 0.0
          %1293 = vmatpush.msra.mxu0 0.0
          %1294 = vmatpush.msra.mxu0 0.0
          %v1295 = vand.u32 %v699, 4294901760
          %1296 = vmatpush.msra.mxu0 %v1295
          %v1297 = vand.u32 %v695, 4294901760
          %1298 = vmatpush.msra.mxu0 %v1297
          %v1299 = vand.u32 %v1113, 4294901760
          %1300 = vmatmul.f32.gmra.mxu0 %v1299
          %v1301 = vpop.f32.mrf.mxu0
          %v1302 = vadd.f32 %v1275, %v1301
          %v1303 = vand.u32 %v1116, 4294901760
          %1304 = vmatmul.f32.gmra.mxu0 %v1303
          %v1305 = vpop.f32.mrf.mxu0
          %v1306 = vadd.f32 %v1279, %v1305
          %1307 = vdwg.mxu0
          %s1308 = scalar_lea.vmem [#allocation2], 32
          %1309 = vst.msk [vmem:[%s1308] sm:$0xff] %vm308, %v1302
          %1310 = vst.msk [vmem:[%s1308 + $0x8] sm:$0xff] %vm308, %v1306
          %v1311 = vld [vmem:[%s220] sm:$0xff]
          %v1312 = vld [vmem:[%s220 + $0x8] sm:$0xff]
          %v1314 = vsel %vm308, %v1311, 0
          %v1317 = vsel %vm308, %v1312, 0
          %1319 = vmatpush.msra.mxu0 0.0
          %1320 = vmatpush.msra.mxu0 0.0
          %1321 = vmatpush.msra.mxu0 0.0
          %1322 = vmatpush.msra.mxu0 0.0
          %1323 = vmatpush.msra.mxu0 0.0
          %1324 = vmatpush.msra.mxu0 0.0
          %1325 = vmatpush.msra.mxu0 0.0
          %1326 = vmatpush.msra.mxu0 0.0
          %1327 = vmatpush.msra.mxu0 0.0
          %1328 = vmatpush.msra.mxu0 0.0
          %1329 = vmatpush.msra.mxu0 0.0
          %1330 = vmatpush.msra.mxu0 0.0
          %1331 = vmatpush.msra.mxu0 0.0
          %1332 = vmatpush.msra.mxu0 0.0
          %v1333 = vand.u32 %v707, 4294901760
          %1334 = vmatpush.msra.mxu0 %v1333
          %v1335 = vand.u32 %v703, 4294901760
          %1336 = vmatpush.msra.mxu0 %v1335
          %v1337 = vand.u32 %v1314, 4294901760
          %v1338 = vsub.f32 %v1314, %v1337
          %v1339 = vand.u32 %v1338, 4294901760
          %v1340 = vsub.f32 %v1338, %v1339
          %v1341 = vand.u32 %v1340, 4294901760
          %1342 = vmatmul.f32.gmra.mxu0 %v1341
          %v1343 = vpop.f32.mrf.mxu0
          %v1344 = vadd.f32 0.0, %v1343
          %v1345 = vand.u32 %v1317, 4294901760
          %v1346 = vsub.f32 %v1317, %v1345
          %v1347 = vand.u32 %v1346, 4294901760
          %v1348 = vsub.f32 %v1346, %v1347
          %v1349 = vand.u32 %v1348, 4294901760
          %1350 = vmatmul.f32.gmra.mxu0 %v1349
          %v1351 = vpop.f32.mrf.mxu0
          %v1352 = vadd.f32 0.0, %v1351
          %1353 = vdwg.mxu0
          %1354 = vmatpush.msra.mxu0 0.0
          %1355 = vmatpush.msra.mxu0 0.0
          %1356 = vmatpush.msra.mxu0 0.0
          %1357 = vmatpush.msra.mxu0 0.0
          %1358 = vmatpush.msra.mxu0 0.0
          %1359 = vmatpush.msra.mxu0 0.0
          %1360 = vmatpush.msra.mxu0 0.0
          %1361 = vmatpush.msra.mxu0 0.0
          %1362 = vmatpush.msra.mxu0 0.0
          %1363 = vmatpush.msra.mxu0 0.0
          %1364 = vmatpush.msra.mxu0 0.0
          %1365 = vmatpush.msra.mxu0 0.0
          %1366 = vmatpush.msra.mxu0 0.0
          %1367 = vmatpush.msra.mxu0 0.0
          %v1368 = vand.u32 %v707, 4294901760
          %v1369 = vsub.f32 %v707, %v1368
          %v1370 = vand.u32 %v1369, 4294901760
          %v1371 = vsub.f32 %v1369, %v1370
          %v1372 = vand.u32 %v1371, 4294901760
          %1373 = vmatpush.msra.mxu0 %v1372
          %v1374 = vand.u32 %v703, 4294901760
          %v1375 = vsub.f32 %v703, %v1374
          %v1376 = vand.u32 %v1375, 4294901760
          %v1377 = vsub.f32 %v1375, %v1376
          %v1378 = vand.u32 %v1377, 4294901760
          %1379 = vmatpush.msra.mxu0 %v1378
          %v1380 = vand.u32 %v1314, 4294901760
          %1381 = vmatmul.f32.gmra.mxu0 %v1380
          %v1382 = vpop.f32.mrf.mxu0
          %v1383 = vadd.f32 %v1344, %v1382
          %v1384 = vand.u32 %v1317, 4294901760
          %1385 = vmatmul.f32.gmra.mxu0 %v1384
          %v1386 = vpop.f32.mrf.mxu0
          %v1387 = vadd.f32 %v1352, %v1386
          %1388 = vdwg.mxu0
          %1389 = vmatpush.msra.mxu0 0.0
          %1390 = vmatpush.msra.mxu0 0.0
          %1391 = vmatpush.msra.mxu0 0.0
          %1392 = vmatpush.msra.mxu0 0.0
          %1393 = vmatpush.msra.mxu0 0.0
          %1394 = vmatpush.msra.mxu0 0.0
          %1395 = vmatpush.msra.mxu0 0.0
          %1396 = vmatpush.msra.mxu0 0.0
          %1397 = vmatpush.msra.mxu0 0.0
          %1398 = vmatpush.msra.mxu0 0.0
          %1399 = vmatpush.msra.mxu0 0.0
          %1400 = vmatpush.msra.mxu0 0.0
          %1401 = vmatpush.msra.mxu0 0.0
          %1402 = vmatpush.msra.mxu0 0.0
          %v1403 = vand.u32 %v707, 4294901760
          %v1404 = vsub.f32 %v707, %v1403
          %1405 = vmatpush.msra.mxu0 %v1404
          %v1406 = vand.u32 %v703, 4294901760
          %v1407 = vsub.f32 %v703, %v1406
          %1408 = vmatpush.msra.mxu0 %v1407
          %v1409 = vand.u32 %v1314, 4294901760
          %v1410 = vsub.f32 %v1314, %v1409
          %1411 = vmatmul.f32.gmra.mxu0 %v1410
          %v1412 = vpop.f32.mrf.mxu0
          %v1413 = vadd.f32 %v1383, %v1412
          %v1414 = vand.u32 %v1317, 4294901760
          %v1415 = vsub.f32 %v1317, %v1414
          %1416 = vmatmul.f32.gmra.mxu0 %v1415
          %v1417 = vpop.f32.mrf.mxu0
          %v1418 = vadd.f32 %v1387, %v1417
          %1419 = vdwg.mxu0
          %1420 = vmatpush.msra.mxu0 0.0
          %1421 = vmatpush.msra.mxu0 0.0
          %1422 = vmatpush.msra.mxu0 0.0
          %1423 = vmatpush.msra.mxu0 0.0
          %1424 = vmatpush.msra.mxu0 0.0
          %1425 = vmatpush.msra.mxu0 0.0
          %1426 = vmatpush.msra.mxu0 0.0
          %1427 = vmatpush.msra.mxu0 0.0
          %1428 = vmatpush.msra.mxu0 0.0
          %1429 = vmatpush.msra.mxu0 0.0
          %1430 = vmatpush.msra.mxu0 0.0
          %1431 = vmatpush.msra.mxu0 0.0
          %1432 = vmatpush.msra.mxu0 0.0
          %1433 = vmatpush.msra.mxu0 0.0
          %v1434 = vand.u32 %v707, 4294901760
          %1435 = vmatpush.msra.mxu0 %v1434
          %v1436 = vand.u32 %v703, 4294901760
          %1437 = vmatpush.msra.mxu0 %v1436
          %v1438 = vand.u32 %v1314, 4294901760
          %v1439 = vsub.f32 %v1314, %v1438
          %v1440 = vand.u32 %v1439, 4294901760
          %1441 = vmatmul.f32.gmra.mxu0 %v1440
          %v1442 = vpop.f32.mrf.mxu0
          %v1443 = vadd.f32 %v1413, %v1442
          %v1444 = vand.u32 %v1317, 4294901760
          %v1445 = vsub.f32 %v1317, %v1444
          %v1446 = vand.u32 %v1445, 4294901760
          %1447 = vmatmul.f32.gmra.mxu0 %v1446
          %v1448 = vpop.f32.mrf.mxu0
          %v1449 = vadd.f32 %v1418, %v1448
          %1450 = vdwg.mxu0
          %1451 = vmatpush.msra.mxu0 0.0
          %1452 = vmatpush.msra.mxu0 0.0
          %1453 = vmatpush.msra.mxu0 0.0
          %1454 = vmatpush.msra.mxu0 0.0
          %1455 = vmatpush.msra.mxu0 0.0
          %1456 = vmatpush.msra.mxu0 0.0
          %1457 = vmatpush.msra.mxu0 0.0
          %1458 = vmatpush.msra.mxu0 0.0
          %1459 = vmatpush.msra.mxu0 0.0
          %1460 = vmatpush.msra.mxu0 0.0
          %1461 = vmatpush.msra.mxu0 0.0
          %1462 = vmatpush.msra.mxu0 0.0
          %1463 = vmatpush.msra.mxu0 0.0
          %1464 = vmatpush.msra.mxu0 0.0
          %v1465 = vand.u32 %v707, 4294901760
          %v1466 = vsub.f32 %v707, %v1465
          %v1467 = vand.u32 %v1466, 4294901760
          %1468 = vmatpush.msra.mxu0 %v1467
          %v1469 = vand.u32 %v703, 4294901760
          %v1470 = vsub.f32 %v703, %v1469
          %v1471 = vand.u32 %v1470, 4294901760
          %1472 = vmatpush.msra.mxu0 %v1471
          %v1473 = vand.u32 %v1314, 4294901760
          %1474 = vmatmul.f32.gmra.mxu0 %v1473
          %v1475 = vpop.f32.mrf.mxu0
          %v1476 = vadd.f32 %v1443, %v1475
          %v1477 = vand.u32 %v1317, 4294901760
          %1478 = vmatmul.f32.gmra.mxu0 %v1477
          %v1479 = vpop.f32.mrf.mxu0
          %v1480 = vadd.f32 %v1449, %v1479
          %1481 = vdwg.mxu0
          %1482 = vmatpush.msra.mxu0 0.0
          %1483 = vmatpush.msra.mxu0 0.0
          %1484 = vmatpush.msra.mxu0 0.0
          %1485 = vmatpush.msra.mxu0 0.0
          %1486 = vmatpush.msra.mxu0 0.0
          %1487 = vmatpush.msra.mxu0 0.0
          %1488 = vmatpush.msra.mxu0 0.0
          %1489 = vmatpush.msra.mxu0 0.0
          %1490 = vmatpush.msra.mxu0 0.0
          %1491 = vmatpush.msra.mxu0 0.0
          %1492 = vmatpush.msra.mxu0 0.0
          %1493 = vmatpush.msra.mxu0 0.0
          %1494 = vmatpush.msra.mxu0 0.0
          %1495 = vmatpush.msra.mxu0 0.0
          %v1496 = vand.u32 %v707, 4294901760
          %1497 = vmatpush.msra.mxu0 %v1496
          %v1498 = vand.u32 %v703, 4294901760
          %1499 = vmatpush.msra.mxu0 %v1498
          %v1500 = vand.u32 %v1314, 4294901760
          %1501 = vmatmul.f32.gmra.mxu0 %v1500
          %v1502 = vpop.f32.mrf.mxu0
          %v1503 = vadd.f32 %v1476, %v1502
          %v1504 = vand.u32 %v1317, 4294901760
          %1505 = vmatmul.f32.gmra.mxu0 %v1504
          %v1506 = vpop.f32.mrf.mxu0
          %v1507 = vadd.f32 %v1480, %v1506
          %1508 = vdwg.mxu0
          %s1509 = scalar_lea.vmem [#allocation2], 48
          %1510 = vst.msk [vmem:[%s1509] sm:$0xff] %vm308, %v1503
          %1511 = vst.msk [vmem:[%s1509 + $0x8] sm:$0xff] %vm308, %v1507
        $region48: #{fwd.3} parent=31 // pred_fallthru
          _
        %v1512 = vld [vmem:[#allocation2] sm:$0xff]
        %v1513 = vld [vmem:[#allocation2 + $0x8] sm:$0xff]
        %v1514 = vld [vmem:[#allocation2 + $0x10] sm:$0xff]
        %v1515 = vld [vmem:[#allocation2 + $0x18] sm:$0xff]
        %v1516 = vld [vmem:[#allocation2 + $0x20] sm:$0xff]
        %v1517 = vld [vmem:[#allocation2 + $0x28] sm:$0xff]
        %v1518 = vld [vmem:[#allocation2 + $0x30] sm:$0xff]
        %v1519 = vld [vmem:[#allocation2 + $0x38] sm:$0xff]
        %vm1520 = vcmask 130048
        %1521 = vst.msk [vmem:[%s264] sm:$0xff] %vm1520, %v1512
        %1522 = vst.msk [vmem:[%s264 + $0x8] sm:$0xff] %vm1520, %v1513
        %1523 = vst.msk [vmem:[%s264 + $0x10] sm:$0xff] %vm1520, %v1514
        %1524 = vst.msk [vmem:[%s264 + $0x18] sm:$0xff] %vm1520, %v1515
        %1525 = vst.msk [vmem:[%s264 + $0x20] sm:$0xff] %vm1520, %v1516
        %1526 = vst.msk [vmem:[%s264 + $0x28] sm:$0xff] %vm1520, %v1517
        %1527 = vst.msk [vmem:[%s264 + $0x30] sm:$0xff] %vm1520, %v1518
        %1528 = vst.msk [vmem:[%s264 + $0x38] sm:$0xff] %vm1520, %v1519
        %s1529 = sand.u32 %s123, 1
        %s1530 = scalar_lea.sflag [#allocation5], %s1529
        %s1531 = sand.u32 %s123, 1
        %s1532 = smul.addr %s1531, 64
        %s1533 = scalar_lea.vmem [#allocation8], %s1532
        // Predicated region
        $region49: #{fwd.3} parent=31 // pred_check
          %p1534 = pneg %p133
        $region50: #{fwd.3} parent=31 // pred_check_branch
          %1536 = sbr.rel (%p1534) target = $region52
        $region51: #{fwd.3} parent=31 // pred_region
          #allocation10 [shape = 'u32[6]{0}', space=smem, size = 0x18, scoped, tag = 'DMA stride descriptor']
          %s1537 = smul.u32 4, %s27
          %1539 = vsyncadd %s1530, 0
          %s1540 = smul.addr %s28, 2
          %s1541 = smul.addr %s1537, 12
          %s1542 = sadd.s32 %s1540, %s1541
          %s1543 = smul.addr %s1542, 8
          %s1544 = scalar_lea.hbm %s3, %s1543
          %s1546 = sshll.u32 1, 14
          %s1547 = sxor.u32 4294967295, %s1546
          %s1550 = sshll.u32 7, 18
          %s1551 = sxor.u32 4294967295, %s1550
          %s1552 = sand.u32 0, %s1551
          %s1554 = sor.u32 %s1552, 0
          %s1555 = sshll.u32 %s1533, 4
          %s1556 = int_to_ptr.vmem [resolvable:$true] %s1555
          %s1557 = sshll.u32 %s1544, 4
          %s1558 = int_to_ptr.hbm [resolvable:$true] %s1557
          %1564 = sst [smem:[#allocation10]] 256
          %s1565 = scalar_lea.smem [#allocation10], 1
          %1566 = sst [smem:[%s1565]] 1536
          %s1567 = scalar_lea.smem [#allocation10], 2
          %1568 = sst [smem:[%s1567]] 2
          %s1569 = scalar_lea.smem [#allocation10], 3
          %1570 = sst [smem:[%s1569]] 128
          %s1571 = scalar_lea.smem [#allocation10], 4
          %1572 = sst [smem:[%s1571]] 128
          %s1573 = scalar_lea.smem [#allocation10], 5
          %1574 = sst [smem:[%s1573]] 8
          %1576 = dma.general %s1556, 1024, %s1558, %s1530, [#allocation9], [#allocation10], %s1554, 0
        $region52: #{fwd.3} parent=31 // pred_fallthru
          _
      $region32: #{fwd.3} parent=5 // pred_fallthru
        _
      %p1577 = scmp.le.s32.totalorder 2, %s18
      // Predicated region
      $region53: #{fwd.3} parent=5 // pred_check
        %p1578 = pneg %p1577
      $region54: #{fwd.3} parent=5 // pred_check_branch
        %1580 = sbr.rel (%p1578) target = $region56
      $region55: #{fwd.3} parent=5 // pred_region
        %s1581 = ssub.s32 %s18, 2
        // Predicated region
        $region57: #{fwd.3} parent=55 // pred_check
          %p1582 = pneg %p139
        $region58: #{fwd.3} parent=55 // pred_check_branch
          %1584 = sbr.rel (%p1582) target = $region60
        $region59: #{fwd.3} parent=55 // pred_region
          %s1585 = sand.u32 %s124, 1
          %s1586 = scalar_lea.sflag [#allocation5], %s1585
          %s1587 = sand.u32 %s124, 1
          %s1588 = smul.addr %s1587, 64
          %s1589 = scalar_lea.vmem [#allocation8], %s1588
          %1591 = dma.done %s1586, 1024
        $region60: #{fwd.3} parent=55 // pred_fallthru
          _
      $region56: #{fwd.3} parent=5 // pred_fallthru
        _
    $region6: #{fwd.3} parent=1 // loop_footer
      %s22 = sadd.s32 1, %s18
    $region7: #{fwd.3} parent=1 // loop_footer_branch
      %17 = sbr.rel target = $region3
    $region8: #{fwd.3} parent=1 // loop_exit
      _
    %1592 = vsyncpa [#allocation4], 1
    %s1593 = scalar_lea.sflag [#allocation4], 1
    %1594 = vsyncpa %s1593, 1
    %1595 = vsyncpa [#allocation7], 1
    %s1596 = scalar_lea.sflag [#allocation7], 1
    %1597 = vsyncpa %s1596, 1
    %1598 = vsyncpa [#allocation5], 1
    %s1599 = scalar_lea.sflag [#allocation5], 1
    %1600 = vsyncpa %s1599, 1

// kernel: fwd.2
$region0: #{fwd.2}
  #allocation0 [shape = 'u32[]', space=smem, size = 0x4, offset = 0x4, fixed_abs, tag = 'smem constant byte address 0x4 - core index']
  #allocation1 [shape = 'u32[72,128]{1,0:T(1,128)}', space=vmem, size = 0x9000, scoped, tag = 'internal scratch']
  #allocation2 [shape = 'f32[4,32,32]{2,1,0:T(8,128)}', space=vmem, size = 0x10000, scoped, tag = 'scratch operand']
  #allocation13 [shape = 's32[]', space=sflag, size = 0x4, offset = 0, fixed_abs, tag = 'sflag constant byte address 0x0 - dummy sync flag']
  %s0 = inlined_call_operand.hbm [shape: f32[8,32,32], index: 0, kind: input, shape index: {}]
  %s1 = inlined_call_operand.hbm [shape: f32[6,32,32], index: 1, kind: input, shape index: {}]
  %s2 = inlined_call_operand.hbm [shape: f32[6,32,32], index: 2, kind: input, shape index: {}]
  %s3 = inlined_call_operand.hbm [shape: f32[16,32], index: 3, kind: input, shape index: {}]
  %s4 = inlined_call_operand.hbm [shape: f32[32,16], index: 4, kind: input, shape index: {}]
  %s5 = inlined_call_operand.hbm [shape: f32[8,6,32,32], index: 5, kind: output, shape index: {0}]
  %s6 = inlined_call_operand.vmem [shape: f32[8,16,16], index: 6, kind: output, shape index: {1}]
  %7 = xla_tuple %s5, %s6
  %s8 = sld [smem:[#allocation0]]
  $region89: #{fwd.2} parent=0
    _
  %s10 = ssub.s32 1, %s8
  %s11 = scalar_select 0, %s10, %s8
  $region1: #{fwd.2} parent=0
    #allocation3 [shape = 'u8[131072]{0}', space=vmem, size = 0x20000, scoped, tag = 'input window, operand 0']
    #allocation4 [shape = 's32[2]{0}', space=sflag, size = 0x8, scoped, tag = 'scoped memory for fwd.2']
    #allocation5 [shape = 's32[2]{0}', space=sflag, size = 0x8, scoped, tag = 'scoped memory for fwd.2']
    #allocation6 [shape = 'u8[32768]{0}', space=vmem, size = 0x8000, scoped, tag = 'input window, operand 1']
    #allocation7 [shape = 's32[2]{0}', space=sflag, size = 0x8, scoped, tag = 'scoped memory for fwd.2']
    #allocation8 [shape = 'u8[32768]{0}', space=vmem, size = 0x8000, scoped, tag = 'input window, operand 2']
    #allocation9 [shape = 'u8[8192]{0}', space=vmem, size = 0x2000, scoped, tag = 'input window, operand 3, single buffered']
    #allocation10 [shape = 's32[1]{0}', space=sflag, size = 0x4, scoped, tag = 'scoped memory for fwd.2']
    #allocation11 [shape = 'u8[16384]{0}', space=vmem, size = 0x4000, scoped, tag = 'input window, operand 4, single buffered']
    #allocation12 [shape = 'u8[131072]{0}', space=vmem, size = 0x20000, scoped, tag = 'output window, operand 0']
    %12 = vsyncpa [#allocation4], 0
    %s13 = scalar_lea.sflag [#allocation4], 1
    %14 = vsyncpa %s13, 0
    %15 = vsyncpa [#allocation7], 0
    %s16 = scalar_lea.sflag [#allocation7], 1
    %17 = vsyncpa %s16, 0
    %18 = vsyncpa [#allocation10], 0
    %19 = vsyncpa [#allocation5], 0
    %s20 = scalar_lea.sflag [#allocation5], 1
    %21 = vsyncpa %s20, 0
    loop: start=0, step=1, limit=14
    $region2: #{fwd.2} parent=1 // loop_pre_header
      _
    $region3: #{fwd.2} parent=1 // loop_header
      %s23 = sphi 0, %s27
      %p24 = scmp.ge.s32.totalorder %s23, 14
      %s30 = sphi 0, %s42
      %s31 = sphi 0, %s38
      %s32 = sphi 0, %s30
      %s33 = sphi 0, %s31
      %s34 = sphi 0, %s32
      %s35 = sphi 0, %s33
      %s45 = sphi 0, %s47
      %s48 = sphi 0, %s45
      %s49 = sphi 0, %s48
      %s65 = sphi 0, %s49
      %s71 = sphi 0, %s73
      %s74 = sphi 0, %s71
      %s75 = sphi 0, %s74
      %s91 = sphi 0, %s75
      %s97 = sphi 0, %s99
      %s100 = sphi 0, %s97
      %s101 = sphi 0, %s100
      %s117 = sphi 0, %s101
      %s121 = sphi 0, %s121
      %s123 = sphi 0, %s121
      %s124 = sphi 0, %s123
      %s138 = sphi 0, %s124
      %s142 = sphi 0, %s142
      %s144 = sphi 0, %s142
      %s145 = sphi 0, %s144
      %s159 = sphi 0, %s145
      %s167 = sphi 0, %s169
      %s170 = sphi 0, %s167
      %s171 = sphi 0, %s170
      %s187 = sphi 0, %s171
      %s193 = sphi 0, %s195
      %s196 = sphi 0, %s193
      %s197 = sphi 0, %s196
      %s213 = sphi 0, %s197
    $region4: #{fwd.2} parent=1 // loop_header_branch
      %26 = sbr.rel (%p24) target = $region8
    $region5: #{fwd.2} parent=1 // loop_body
      %s28 = ssub.s32 %s23, 1
      %s29 = ssub.s32 %s23, 2
      %s36 = sadd.s32 1, %s31
      %p37 = scmp.ge.s32.totalorder %s36, 6
      %s38 = scalar_select %p37, 0, %s36
      %s39 = sadd.s32 1, %s30
      %s40 = scalar_select %p37, %s39, %s30
      %p41 = scmp.ge.s32.totalorder %s40, 2
      %s42 = scalar_select %p41, 0, %s40
      %s43 = ssub.s32 %s30, %s42
      %p44 = scmp.eq.s32.totalorder %s43, 0
      %s46 = sadd.s32 %s45, 1
      %s47 = scalar_select %p44, %s45, %s46
      %p50 = pneg %p44
      %p51 = scmp.eq.s32.totalorder %s23, 11
      %p52 = por %p50, %p51
      %p53 = scmp.ne.s32.totalorder %s45, %s48
      %p54 = scmp.eq.s32.totalorder %s23, 0
      %p55 = por %p53, %p54
      %p56 = scmp.ne.s32.totalorder %s45, %s48
      %p57 = scmp.eq.s32.totalorder %s28, 11
      %p58 = por %p56, %p57
      %p59 = scmp.ne.s32.totalorder %s48, %s49
      %p60 = scmp.eq.s32.totalorder %s28, 0
      %p61 = por %p59, %p60
      %p62 = scmp.ne.s32.totalorder %s48, %s49
      %p63 = scmp.eq.s32.totalorder %s29, 11
      %p64 = por %p62, %p63
      %p66 = scmp.ne.s32.totalorder %s49, %s65
      %p67 = scmp.eq.s32.totalorder %s29, 0
      %p68 = por %p66, %p67
      %s69 = ssub.s32 %s31, %s38
      %p70 = scmp.eq.s32.totalorder %s69, 0
      %s72 = sadd.s32 %s71, 1
      %s73 = scalar_select %p70, %s71, %s72
      %p76 = pneg %p70
      %p77 = scmp.eq.s32.totalorder %s23, 11
      %p78 = por %p76, %p77
      %p79 = scmp.ne.s32.totalorder %s71, %s74
      %p80 = scmp.eq.s32.totalorder %s23, 0
      %p81 = por %p79, %p80
      %p82 = scmp.ne.s32.totalorder %s71, %s74
      %p83 = scmp.eq.s32.totalorder %s28, 11
      %p84 = por %p82, %p83
      %p85 = scmp.ne.s32.totalorder %s74, %s75
      %p86 = scmp.eq.s32.totalorder %s28, 0
      %p87 = por %p85, %p86
      %p88 = scmp.ne.s32.totalorder %s74, %s75
      %p89 = scmp.eq.s32.totalorder %s29, 11
      %p90 = por %p88, %p89
      %p92 = scmp.ne.s32.totalorder %s75, %s91
      %p93 = scmp.eq.s32.totalorder %s29, 0
      %p94 = por %p92, %p93
      %s95 = ssub.s32 %s31, %s38
      %p96 = scmp.eq.s32.totalorder %s95, 0
      %s98 = sadd.s32 %s97, 1
      %s99 = scalar_select %p96, %s97, %s98
      %p102 = pneg %p96
      %p103 = scmp.eq.s32.totalorder %s23, 11
      %p104 = por %p102, %p103
      %p105 = scmp.ne.s32.totalorder %s97, %s100
      %p106 = scmp.eq.s32.totalorder %s23, 0
      %p107 = por %p105, %p106
      %p108 = scmp.ne.s32.totalorder %s97, %s100
      %p109 = scmp.eq.s32.totalorder %s28, 11
      %p110 = por %p108, %p109
      %p111 = scmp.ne.s32.totalorder %s100, %s101
      %p112 = scmp.eq.s32.totalorder %s28, 0
      %p113 = por %p111, %p112
      %p114 = scmp.ne.s32.totalorder %s100, %s101
      %p115 = scmp.eq.s32.totalorder %s29, 11
      %p116 = por %p114, %p115
      %p118 = scmp.ne.s32.totalorder %s101, %s117
      %p119 = scmp.eq.s32.totalorder %s29, 0
      %p120 = por %p118, %p119
      %s122 = sadd.s32 %s121, 1
      %p125 = scmp.eq.s32.totalorder %s23, 11
      %p126 = scmp.ne.s32.totalorder %s121, %s123
      %p127 = scmp.eq.s32.totalorder %s23, 0
      %p128 = por %p126, %p127
      %p129 = scmp.ne.s32.totalorder %s121, %s123
      %p130 = scmp.eq.s32.totalorder %s28, 11
      %p131 = por %p129, %p130
      %p132 = scmp.ne.s32.totalorder %s123, %s124
      %p133 = scmp.eq.s32.totalorder %s28, 0
      %p134 = por %p132, %p133
      %p135 = scmp.ne.s32.totalorder %s123, %s124
      %p136 = scmp.eq.s32.totalorder %s29, 11
      %p137 = por %p135, %p136
      %p139 = scmp.ne.s32.totalorder %s124, %s138
      %p140 = scmp.eq.s32.totalorder %s29, 0
      %p141 = por %p139, %p140
      %s143 = sadd.s32 %s142, 1
      %p146 = scmp.eq.s32.totalorder %s23, 11
      %p147 = scmp.ne.s32.totalorder %s142, %s144
      %p148 = scmp.eq.s32.totalorder %s23, 0
      %p149 = por %p147, %p148
      %p150 = scmp.ne.s32.totalorder %s142, %s144
      %p151 = scmp.eq.s32.totalorder %s28, 11
      %p152 = por %p150, %p151
      %p153 = scmp.ne.s32.totalorder %s144, %s145
      %p154 = scmp.eq.s32.totalorder %s28, 0
      %p155 = por %p153, %p154
      %p156 = scmp.ne.s32.totalorder %s144, %s145
      %p157 = scmp.eq.s32.totalorder %s29, 11
      %p158 = por %p156, %p157
      %p160 = scmp.ne.s32.totalorder %s145, %s159
      %p161 = scmp.eq.s32.totalorder %s29, 0
      %p162 = por %p160, %p161
      %s163 = ssub.s32 %s30, %s42
      %s164 = ssub.s32 %s31, %s38
      %s165 = sor.u32 %s163, %s164
      %p166 = scmp.eq.s32.totalorder %s165, 0
      %s168 = sadd.s32 %s167, 1
      %s169 = scalar_select %p166, %s167, %s168
      %p172 = pneg %p166
      %p173 = scmp.eq.s32.totalorder %s23, 11
      %p174 = por %p172, %p173
      %p175 = scmp.ne.s32.totalorder %s167, %s170
      %p176 = scmp.eq.s32.totalorder %s23, 0
      %p177 = por %p175, %p176
      %p178 = scmp.ne.s32.totalorder %s167, %s170
      %p179 = scmp.eq.s32.totalorder %s28, 11
      %p180 = por %p178, %p179
      %p181 = scmp.ne.s32.totalorder %s170, %s171
      %p182 = scmp.eq.s32.totalorder %s28, 0
      %p183 = por %p181, %p182
      %p184 = scmp.ne.s32.totalorder %s170, %s171
      %p185 = scmp.eq.s32.totalorder %s29, 11
      %p186 = por %p184, %p185
      %p188 = scmp.ne.s32.totalorder %s171, %s187
      %p189 = scmp.eq.s32.totalorder %s29, 0
      %p190 = por %p188, %p189
      %s191 = ssub.s32 %s30, %s42
      %p192 = scmp.eq.s32.totalorder %s191, 0
      %s194 = sadd.s32 %s193, 1
      %s195 = scalar_select %p192, %s193, %s194
      %p198 = pneg %p192
      %p199 = scmp.eq.s32.totalorder %s23, 11
      %p200 = por %p198, %p199
      %p201 = scmp.ne.s32.totalorder %s193, %s196
      %p202 = scmp.eq.s32.totalorder %s23, 0
      %p203 = por %p201, %p202
      %p204 = scmp.ne.s32.totalorder %s193, %s196
      %p205 = scmp.eq.s32.totalorder %s28, 11
      %p206 = por %p204, %p205
      %p207 = scmp.ne.s32.totalorder %s196, %s197
      %p208 = scmp.eq.s32.totalorder %s28, 0
      %p209 = por %p207, %p208
      %p210 = scmp.ne.s32.totalorder %s196, %s197
      %p211 = scmp.eq.s32.totalorder %s29, 11
      %p212 = por %p210, %p211
      %p214 = scmp.ne.s32.totalorder %s197, %s213
      %p215 = scmp.eq.s32.totalorder %s29, 0
      %p216 = por %p214, %p215
      %p217 = scmp.le.s32.totalorder 1, %s23
      %p218 = scmp.lt.s32.totalorder %s23, 13
      %p219 = pnand %p217, %p218
      %p220 = pneg %p219
      // Predicated region
      $region9: #{fwd.2} parent=5 // pred_check
        _
      $region10: #{fwd.2} parent=5 // pred_check_branch
        %222 = sbr.rel (%p219) target = $region12
      $region11: #{fwd.2} parent=5 // pred_region
        %s223 = ssub.s32 %s23, 1
        // Predicated region
        $region13: #{fwd.2} parent=11 // pred_check
          %p224 = pneg %p134
        $region14: #{fwd.2} parent=11 // pred_check_branch
          %226 = sbr.rel (%p224) target = $region16
        $region15: #{fwd.2} parent=11 // pred_region
          %228 = vsyncadd [#allocation10], 0
          %s229 = sshll.u32 %s3, 4
          %s230 = int_to_ptr.hbm [resolvable:$true] %s229
          %s231 = sshll.u32 [#allocation9], 4
          %s232 = int_to_ptr.vmem [resolvable:$true] %s231
          %237 = dma.hbm_to_vmem [thread:$0]  %s230, 256, %s232, [#allocation10], 128, 128, 8
        $region16: #{fwd.2} parent=11 // pred_fallthru
          _
        // Predicated region
        $region17: #{fwd.2} parent=11 // pred_check
          %p238 = pneg %p155
        $region18: #{fwd.2} parent=11 // pred_check_branch
          %240 = sbr.rel (%p238) target = $region20
        $region19: #{fwd.2} parent=11 // pred_region
          %242 = vsyncadd [#allocation10], 0
          %s243 = sshll.u32 %s4, 4
          %s244 = int_to_ptr.hbm [resolvable:$true] %s243
          %s245 = sshll.u32 [#allocation11], 4
          %s246 = int_to_ptr.vmem [resolvable:$true] %s245
          %251 = dma.hbm_to_vmem [thread:$0]  %s244, 512, %s246, [#allocation10], 128, 128, 8
        $region20: #{fwd.2} parent=11 // pred_fallthru
          _
      $region12: #{fwd.2} parent=5 // pred_fallthru
        _
      %p252 = scmp.lt.s32.totalorder %s23, 12
      // Predicated region
      $region21: #{fwd.2} parent=5 // pred_check
        %p253 = pneg %p252
      $region22: #{fwd.2} parent=5 // pred_check_branch
        %255 = sbr.rel (%p253) target = $region24
      $region23: #{fwd.2} parent=5 // pred_region
        // Predicated region
        $region25: #{fwd.2} parent=23 // pred_check
          %p256 = pneg %p55
        $region26: #{fwd.2} parent=23 // pred_check_branch
          %258 = sbr.rel (%p256) target = $region28
        $region27: #{fwd.2} parent=23 // pred_region
          %s259 = sand.u32 %s45, 1
          %s260 = scalar_lea.sflag [#allocation4], %s259
          %s261 = sand.u32 %s45, 1
          %s262 = smul.addr %s261, 128
          %s263 = scalar_lea.vmem [#allocation3], %s262
          %s264 = smul.u32 4, %s30
          %266 = vsyncadd %s260, 0
          %s267 = smul.addr %s264, 4
          %s268 = smul.addr %s267, 8
          %s269 = scalar_lea.hbm %s0, %s268
          %s270 = sshll.u32 %s269, 4
          %s271 = int_to_ptr.hbm [resolvable:$true] %s270
          %s272 = sshll.u32 %s263, 4
          %s273 = int_to_ptr.vmem [resolvable:$true] %s272
          %278 = dma.hbm_to_vmem [thread:$0]  %s271, 2048, %s273, %s260, 128, 128, 8
        $region28: #{fwd.2} parent=23 // pred_fallthru
          _
        // Predicated region
        $region29: #{fwd.2} parent=23 // pred_check
          %p279 = pneg %p81
        $region30: #{fwd.2} parent=23 // pred_check_branch
          %281 = sbr.rel (%p279) target = $region32
        $region31: #{fwd.2} parent=23 // pred_region
          %s282 = sand.u32 %s23, 1
          %s283 = scalar_lea.sflag [#allocation7], %s282
          %s284 = sand.u32 %s71, 1
          %s285 = smul.addr %s284, 32
          %s286 = scalar_lea.vmem [#allocation6], %s285
          %288 = vsyncadd %s283, 0
          %s289 = smul.addr %s31, 4
          %s290 = smul.addr %s289, 8
          %s291 = scalar_lea.hbm %s1, %s290
          %s292 = sshll.u32 %s291, 4
          %s293 = int_to_ptr.hbm [resolvable:$true] %s292
          %s294 = sshll.u32 %s286, 4
          %s295 = int_to_ptr.vmem [resolvable:$true] %s294
          %300 = dma.hbm_to_vmem [thread:$0]  %s293, 512, %s295, %s283, 128, 128, 8
        $region32: #{fwd.2} parent=23 // pred_fallthru
          _
        // Predicated region
        $region33: #{fwd.2} parent=23 // pred_check
          %p301 = pneg %p107
        $region34: #{fwd.2} parent=23 // pred_check_branch
          %303 = sbr.rel (%p301) target = $region36
        $region35: #{fwd.2} parent=23 // pred_region
          %s304 = sand.u32 %s23, 1
          %s305 = scalar_lea.sflag [#allocation7], %s304
          %s306 = sand.u32 %s97, 1
          %s307 = smul.addr %s306, 32
          %s308 = scalar_lea.vmem [#allocation8], %s307
          %310 = vsyncadd %s305, 0
          %s311 = smul.addr %s31, 4
          %s312 = smul.addr %s311, 8
          %s313 = scalar_lea.hbm %s2, %s312
          %s314 = sshll.u32 %s313, 4
          %s315 = int_to_ptr.hbm [resolvable:$true] %s314
          %s316 = sshll.u32 %s308, 4
          %s317 = int_to_ptr.vmem [resolvable:$true] %s316
          %322 = dma.hbm_to_vmem [thread:$0]  %s315, 512, %s317, %s305, 128, 128, 8
        $region36: #{fwd.2} parent=23 // pred_fallthru
          _
      $region24: #{fwd.2} parent=5 // pred_fallthru
        _
      %p323 = scmp.le.s32.totalorder 1, %s23
      %p324 = scmp.lt.s32.totalorder %s23, 13
      %p325 = pnand %p323, %p324
      %p326 = pneg %p325
      // Predicated region
      $region37: #{fwd.2} parent=5 // pred_check
        _
      $region38: #{fwd.2} parent=5 // pred_check_branch
        %328 = sbr.rel (%p325) target = $region40
      $region39: #{fwd.2} parent=5 // pred_region
        %s329 = ssub.s32 %s23, 1
        %s330 = sand.u32 %s48, 1
        %s331 = scalar_lea.sflag [#allocation4], %s330
        %s332 = sand.u32 %s48, 1
        %s333 = smul.addr %s332, 128
        %s334 = scalar_lea.vmem [#allocation3], %s333
        // Predicated region
        $region41: #{fwd.2} parent=39 // pred_check
          %p335 = pneg %p61
        $region42: #{fwd.2} parent=39 // pred_check_branch
          %337 = sbr.rel (%p335) target = $region44
        $region43: #{fwd.2} parent=39 // pred_region
          %339 = dma.done %s331, 2048
        $region44: #{fwd.2} parent=39 // pred_fallthru
          _
        %s340 = sand.u32 %s28, 1
        %s341 = scalar_lea.sflag [#allocation7], %s340
        %s342 = sand.u32 %s74, 1
        %s343 = smul.addr %s342, 32
        %s344 = scalar_lea.vmem [#allocation6], %s343
        // Predicated region
        $region45: #{fwd.2} parent=39 // pred_check
          %p345 = pneg %p87
        $region46: #{fwd.2} parent=39 // pred_check_branch
          %347 = sbr.rel (%p345) target = $region48
        $region47: #{fwd.2} parent=39 // pred_region
          %349 = dma.done %s341, 512
        $region48: #{fwd.2} parent=39 // pred_fallthru
          _
        %s350 = sand.u32 %s28, 1
        %s351 = scalar_lea.sflag [#allocation7], %s350
        %s352 = sand.u32 %s100, 1
        %s353 = smul.addr %s352, 32
        %s354 = scalar_lea.vmem [#allocation8], %s353
        // Predicated region
        $region49: #{fwd.2} parent=39 // pred_check
          %p355 = pneg %p113
        $region50: #{fwd.2} parent=39 // pred_check_branch
          %357 = sbr.rel (%p355) target = $region52
        $region51: #{fwd.2} parent=39 // pred_region
          %359 = dma.done %s351, 512
        $region52: #{fwd.2} parent=39 // pred_fallthru
          _
        // Predicated region
        $region53: #{fwd.2} parent=39 // pred_check
          %p360 = pneg %p134
        $region54: #{fwd.2} parent=39 // pred_check_branch
          %362 = sbr.rel (%p360) target = $region56
        $region55: #{fwd.2} parent=39 // pred_region
          %364 = dma.done [#allocation10], 256
        $region56: #{fwd.2} parent=39 // pred_fallthru
          _
        // Predicated region
        $region57: #{fwd.2} parent=39 // pred_check
          %p365 = pneg %p155
        $region58: #{fwd.2} parent=39 // pred_check_branch
          %367 = sbr.rel (%p365) target = $region60
        $region59: #{fwd.2} parent=39 // pred_region
          %369 = dma.done [#allocation10], 512
        $region60: #{fwd.2} parent=39 // pred_fallthru
          _
        %s370 = sand.u32 %s48, 1
        %s371 = scalar_lea.sflag [#allocation4], %s370
        %s372 = sand.u32 %s48, 1
        %s373 = smul.addr %s372, 128
        %s374 = scalar_lea.vmem [#allocation3], %s373
        %p375 = pneg %p61
        %p376 = pneg %p58
        %s377 = sand.u32 %s28, 1
        %s378 = scalar_lea.sflag [#allocation7], %s377
        %s379 = sand.u32 %s74, 1
        %s380 = smul.addr %s379, 32
        %s381 = scalar_lea.vmem [#allocation6], %s380
        %p382 = pneg %p87
        %p383 = pneg %p84
        %s384 = sand.u32 %s28, 1
        %s385 = scalar_lea.sflag [#allocation7], %s384
        %s386 = sand.u32 %s100, 1
        %s387 = smul.addr %s386, 32
        %s388 = scalar_lea.vmem [#allocation8], %s387
        %p389 = pneg %p113
        %p390 = pneg %p110
        %p391 = pneg %p134
        %p392 = pneg %p131
        %p393 = pneg %p155
        %p394 = pneg %p152
        %p395 = pneg %p183
        %p396 = pneg %p180
        %s397 = sand.u32 %s170, 1
        %s398 = scalar_lea.sflag [#allocation5], %s397
        %s399 = sand.u32 %s170, 1
        %s400 = smul.addr %s399, 128
        %s401 = scalar_lea.vmem [#allocation12], %s400
        %p402 = pneg %p209
        %p403 = pneg %p206
        %s404 = smul.u32 4, %s32
        %p405 = scmp.lt.s32.totalorder %s404, 7
        %s406 = scalar_select %p405, %s404, 7
        %s407 = smul.addr %s406, 2
        %s408 = smul.addr %s407, 8
        %s409 = scalar_lea.vmem %s6, %s408
        %s410 = smul.u32 4, %s32
        %s411 = smul.u32 4, %s32
        %s412 = smul.u32 4, %s32
        %p413 = scmp.lt.s32.totalorder %s412, 7
        %s414 = scalar_select %p413, %s412, 7
        %s415 = smul.addr %s414, 2
        %s416 = smul.addr %s415, 8
        %s417 = scalar_lea.vmem %s6, %s416
        %s418 = smul.u32 4, %s32
        %p419 = scmp.eq.s32.totalorder %s33, 0
        // Predicated region
        $region61: #{fwd.2} parent=39 // pred_check
          %p420 = pneg %p419
        $region62: #{fwd.2} parent=39 // pred_check_branch
          %422 = sbr.rel (%p420) target = $region64
        $region63: #{fwd.2} parent=39 // pred_region
          %v423 = vld [vmem:[%s334] sm:$0xff]
          %v424 = vld [vmem:[%s334 + $0x8] sm:$0xff]
          %v425 = vld [vmem:[%s334 + $0x10] sm:$0xff]
          %v426 = vld [vmem:[%s334 + $0x18] sm:$0xff]
          %v427 = vld [vmem:[%s334 + $0x20] sm:$0xff]
          %v428 = vld [vmem:[%s334 + $0x28] sm:$0xff]
          %v429 = vld [vmem:[%s334 + $0x30] sm:$0xff]
          %v430 = vld [vmem:[%s334 + $0x38] sm:$0xff]
          %v431 = vld [vmem:[%s334 + $0x40] sm:$0xff]
          %v432 = vld [vmem:[%s334 + $0x48] sm:$0xff]
          %v433 = vld [vmem:[%s334 + $0x50] sm:$0xff]
          %v434 = vld [vmem:[%s334 + $0x58] sm:$0xff]
          %v435 = vld [vmem:[%s334 + $0x60] sm:$0xff]
          %v436 = vld [vmem:[%s334 + $0x68] sm:$0xff]
          %v437 = vld [vmem:[%s334 + $0x70] sm:$0xff]
          %v438 = vld [vmem:[%s334 + $0x78] sm:$0xff]
          %vm439 = vcmask 261120
          %440 = vst.msk [vmem:[#allocation2] sm:$0xff] %vm439, %v423
          %441 = vst.msk [vmem:[#allocation2 + $0x8] sm:$0xff] %vm439, %v424
          %442 = vst.msk [vmem:[#allocation2 + $0x10] sm:$0xff] %vm439, %v425
          %443 = vst.msk [vmem:[#allocation2 + $0x18] sm:$0xff] %vm439, %v426
          %444 = vst.msk [vmem:[#allocation2 + $0x20] sm:$0xff] %vm439, %v427
          %445 = vst.msk [vmem:[#allocation2 + $0x28] sm:$0xff] %vm439, %v428
          %446 = vst.msk [vmem:[#allocation2 + $0x30] sm:$0xff] %vm439, %v429
          %447 = vst.msk [vmem:[#allocation2 + $0x38] sm:$0xff] %vm439, %v430
          %448 = vst.msk [vmem:[#allocation2 + $0x40] sm:$0xff] %vm439, %v431
          %449 = vst.msk [vmem:[#allocation2 + $0x48] sm:$0xff] %vm439, %v432
          %450 = vst.msk [vmem:[#allocation2 + $0x50] sm:$0xff] %vm439, %v433
          %451 = vst.msk [vmem:[#allocation2 + $0x58] sm:$0xff] %vm439, %v434
          %452 = vst.msk [vmem:[#allocation2 + $0x60] sm:$0xff] %vm439, %v435
          %453 = vst.msk [vmem:[#allocation2 + $0x68] sm:$0xff] %vm439, %v436
          %454 = vst.msk [vmem:[#allocation2 + $0x70] sm:$0xff] %vm439, %v437
          %455 = vst.msk [vmem:[#allocation2 + $0x78] sm:$0xff] %vm439, %v438
        $region64: #{fwd.2} parent=39 // pred_fallthru
          _
        %v456 = vld [vmem:[#allocation2] sm:$0xff]
        %v457 = vld [vmem:[#allocation2 + $0x8] sm:$0xff]
        %v458 = vld [vmem:[#allocation2 + $0x10] sm:$0xff]
        %v459 = vld [vmem:[#allocation2 + $0x18] sm:$0xff]
        %v460 = vld [vmem:[#allocation2 + $0x20] sm:$0xff]
        %v461 = vld [vmem:[#allocation2 + $0x28] sm:$0xff]
        %v462 = vld [vmem:[#allocation2 + $0x30] sm:$0xff]
        %v463 = vld [vmem:[#allocation2 + $0x38] sm:$0xff]
        %v464 = vld [vmem:[#allocation2 + $0x40] sm:$0xff]
        %v465 = vld [vmem:[#allocation2 + $0x48] sm:$0xff]
        %v466 = vld [vmem:[#allocation2 + $0x50] sm:$0xff]
        %v467 = vld [vmem:[#allocation2 + $0x58] sm:$0xff]
        %v468 = vld [vmem:[#allocation2 + $0x60] sm:$0xff]
        %v469 = vld [vmem:[#allocation2 + $0x68] sm:$0xff]
        %v470 = vld [vmem:[#allocation2 + $0x70] sm:$0xff]
        %v471 = vld [vmem:[#allocation2 + $0x78] sm:$0xff]
        %v472 = vld [vmem:[%s354] sm:$0xff]
        %v473 = vld [vmem:[%s354 + $0x8] sm:$0xff]
        %v474 = vld [vmem:[%s354 + $0x10] sm:$0xff]
        %v475 = vld [vmem:[%s354 + $0x18] sm:$0xff]
        %vm476 = vcmask 261120
        %v478 = vsel %vm476, %v456, 0
        %v481 = vsel %vm476, %v457, 0
        %v484 = vsel %vm476, %v458, 0
        %v487 = vsel %vm476, %v459, 0
        %v490 = vsel %vm476, %v460, 0
        %v493 = vsel %vm476, %v461, 0
        %v496 = vsel %vm476, %v462, 0
        %v499 = vsel %vm476, %v463, 0
        %v502 = vsel %vm476, %v464, 0
        %v505 = vsel %vm476, %v465, 0
        %v508 = vsel %vm476, %v466, 0
        %v511 = vsel %vm476, %v467, 0
        %v514 = vsel %vm476, %v468, 0
        %v517 = vsel %vm476, %v469, 0
        %v520 = vsel %vm476, %v470, 0
        %v523 = vsel %vm476, %v471, 0
        %525 = vmatpush.msra.mxu0 0.0
        %526 = vmatpush.msra.mxu0 0.0
        %527 = vmatpush.msra.mxu0 0.0
        %528 = vmatpush.msra.mxu0 0.0
        %529 = vmatpush.msra.mxu0 0.0
        %530 = vmatpush.msra.mxu0 0.0
        %531 = vmatpush.msra.mxu0 0.0
        %532 = vmatpush.msra.mxu0 0.0
        %533 = vmatpush.msra.mxu0 0.0
        %534 = vmatpush.msra.mxu0 0.0
        %535 = vmatpush.msra.mxu0 0.0
        %536 = vmatpush.msra.mxu0 0.0
        %v537 = vand.u32 %v475, 4294901760
        %538 = vmatpush.msra.mxu0 %v537
        %v539 = vand.u32 %v474, 4294901760
        %540 = vmatpush.msra.mxu0 %v539
        %v541 = vand.u32 %v473, 4294901760
        %542 = vmatpush.msra.mxu0 %v541
        %v543 = vand.u32 %v472, 4294901760
        %544 = vmatpush.msra.mxu0 %v543
        %v545 = vand.u32 %v478, 4294901760
        %v546 = vsub.f32 %v478, %v545
        %v547 = vand.u32 %v546, 4294901760
        %v548 = vsub.f32 %v546, %v547
        %v549 = vand.u32 %v548, 4294901760
        %550 = vmatmul.f32.gmra.mxu0 %v549
        %v551 = vpop.f32.mrf.mxu0
        %v552 = vadd.f32 0.0, %v551
        %v553 = vand.u32 %v481, 4294901760
        %v554 = vsub.f32 %v481, %v553
        %v555 = vand.u32 %v554, 4294901760
        %v556 = vsub.f32 %v554, %v555
        %v557 = vand.u32 %v556, 4294901760
        %558 = vmatmul.f32.gmra.mxu0 %v557
        %v559 = vpop.f32.mrf.mxu0
        %v560 = vadd.f32 0.0, %v559
        %v561 = vand.u32 %v484, 4294901760
        %v562 = vsub.f32 %v484, %v561
        %v563 = vand.u32 %v562, 4294901760
        %v564 = vsub.f32 %v562, %v563
        %v565 = vand.u32 %v564, 4294901760
        %566 = vmatmul.f32.gmra.mxu0 %v565
        %v567 = vpop.f32.mrf.mxu0
        %v568 = vadd.f32 0.0, %v567
        %v569 = vand.u32 %v487, 4294901760
        %v570 = vsub.f32 %v487, %v569
        %v571 = vand.u32 %v570, 4294901760
        %v572 = vsub.f32 %v570, %v571
        %v573 = vand.u32 %v572, 4294901760
        %574 = vmatmul.f32.gmra.mxu0 %v573
        %v575 = vpop.f32.mrf.mxu0
        %v576 = vadd.f32 0.0, %v575
        %v577 = vand.u32 %v490, 4294901760
        %v578 = vsub.f32 %v490, %v577
        %v579 = vand.u32 %v578, 4294901760
        %v580 = vsub.f32 %v578, %v579
        %v581 = vand.u32 %v580, 4294901760
        %582 = vmatmul.f32.gmra.mxu0 %v581
        %v583 = vpop.f32.mrf.mxu0
        %v584 = vadd.f32 0.0, %v583
        %v585 = vand.u32 %v493, 4294901760
        %v586 = vsub.f32 %v493, %v585
        %v587 = vand.u32 %v586, 4294901760
        %v588 = vsub.f32 %v586, %v587
        %v589 = vand.u32 %v588, 4294901760
        %590 = vmatmul.f32.gmra.mxu0 %v589
        %v591 = vpop.f32.mrf.mxu0
        %v592 = vadd.f32 0.0, %v591
        %v593 = vand.u32 %v496, 4294901760
        %v594 = vsub.f32 %v496, %v593
        %v595 = vand.u32 %v594, 4294901760
        %v596 = vsub.f32 %v594, %v595
        %v597 = vand.u32 %v596, 4294901760
        %598 = vmatmul.f32.gmra.mxu0 %v597
        %v599 = vpop.f32.mrf.mxu0
        %v600 = vadd.f32 0.0, %v599
        %v601 = vand.u32 %v499, 4294901760
        %v602 = vsub.f32 %v499, %v601
        %v603 = vand.u32 %v602, 4294901760
        %v604 = vsub.f32 %v602, %v603
        %v605 = vand.u32 %v604, 4294901760
        %606 = vmatmul.f32.gmra.mxu0 %v605
        %v607 = vpop.f32.mrf.mxu0
        %v608 = vadd.f32 0.0, %v607
        %v609 = vand.u32 %v502, 4294901760
        %v610 = vsub.f32 %v502, %v609
        %v611 = vand.u32 %v610, 4294901760
        %v612 = vsub.f32 %v610, %v611
        %v613 = vand.u32 %v612, 4294901760
        %614 = vmatmul.f32.gmra.mxu0 %v613
        %v615 = vpop.f32.mrf.mxu0
        %v616 = vadd.f32 0.0, %v615
        %v617 = vand.u32 %v505, 4294901760
        %v618 = vsub.f32 %v505, %v617
        %v619 = vand.u32 %v618, 4294901760
        %v620 = vsub.f32 %v618, %v619
        %v621 = vand.u32 %v620, 4294901760
        %622 = vmatmul.f32.gmra.mxu0 %v621
        %v623 = vpop.f32.mrf.mxu0
        %v624 = vadd.f32 0.0, %v623
        %v625 = vand.u32 %v508, 4294901760
        %v626 = vsub.f32 %v508, %v625
        %v627 = vand.u32 %v626, 4294901760
        %v628 = vsub.f32 %v626, %v627
        %v629 = vand.u32 %v628, 4294901760
        %630 = vmatmul.f32.gmra.mxu0 %v629
        %v631 = vpop.f32.mrf.mxu0
        %v632 = vadd.f32 0.0, %v631
        %v633 = vand.u32 %v511, 4294901760
        %v634 = vsub.f32 %v511, %v633
        %v635 = vand.u32 %v634, 4294901760
        %v636 = vsub.f32 %v634, %v635
        %v637 = vand.u32 %v636, 4294901760
        %638 = vmatmul.f32.gmra.mxu0 %v637
        %v639 = vpop.f32.mrf.mxu0
        %v640 = vadd.f32 0.0, %v639
        %v641 = vand.u32 %v514, 4294901760
        %v642 = vsub.f32 %v514, %v641
        %v643 = vand.u32 %v642, 4294901760
        %v644 = vsub.f32 %v642, %v643
        %v645 = vand.u32 %v644, 4294901760
        %646 = vmatmul.f32.gmra.mxu0 %v645
        %v647 = vpop.f32.mrf.mxu0
        %v648 = vadd.f32 0.0, %v647
        %v649 = vand.u32 %v517, 4294901760
        %v650 = vsub.f32 %v517, %v649
        %v651 = vand.u32 %v650, 4294901760
        %v652 = vsub.f32 %v650, %v651
        %v653 = vand.u32 %v652, 4294901760
        %654 = vmatmul.f32.gmra.mxu0 %v653
        %v655 = vpop.f32.mrf.mxu0
        %v656 = vadd.f32 0.0, %v655
        %v657 = vand.u32 %v520, 4294901760
        %v658 = vsub.f32 %v520, %v657
        %v659 = vand.u32 %v658, 4294901760
        %v660 = vsub.f32 %v658, %v659
        %v661 = vand.u32 %v660, 4294901760
        %662 = vmatmul.f32.gmra.mxu0 %v661
        %v663 = vpop.f32.mrf.mxu0
        %v664 = vadd.f32 0.0, %v663
        %v665 = vand.u32 %v523, 4294901760
        %v666 = vsub.f32 %v523, %v665
        %v667 = vand.u32 %v666, 4294901760
        %v668 = vsub.f32 %v666, %v667
        %v669 = vand.u32 %v668, 4294901760
        %670 = vmatmul.f32.gmra.mxu0 %v669
        %v671 = vpop.f32.mrf.mxu0
        %v672 = vadd.f32 0.0, %v671
        %673 = vdwg.mxu0
        %674 = vmatpush.msra.mxu0 0.0
        %675 = vmatpush.msra.mxu0 0.0
        %676 = vmatpush.msra.mxu0 0.0
        %677 = vmatpush.msra.mxu0 0.0
        %678 = vmatpush.msra.mxu0 0.0
        %679 = vmatpush.msra.mxu0 0.0
        %680 = vmatpush.msra.mxu0 0.0
        %681 = vmatpush.msra.mxu0 0.0
        %682 = vmatpush.msra.mxu0 0.0
        %683 = vmatpush.msra.mxu0 0.0
        %684 = vmatpush.msra.mxu0 0.0
        %685 = vmatpush.msra.mxu0 0.0
        %v686 = vand.u32 %v475, 4294901760
        %v687 = vsub.f32 %v475, %v686
        %v688 = vand.u32 %v687, 4294901760
        %v689 = vsub.f32 %v687, %v688
        %v690 = vand.u32 %v689, 4294901760
        %691 = vmatpush.msra.mxu0 %v690
        %v692 = vand.u32 %v474, 4294901760
        %v693 = vsub.f32 %v474, %v692
        %v694 = vand.u32 %v693, 4294901760
        %v695 = vsub.f32 %v693, %v694
        %v696 = vand.u32 %v695, 4294901760
        %697 = vmatpush.msra.mxu0 %v696
        %v698 = vand.u32 %v473, 4294901760
        %v699 = vsub.f32 %v473, %v698
        %v700 = vand.u32 %v699, 4294901760
        %v701 = vsub.f32 %v699, %v700
        %v702 = vand.u32 %v701, 4294901760
        %703 = vmatpush.msra.mxu0 %v702
        %v704 = vand.u32 %v472, 4294901760
        %v705 = vsub.f32 %v472, %v704
        %v706 = vand.u32 %v705, 4294901760
        %v707 = vsub.f32 %v705, %v706
        %v708 = vand.u32 %v707, 4294901760
        %709 = vmatpush.msra.mxu0 %v708
        %v710 = vand.u32 %v478, 4294901760
        %711 = vmatmul.f32.gmra.mxu0 %v710
        %v712 = vpop.f32.mrf.mxu0
        %v713 = vadd.f32 %v552, %v712
        %v714 = vand.u32 %v481, 4294901760
        %715 = vmatmul.f32.gmra.mxu0 %v714
        %v716 = vpop.f32.mrf.mxu0
        %v717 = vadd.f32 %v560, %v716
        %v718 = vand.u32 %v484, 4294901760
        %719 = vmatmul.f32.gmra.mxu0 %v718
        %v720 = vpop.f32.mrf.mxu0
        %v721 = vadd.f32 %v568, %v720
        %v722 = vand.u32 %v487, 4294901760
        %723 = vmatmul.f32.gmra.mxu0 %v722
        %v724 = vpop.f32.mrf.mxu0
        %v725 = vadd.f32 %v576, %v724
        %v726 = vand.u32 %v490, 4294901760
        %727 = vmatmul.f32.gmra.mxu0 %v726
        %v728 = vpop.f32.mrf.mxu0
        %v729 = vadd.f32 %v584, %v728
        %v730 = vand.u32 %v493, 4294901760
        %731 = vmatmul.f32.gmra.mxu0 %v730
        %v732 = vpop.f32.mrf.mxu0
        %v733 = vadd.f32 %v592, %v732
        %v734 = vand.u32 %v496, 4294901760
        %735 = vmatmul.f32.gmra.mxu0 %v734
        %v736 = vpop.f32.mrf.mxu0
        %v737 = vadd.f32 %v600, %v736
        %v738 = vand.u32 %v499, 4294901760
        %739 = vmatmul.f32.gmra.mxu0 %v738
        %v740 = vpop.f32.mrf.mxu0
        %v741 = vadd.f32 %v608, %v740
        %v742 = vand.u32 %v502, 4294901760
        %743 = vmatmul.f32.gmra.mxu0 %v742
        %v744 = vpop.f32.mrf.mxu0
        %v745 = vadd.f32 %v616, %v744
        %v746 = vand.u32 %v505, 4294901760
        %747 = vmatmul.f32.gmra.mxu0 %v746
        %v748 = vpop.f32.mrf.mxu0
        %v749 = vadd.f32 %v624, %v748
        %v750 = vand.u32 %v508, 4294901760
        %751 = vmatmul.f32.gmra.mxu0 %v750
        %v752 = vpop.f32.mrf.mxu0
        %v753 = vadd.f32 %v632, %v752
        %v754 = vand.u32 %v511, 4294901760
        %755 = vmatmul.f32.gmra.mxu0 %v754
        %v756 = vpop.f32.mrf.mxu0
        %v757 = vadd.f32 %v640, %v756
        %v758 = vand.u32 %v514, 4294901760
        %759 = vmatmul.f32.gmra.mxu0 %v758
        %v760 = vpop.f32.mrf.mxu0
        %v761 = vadd.f32 %v648, %v760
        %v762 = vand.u32 %v517, 4294901760
        %763 = vmatmul.f32.gmra.mxu0 %v762
        %v764 = vpop.f32.mrf.mxu0
        %v765 = vadd.f32 %v656, %v764
        %v766 = vand.u32 %v520, 4294901760
        %767 = vmatmul.f32.gmra.mxu0 %v766
        %v768 = vpop.f32.mrf.mxu0
        %v769 = vadd.f32 %v664, %v768
        %v770 = vand.u32 %v523, 4294901760
        %771 = vmatmul.f32.gmra.mxu0 %v770
        %v772 = vpop.f32.mrf.mxu0
        %v773 = vadd.f32 %v672, %v772
        %774 = vdwg.mxu0
        %775 = vmatpush.msra.mxu0 0.0
        %776 = vmatpush.msra.mxu0 0.0
        %777 = vmatpush.msra.mxu0 0.0
        %778 = vmatpush.msra.mxu0 0.0
        %779 = vmatpush.msra.mxu0 0.0
        %780 = vmatpush.msra.mxu0 0.0
        %781 = vmatpush.msra.mxu0 0.0
        %782 = vmatpush.msra.mxu0 0.0
        %783 = vmatpush.msra.mxu0 0.0
        %784 = vmatpush.msra.mxu0 0.0
        %785 = vmatpush.msra.mxu0 0.0
        %786 = vmatpush.msra.mxu0 0.0
        %v787 = vand.u32 %v475, 4294901760
        %v788 = vsub.f32 %v475, %v787
        %789 = vmatpush.msra.mxu0 %v788
        %v790 = vand.u32 %v474, 4294901760
        %v791 = vsub.f32 %v474, %v790
        %792 = vmatpush.msra.mxu0 %v791
        %v793 = vand.u32 %v473, 4294901760
        %v794 = vsub.f32 %v473, %v793
        %795 = vmatpush.msra.mxu0 %v794
        %v796 = vand.u32 %v472, 4294901760
        %v797 = vsub.f32 %v472, %v796
        %798 = vmatpush.msra.mxu0 %v797
        %v799 = vand.u32 %v478, 4294901760
        %v800 = vsub.f32 %v478, %v799
        %801 = vmatmul.f32.gmra.mxu0 %v800
        %v802 = vpop.f32.mrf.mxu0
        %v803 = vadd.f32 %v713, %v802
        %v804 = vand.u32 %v481, 4294901760
        %v805 = vsub.f32 %v481, %v804
        %806 = vmatmul.f32.gmra.mxu0 %v805
        %v807 = vpop.f32.mrf.mxu0
        %v808 = vadd.f32 %v717, %v807
        %v809 = vand.u32 %v484, 4294901760
        %v810 = vsub.f32 %v484, %v809
        %811 = vmatmul.f32.gmra.mxu0 %v810
        %v812 = vpop.f32.mrf.mxu0
        %v813 = vadd.f32 %v721, %v812
        %v814 = vand.u32 %v487, 4294901760
        %v815 = vsub.f32 %v487, %v814
        %816 = vmatmul.f32.gmra.mxu0 %v815
        %v817 = vpop.f32.mrf.mxu0
        %v818 = vadd.f32 %v725, %v817
        %v819 = vand.u32 %v490, 4294901760
        %v820 = vsub.f32 %v490, %v819
        %821 = vmatmul.f32.gmra.mxu0 %v820
        %v822 = vpop.f32.mrf.mxu0
        %v823 = vadd.f32 %v729, %v822
        %v824 = vand.u32 %v493, 4294901760
        %v825 = vsub.f32 %v493, %v824
        %826 = vmatmul.f32.gmra.mxu0 %v825
        %v827 = vpop.f32.mrf.mxu0
        %v828 = vadd.f32 %v733, %v827
        %v829 = vand.u32 %v496, 4294901760
        %v830 = vsub.f32 %v496, %v829
        %831 = vmatmul.f32.gmra.mxu0 %v830
        %v832 = vpop.f32.mrf.mxu0
        %v833 = vadd.f32 %v737, %v832
        %v834 = vand.u32 %v499, 4294901760
        %v835 = vsub.f32 %v499, %v834
        %836 = vmatmul.f32.gmra.mxu0 %v835
        %v837 = vpop.f32.mrf.mxu0
        %v838 = vadd.f32 %v741, %v837
        %v839 = vand.u32 %v502, 4294901760
        %v840 = vsub.f32 %v502, %v839
        %841 = vmatmul.f32.gmra.mxu0 %v840
        %v842 = vpop.f32.mrf.mxu0
        %v843 = vadd.f32 %v745, %v842
        %v844 = vand.u32 %v505, 4294901760
        %v845 = vsub.f32 %v505, %v844
        %846 = vmatmul.f32.gmra.mxu0 %v845
        %v847 = vpop.f32.mrf.mxu0
        %v848 = vadd.f32 %v749, %v847
        %v849 = vand.u32 %v508, 4294901760
        %v850 = vsub.f32 %v508, %v849
        %851 = vmatmul.f32.gmra.mxu0 %v850
        %v852 = vpop.f32.mrf.mxu0
        %v853 = vadd.f32 %v753, %v852
        %v854 = vand.u32 %v511, 4294901760
        %v855 = vsub.f32 %v511, %v854
        %856 = vmatmul.f32.gmra.mxu0 %v855
        %v857 = vpop.f32.mrf.mxu0
        %v858 = vadd.f32 %v757, %v857
        %v859 = vand.u32 %v514, 4294901760
        %v860 = vsub.f32 %v514, %v859
        %861 = vmatmul.f32.gmra.mxu0 %v860
        %v862 = vpop.f32.mrf.mxu0
        %v863 = vadd.f32 %v761, %v862
        %v864 = vand.u32 %v517, 4294901760
        %v865 = vsub.f32 %v517, %v864
        %866 = vmatmul.f32.gmra.mxu0 %v865
        %v867 = vpop.f32.mrf.mxu0
        %v868 = vadd.f32 %v765, %v867
        %v869 = vand.u32 %v520, 4294901760
        %v870 = vsub.f32 %v520, %v869
        %871 = vmatmul.f32.gmra.mxu0 %v870
        %v872 = vpop.f32.mrf.mxu0
        %v873 = vadd.f32 %v769, %v872
        %v874 = vand.u32 %v523, 4294901760
        %v875 = vsub.f32 %v523, %v874
        %876 = vmatmul.f32.gmra.mxu0 %v875
        %v877 = vpop.f32.mrf.mxu0
        %v878 = vadd.f32 %v773, %v877
        %879 = vdwg.mxu0
        %880 = vmatpush.msra.mxu0 0.0
        %881 = vmatpush.msra.mxu0 0.0
        %882 = vmatpush.msra.mxu0 0.0
        %883 = vmatpush.msra.mxu0 0.0
        %884 = vmatpush.msra.mxu0 0.0
        %885 = vmatpush.msra.mxu0 0.0
        %886 = vmatpush.msra.mxu0 0.0
        %887 = vmatpush.msra.mxu0 0.0
        %888 = vmatpush.msra.mxu0 0.0
        %889 = vmatpush.msra.mxu0 0.0
        %890 = vmatpush.msra.mxu0 0.0
        %891 = vmatpush.msra.mxu0 0.0
        %v892 = vand.u32 %v475, 4294901760
        %893 = vmatpush.msra.mxu0 %v892
        %v894 = vand.u32 %v474, 4294901760
        %895 = vmatpush.msra.mxu0 %v894
        %v896 = vand.u32 %v473, 4294901760
        %897 = vmatpush.msra.mxu0 %v896
        %v898 = vand.u32 %v472, 4294901760
        %899 = vmatpush.msra.mxu0 %v898
        %v900 = vand.u32 %v478, 4294901760
        %v901 = vsub.f32 %v478, %v900
        %v902 = vand.u32 %v901, 4294901760
        %903 = vmatmul.f32.gmra.mxu0 %v902
        %v904 = vpop.f32.mrf.mxu0
        %v905 = vadd.f32 %v803, %v904
        %v906 = vand.u32 %v481, 4294901760
        %v907 = vsub.f32 %v481, %v906
        %v908 = vand.u32 %v907, 4294901760
        %909 = vmatmul.f32.gmra.mxu0 %v908
        %v910 = vpop.f32.mrf.mxu0
        %v911 = vadd.f32 %v808, %v910
        %v912 = vand.u32 %v484, 4294901760
        %v913 = vsub.f32 %v484, %v912
        %v914 = vand.u32 %v913, 4294901760
        %915 = vmatmul.f32.gmra.mxu0 %v914
        %v916 = vpop.f32.mrf.mxu0
        %v917 = vadd.f32 %v813, %v916
        %v918 = vand.u32 %v487, 4294901760
        %v919 = vsub.f32 %v487, %v918
        %v920 = vand.u32 %v919, 4294901760
        %921 = vmatmul.f32.gmra.mxu0 %v920
        %v922 = vpop.f32.mrf.mxu0
        %v923 = vadd.f32 %v818, %v922
        %v924 = vand.u32 %v490, 4294901760
        %v925 = vsub.f32 %v490, %v924
        %v926 = vand.u32 %v925, 4294901760
        %927 = vmatmul.f32.gmra.mxu0 %v926
        %v928 = vpop.f32.mrf.mxu0
        %v929 = vadd.f32 %v823, %v928
        %v930 = vand.u32 %v493, 4294901760
        %v931 = vsub.f32 %v493, %v930
        %v932 = vand.u32 %v931, 4294901760
        %933 = vmatmul.f32.gmra.mxu0 %v932
        %v934 = vpop.f32.mrf.mxu0
        %v935 = vadd.f32 %v828, %v934
        %v936 = vand.u32 %v496, 4294901760
        %v937 = vsub.f32 %v496, %v936
        %v938 = vand.u32 %v937, 4294901760
        %939 = vmatmul.f32.gmra.mxu0 %v938
        %v940 = vpop.f32.mrf.mxu0
        %v941 = vadd.f32 %v833, %v940
        %v942 = vand.u32 %v499, 4294901760
        %v943 = vsub.f32 %v499, %v942
        %v944 = vand.u32 %v943, 4294901760
        %945 = vmatmul.f32.gmra.mxu0 %v944
        %v946 = vpop.f32.mrf.mxu0
        %v947 = vadd.f32 %v838, %v946
        %v948 = vand.u32 %v502, 4294901760
        %v949 = vsub.f32 %v502, %v948
        %v950 = vand.u32 %v949, 4294901760
        %951 = vmatmul.f32.gmra.mxu0 %v950
        %v952 = vpop.f32.mrf.mxu0
        %v953 = vadd.f32 %v843, %v952
        %v954 = vand.u32 %v505, 4294901760
        %v955 = vsub.f32 %v505, %v954
        %v956 = vand.u32 %v955, 4294901760
        %957 = vmatmul.f32.gmra.mxu0 %v956
        %v958 = vpop.f32.mrf.mxu0
        %v959 = vadd.f32 %v848, %v958
        %v960 = vand.u32 %v508, 4294901760
        %v961 = vsub.f32 %v508, %v960
        %v962 = vand.u32 %v961, 4294901760
        %963 = vmatmul.f32.gmra.mxu0 %v962
        %v964 = vpop.f32.mrf.mxu0
        %v965 = vadd.f32 %v853, %v964
        %v966 = vand.u32 %v511, 4294901760
        %v967 = vsub.f32 %v511, %v966
        %v968 = vand.u32 %v967, 4294901760
        %969 = vmatmul.f32.gmra.mxu0 %v968
        %v970 = vpop.f32.mrf.mxu0
        %v971 = vadd.f32 %v858, %v970
        %v972 = vand.u32 %v514, 4294901760
        %v973 = vsub.f32 %v514, %v972
        %v974 = vand.u32 %v973, 4294901760
        %975 = vmatmul.f32.gmra.mxu0 %v974
        %v976 = vpop.f32.mrf.mxu0
        %v977 = vadd.f32 %v863, %v976
        %v978 = vand.u32 %v517, 4294901760
        %v979 = vsub.f32 %v517, %v978
        %v980 = vand.u32 %v979, 4294901760
        %981 = vmatmul.f32.gmra.mxu0 %v980
        %v982 = vpop.f32.mrf.mxu0
        %v983 = vadd.f32 %v868, %v982
        %v984 = vand.u32 %v520, 4294901760
        %v985 = vsub.f32 %v520, %v984
        %v986 = vand.u32 %v985, 4294901760
        %987 = vmatmul.f32.gmra.mxu0 %v986
        %v988 = vpop.f32.mrf.mxu0
        %v989 = vadd.f32 %v873, %v988
        %v990 = vand.u32 %v523, 4294901760
        %v991 = vsub.f32 %v523, %v990
        %v992 = vand.u32 %v991, 4294901760
        %993 = vmatmul.f32.gmra.mxu0 %v992
        %v994 = vpop.f32.mrf.mxu0
        %v995 = vadd.f32 %v878, %v994
        %996 = vdwg.mxu0
        %997 = vmatpush.msra.mxu0 0.0
        %998 = vmatpush.msra.mxu0 0.0
        %999 = vmatpush.msra.mxu0 0.0
        %1000 = vmatpush.msra.mxu0 0.0
        %1001 = vmatpush.msra.mxu0 0.0
        %1002 = vmatpush.msra.mxu0 0.0
        %1003 = vmatpush.msra.mxu0 0.0
        %1004 = vmatpush.msra.mxu0 0.0
        %1005 = vmatpush.msra.mxu0 0.0
        %1006 = vmatpush.msra.mxu0 0.0
        %1007 = vmatpush.msra.mxu0 0.0
        %1008 = vmatpush.msra.mxu0 0.0
        %v1009 = vand.u32 %v475, 4294901760
        %v1010 = vsub.f32 %v475, %v1009
        %v1011 = vand.u32 %v1010, 4294901760
        %1012 = vmatpush.msra.mxu0 %v1011
        %v1013 = vand.u32 %v474, 4294901760
        %v1014 = vsub.f32 %v474, %v1013
        %v1015 = vand.u32 %v1014, 4294901760
        %1016 = vmatpush.msra.mxu0 %v1015
        %v1017 = vand.u32 %v473, 4294901760
        %v1018 = vsub.f32 %v473, %v1017
        %v1019 = vand.u32 %v1018, 4294901760
        %1020 = vmatpush.msra.mxu0 %v1019
        %v1021 = vand.u32 %v472, 4294901760
        %v1022 = vsub.f32 %v472, %v1021
        %v1023 = vand.u32 %v1022, 4294901760
        %1024 = vmatpush.msra.mxu0 %v1023
        %v1025 = vand.u32 %v478, 4294901760
        %1026 = vmatmul.f32.gmra.mxu0 %v1025
        %v1027 = vpop.f32.mrf.mxu0
        %v1028 = vadd.f32 %v905, %v1027
        %v1029 = vand.u32 %v481, 4294901760
        %1030 = vmatmul.f32.gmra.mxu0 %v1029
        %v1031 = vpop.f32.mrf.mxu0
        %v1032 = vadd.f32 %v911, %v1031
        %v1033 = vand.u32 %v484, 4294901760
        %1034 = vmatmul.f32.gmra.mxu0 %v1033
        %v1035 = vpop.f32.mrf.mxu0
        %v1036 = vadd.f32 %v917, %v1035
        %v1037 = vand.u32 %v487, 4294901760
        %1038 = vmatmul.f32.gmra.mxu0 %v1037
        %v1039 = vpop.f32.mrf.mxu0
        %v1040 = vadd.f32 %v923, %v1039
        %v1041 = vand.u32 %v490, 4294901760
        %1042 = vmatmul.f32.gmra.mxu0 %v1041
        %v1043 = vpop.f32.mrf.mxu0
        %v1044 = vadd.f32 %v929, %v1043
        %v1045 = vand.u32 %v493, 4294901760
        %1046 = vmatmul.f32.gmra.mxu0 %v1045
        %v1047 = vpop.f32.mrf.mxu0
        %v1048 = vadd.f32 %v935, %v1047
        %v1049 = vand.u32 %v496, 4294901760
        %1050 = vmatmul.f32.gmra.mxu0 %v1049
        %v1051 = vpop.f32.mrf.mxu0
        %v1052 = vadd.f32 %v941, %v1051
        %v1053 = vand.u32 %v499, 4294901760
        %1054 = vmatmul.f32.gmra.mxu0 %v1053
        %v1055 = vpop.f32.mrf.mxu0
        %v1056 = vadd.f32 %v947, %v1055
        %v1057 = vand.u32 %v502, 4294901760
        %1058 = vmatmul.f32.gmra.mxu0 %v1057
        %v1059 = vpop.f32.mrf.mxu0
        %v1060 = vadd.f32 %v953, %v1059
        %v1061 = vand.u32 %v505, 4294901760
        %1062 = vmatmul.f32.gmra.mxu0 %v1061
        %v1063 = vpop.f32.mrf.mxu0
        %v1064 = vadd.f32 %v959, %v1063
        %v1065 = vand.u32 %v508, 4294901760
        %1066 = vmatmul.f32.gmra.mxu0 %v1065
        %v1067 = vpop.f32.mrf.mxu0
        %v1068 = vadd.f32 %v965, %v1067
        %v1069 = vand.u32 %v511, 4294901760
        %1070 = vmatmul.f32.gmra.mxu0 %v1069
        %v1071 = vpop.f32.mrf.mxu0
        %v1072 = vadd.f32 %v971, %v1071
        %v1073 = vand.u32 %v514, 4294901760
        %1074 = vmatmul.f32.gmra.mxu0 %v1073
        %v1075 = vpop.f32.mrf.mxu0
        %v1076 = vadd.f32 %v977, %v1075
        %v1077 = vand.u32 %v517, 4294901760
        %1078 = vmatmul.f32.gmra.mxu0 %v1077
        %v1079 = vpop.f32.mrf.mxu0
        %v1080 = vadd.f32 %v983, %v1079
        %v1081 = vand.u32 %v520, 4294901760
        %1082 = vmatmul.f32.gmra.mxu0 %v1081
        %v1083 = vpop.f32.mrf.mxu0
        %v1084 = vadd.f32 %v989, %v1083
        %v1085 = vand.u32 %v523, 4294901760
        %1086 = vmatmul.f32.gmra.mxu0 %v1085
        %v1087 = vpop.f32.mrf.mxu0
        %v1088 = vadd.f32 %v995, %v1087
        %1089 = vdwg.mxu0
        %1090 = vmatpush.msra.mxu0 0.0
        %1091 = vmatpush.msra.mxu0 0.0
        %1092 = vmatpush.msra.mxu0 0.0
        %1093 = vmatpush.msra.mxu0 0.0
        %1094 = vmatpush.msra.mxu0 0.0
        %1095 = vmatpush.msra.mxu0 0.0
        %1096 = vmatpush.msra.mxu0 0.0
        %1097 = vmatpush.msra.mxu0 0.0
        %1098 = vmatpush.msra.mxu0 0.0
        %1099 = vmatpush.msra.mxu0 0.0
        %1100 = vmatpush.msra.mxu0 0.0
        %1101 = vmatpush.msra.mxu0 0.0
        %v1102 = vand.u32 %v475, 4294901760
        %1103 = vmatpush.msra.mxu0 %v1102
        %v1104 = vand.u32 %v474, 4294901760
        %1105 = vmatpush.msra.mxu0 %v1104
        %v1106 = vand.u32 %v473, 4294901760
        %1107 = vmatpush.msra.mxu0 %v1106
        %v1108 = vand.u32 %v472, 4294901760
        %1109 = vmatpush.msra.mxu0 %v1108
        %v1110 = vand.u32 %v478, 4294901760
        %1111 = vmatmul.f32.gmra.mxu0 %v1110
        %v1112 = vpop.f32.mrf.mxu0
        %v1113 = vadd.f32 %v1028, %v1112
        %v1114 = vand.u32 %v481, 4294901760
        %1115 = vmatmul.f32.gmra.mxu0 %v1114
        %v1116 = vpop.f32.mrf.mxu0
        %v1117 = vadd.f32 %v1032, %v1116
        %v1118 = vand.u32 %v484, 4294901760
        %1119 = vmatmul.f32.gmra.mxu0 %v1118
        %v1120 = vpop.f32.mrf.mxu0
        %v1121 = vadd.f32 %v1036, %v1120
        %v1122 = vand.u32 %v487, 4294901760
        %1123 = vmatmul.f32.gmra.mxu0 %v1122
        %v1124 = vpop.f32.mrf.mxu0
        %v1125 = vadd.f32 %v1040, %v1124
        %v1126 = vand.u32 %v490, 4294901760
        %1127 = vmatmul.f32.gmra.mxu0 %v1126
        %v1128 = vpop.f32.mrf.mxu0
        %v1129 = vadd.f32 %v1044, %v1128
        %v1130 = vand.u32 %v493, 4294901760
        %1131 = vmatmul.f32.gmra.mxu0 %v1130
        %v1132 = vpop.f32.mrf.mxu0
        %v1133 = vadd.f32 %v1048, %v1132
        %v1134 = vand.u32 %v496, 4294901760
        %1135 = vmatmul.f32.gmra.mxu0 %v1134
        %v1136 = vpop.f32.mrf.mxu0
        %v1137 = vadd.f32 %v1052, %v1136
        %v1138 = vand.u32 %v499, 4294901760
        %1139 = vmatmul.f32.gmra.mxu0 %v1138
        %v1140 = vpop.f32.mrf.mxu0
        %v1141 = vadd.f32 %v1056, %v1140
        %v1142 = vand.u32 %v502, 4294901760
        %1143 = vmatmul.f32.gmra.mxu0 %v1142
        %v1144 = vpop.f32.mrf.mxu0
        %v1145 = vadd.f32 %v1060, %v1144
        %v1146 = vand.u32 %v505, 4294901760
        %1147 = vmatmul.f32.gmra.mxu0 %v1146
        %v1148 = vpop.f32.mrf.mxu0
        %v1149 = vadd.f32 %v1064, %v1148
        %v1150 = vand.u32 %v508, 4294901760
        %1151 = vmatmul.f32.gmra.mxu0 %v1150
        %v1152 = vpop.f32.mrf.mxu0
        %v1153 = vadd.f32 %v1068, %v1152
        %v1154 = vand.u32 %v511, 4294901760
        %1155 = vmatmul.f32.gmra.mxu0 %v1154
        %v1156 = vpop.f32.mrf.mxu0
        %v1157 = vadd.f32 %v1072, %v1156
        %v1158 = vand.u32 %v514, 4294901760
        %1159 = vmatmul.f32.gmra.mxu0 %v1158
        %v1160 = vpop.f32.mrf.mxu0
        %v1161 = vadd.f32 %v1076, %v1160
        %v1162 = vand.u32 %v517, 4294901760
        %1163 = vmatmul.f32.gmra.mxu0 %v1162
        %v1164 = vpop.f32.mrf.mxu0
        %v1165 = vadd.f32 %v1080, %v1164
        %v1166 = vand.u32 %v520, 4294901760
        %1167 = vmatmul.f32.gmra.mxu0 %v1166
        %v1168 = vpop.f32.mrf.mxu0
        %v1169 = vadd.f32 %v1084, %v1168
        %v1170 = vand.u32 %v523, 4294901760
        %1171 = vmatmul.f32.gmra.mxu0 %v1170
        %v1172 = vpop.f32.mrf.mxu0
        %v1173 = vadd.f32 %v1088, %v1172
        %1174 = vdwg.mxu0
        %v1175 = vld [vmem:[%s344] sm:$0xff]
        %v1176 = vld [vmem:[%s344 + $0x8] sm:$0xff]
        %v1177 = vld [vmem:[%s344 + $0x10] sm:$0xff]
        %v1178 = vld [vmem:[%s344 + $0x18] sm:$0xff]
        %v1180 = vsel %vm476, %v1175, 0
        %v1183 = vsel %vm476, %v1176, 0
        %v1186 = vsel %vm476, %v1177, 0
        %v1189 = vsel %vm476, %v1178, 0
        %1191 = vmatpush.msra.mxu0 0.0
        %1192 = vmatpush.msra.mxu0 0.0
        %1193 = vmatpush.msra.mxu0 0.0
        %1194 = vmatpush.msra.mxu0 0.0
        %1195 = vmatpush.msra.mxu0 0.0
        %1196 = vmatpush.msra.mxu0 0.0
        %1197 = vmatpush.msra.mxu0 0.0
        %1198 = vmatpush.msra.mxu0 0.0
        %1199 = vmatpush.msra.mxu0 0.0
        %1200 = vmatpush.msra.mxu0 0.0
        %1201 = vmatpush.msra.mxu0 0.0
        %1202 = vmatpush.msra.mxu0 0.0
        %v1203 = vand.u32 %v1125, 4294901760
        %1204 = vmatpush.msra.mxu0 %v1203
        %v1205 = vand.u32 %v1121, 4294901760
        %1206 = vmatpush.msra.mxu0 %v1205
        %v1207 = vand.u32 %v1117, 4294901760
        %1208 = vmatpush.msra.mxu0 %v1207
        %v1209 = vand.u32 %v1113, 4294901760
        %1210 = vmatpush.msra.mxu0 %v1209
        %v1211 = vand.u32 %v1180, 4294901760
        %v1212 = vsub.f32 %v1180, %v1211
        %v1213 = vand.u32 %v1212, 4294901760
        %v1214 = vsub.f32 %v1212, %v1213
        %v1215 = vand.u32 %v1214, 4294901760
        %1216 = vmatmul.f32.gmra.mxu0 %v1215
        %v1217 = vpop.f32.mrf.mxu0
        %v1218 = vadd.f32 0.0, %v1217
        %v1219 = vand.u32 %v1183, 4294901760
        %v1220 = vsub.f32 %v1183, %v1219
        %v1221 = vand.u32 %v1220, 4294901760
        %v1222 = vsub.f32 %v1220, %v1221
        %v1223 = vand.u32 %v1222, 4294901760
        %1224 = vmatmul.f32.gmra.mxu0 %v1223
        %v1225 = vpop.f32.mrf.mxu0
        %v1226 = vadd.f32 0.0, %v1225
        %v1227 = vand.u32 %v1186, 4294901760
        %v1228 = vsub.f32 %v1186, %v1227
        %v1229 = vand.u32 %v1228, 4294901760
        %v1230 = vsub.f32 %v1228, %v1229
        %v1231 = vand.u32 %v1230, 4294901760
        %1232 = vmatmul.f32.gmra.mxu0 %v1231
        %v1233 = vpop.f32.mrf.mxu0
        %v1234 = vadd.f32 0.0, %v1233
        %v1235 = vand.u32 %v1189, 4294901760
        %v1236 = vsub.f32 %v1189, %v1235
        %v1237 = vand.u32 %v1236, 4294901760
        %v1238 = vsub.f32 %v1236, %v1237
        %v1239 = vand.u32 %v1238, 4294901760
        %1240 = vmatmul.f32.gmra.mxu0 %v1239
        %v1241 = vpop.f32.mrf.mxu0
        %v1242 = vadd.f32 0.0, %v1241
        %1243 = vdwg.mxu0
        %1244 = vmatpush.msra.mxu0 0.0
        %1245 = vmatpush.msra.mxu0 0.0
        %1246 = vmatpush.msra.mxu0 0.0
        %1247 = vmatpush.msra.mxu0 0.0
        %1248 = vmatpush.msra.mxu0 0.0
        %1249 = vmatpush.msra.mxu0 0.0
        %1250 = vmatpush.msra.mxu0 0.0
        %1251 = vmatpush.msra.mxu0 0.0
        %1252 = vmatpush.msra.mxu0 0.0
        %1253 = vmatpush.msra.mxu0 0.0
        %1254 = vmatpush.msra.mxu0 0.0
        %1255 = vmatpush.msra.mxu0 0.0
        %v1256 = vand.u32 %v1125, 4294901760
        %v1257 = vsub.f32 %v1125, %v1256
        %v1258 = vand.u32 %v1257, 4294901760
        %v1259 = vsub.f32 %v1257, %v1258
        %v1260 = vand.u32 %v1259, 4294901760
        %1261 = vmatpush.msra.mxu0 %v1260
        %v1262 = vand.u32 %v1121, 4294901760
        %v1263 = vsub.f32 %v1121, %v1262
        %v1264 = vand.u32 %v1263, 4294901760
        %v1265 = vsub.f32 %v1263, %v1264
        %v1266 = vand.u32 %v1265, 4294901760
        %1267 = vmatpush.msra.mxu0 %v1266
        %v1268 = vand.u32 %v1117, 4294901760
        %v1269 = vsub.f32 %v1117, %v1268
        %v1270 = vand.u32 %v1269, 4294901760
        %v1271 = vsub.f32 %v1269, %v1270
        %v1272 = vand.u32 %v1271, 4294901760
        %1273 = vmatpush.msra.mxu0 %v1272
        %v1274 = vand.u32 %v1113, 4294901760
        %v1275 = vsub.f32 %v1113, %v1274
        %v1276 = vand.u32 %v1275, 4294901760
        %v1277 = vsub.f32 %v1275, %v1276
        %v1278 = vand.u32 %v1277, 4294901760
        %1279 = vmatpush.msra.mxu0 %v1278
        %v1280 = vand.u32 %v1180, 4294901760
        %1281 = vmatmul.f32.gmra.mxu0 %v1280
        %v1282 = vpop.f32.mrf.mxu0
        %v1283 = vadd.f32 %v1218, %v1282
        %v1284 = vand.u32 %v1183, 4294901760
        %1285 = vmatmul.f32.gmra.mxu0 %v1284
        %v1286 = vpop.f32.mrf.mxu0
        %v1287 = vadd.f32 %v1226, %v1286
        %v1288 = vand.u32 %v1186, 4294901760
        %1289 = vmatmul.f32.gmra.mxu0 %v1288
        %v1290 = vpop.f32.mrf.mxu0
        %v1291 = vadd.f32 %v1234, %v1290
        %v1292 = vand.u32 %v1189, 4294901760
        %1293 = vmatmul.f32.gmra.mxu0 %v1292
        %v1294 = vpop.f32.mrf.mxu0
        %v1295 = vadd.f32 %v1242, %v1294
        %1296 = vdwg.mxu0
        %1297 = vmatpush.msra.mxu0 0.0
        %1298 = vmatpush.msra.mxu0 0.0
        %1299 = vmatpush.msra.mxu0 0.0
        %1300 = vmatpush.msra.mxu0 0.0
        %1301 = vmatpush.msra.mxu0 0.0
        %1302 = vmatpush.msra.mxu0 0.0
        %1303 = vmatpush.msra.mxu0 0.0
        %1304 = vmatpush.msra.mxu0 0.0
        %1305 = vmatpush.msra.mxu0 0.0
        %1306 = vmatpush.msra.mxu0 0.0
        %1307 = vmatpush.msra.mxu0 0.0
        %1308 = vmatpush.msra.mxu0 0.0
        %v1309 = vand.u32 %v1125, 4294901760
        %v1310 = vsub.f32 %v1125, %v1309
        %1311 = vmatpush.msra.mxu0 %v1310
        %v1312 = vand.u32 %v1121, 4294901760
        %v1313 = vsub.f32 %v1121, %v1312
        %1314 = vmatpush.msra.mxu0 %v1313
        %v1315 = vand.u32 %v1117, 4294901760
        %v1316 = vsub.f32 %v1117, %v1315
        %1317 = vmatpush.msra.mxu0 %v1316
        %v1318 = vand.u32 %v1113, 4294901760
        %v1319 = vsub.f32 %v1113, %v1318
        %1320 = vmatpush.msra.mxu0 %v1319
        %v1321 = vand.u32 %v1180, 4294901760
        %v1322 = vsub.f32 %v1180, %v1321
        %1323 = vmatmul.f32.gmra.mxu0 %v1322
        %v1324 = vpop.f32.mrf.mxu0
        %v1325 = vadd.f32 %v1283, %v1324
        %v1326 = vand.u32 %v1183, 4294901760
        %v1327 = vsub.f32 %v1183, %v1326
        %1328 = vmatmul.f32.gmra.mxu0 %v1327
        %v1329 = vpop.f32.mrf.mxu0
        %v1330 = vadd.f32 %v1287, %v1329
        %v1331 = vand.u32 %v1186, 4294901760
        %v1332 = vsub.f32 %v1186, %v1331
        %1333 = vmatmul.f32.gmra.mxu0 %v1332
        %v1334 = vpop.f32.mrf.mxu0
        %v1335 = vadd.f32 %v1291, %v1334
        %v1336 = vand.u32 %v1189, 4294901760
        %v1337 = vsub.f32 %v1189, %v1336
        %1338 = vmatmul.f32.gmra.mxu0 %v1337
        %v1339 = vpop.f32.mrf.mxu0
        %v1340 = vadd.f32 %v1295, %v1339
        %1341 = vdwg.mxu0
        %1342 = vmatpush.msra.mxu0 0.0
        %1343 = vmatpush.msra.mxu0 0.0
        %1344 = vmatpush.msra.mxu0 0.0
        %1345 = vmatpush.msra.mxu0 0.0
        %1346 = vmatpush.msra.mxu0 0.0
        %1347 = vmatpush.msra.mxu0 0.0
        %1348 = vmatpush.msra.mxu0 0.0
        %1349 = vmatpush.msra.mxu0 0.0
        %1350 = vmatpush.msra.mxu0 0.0
        %1351 = vmatpush.msra.mxu0 0.0
        %1352 = vmatpush.msra.mxu0 0.0
        %1353 = vmatpush.msra.mxu0 0.0
        %v1354 = vand.u32 %v1125, 4294901760
        %1355 = vmatpush.msra.mxu0 %v1354
        %v1356 = vand.u32 %v1121, 4294901760
        %1357 = vmatpush.msra.mxu0 %v1356
        %v1358 = vand.u32 %v1117, 4294901760
        %1359 = vmatpush.msra.mxu0 %v1358
        %v1360 = vand.u32 %v1113, 4294901760
        %1361 = vmatpush.msra.mxu0 %v1360
        %v1362 = vand.u32 %v1180, 4294901760
        %v1363 = vsub.f32 %v1180, %v1362
        %v1364 = vand.u32 %v1363, 4294901760
        %1365 = vmatmul.f32.gmra.mxu0 %v1364
        %v1366 = vpop.f32.mrf.mxu0
        %v1367 = vadd.f32 %v1325, %v1366
        %v1368 = vand.u32 %v1183, 4294901760
        %v1369 = vsub.f32 %v1183, %v1368
        %v1370 = vand.u32 %v1369, 4294901760
        %1371 = vmatmul.f32.gmra.mxu0 %v1370
        %v1372 = vpop.f32.mrf.mxu0
        %v1373 = vadd.f32 %v1330, %v1372
        %v1374 = vand.u32 %v1186, 4294901760
        %v1375 = vsub.f32 %v1186, %v1374
        %v1376 = vand.u32 %v1375, 4294901760
        %1377 = vmatmul.f32.gmra.mxu0 %v1376
        %v1378 = vpop.f32.mrf.mxu0
        %v1379 = vadd.f32 %v1335, %v1378
        %v1380 = vand.u32 %v1189, 4294901760
        %v1381 = vsub.f32 %v1189, %v1380
        %v1382 = vand.u32 %v1381, 4294901760
        %1383 = vmatmul.f32.gmra.mxu0 %v1382
        %v1384 = vpop.f32.mrf.mxu0
        %v1385 = vadd.f32 %v1340, %v1384
        %1386 = vdwg.mxu0
        %1387 = vmatpush.msra.mxu0 0.0
        %1388 = vmatpush.msra.mxu0 0.0
        %1389 = vmatpush.msra.mxu0 0.0
        %1390 = vmatpush.msra.mxu0 0.0
        %1391 = vmatpush.msra.mxu0 0.0
        %1392 = vmatpush.msra.mxu0 0.0
        %1393 = vmatpush.msra.mxu0 0.0
        %1394 = vmatpush.msra.mxu0 0.0
        %1395 = vmatpush.msra.mxu0 0.0
        %1396 = vmatpush.msra.mxu0 0.0
        %1397 = vmatpush.msra.mxu0 0.0
        %1398 = vmatpush.msra.mxu0 0.0
        %v1399 = vand.u32 %v1125, 4294901760
        %v1400 = vsub.f32 %v1125, %v1399
        %v1401 = vand.u32 %v1400, 4294901760
        %1402 = vmatpush.msra.mxu0 %v1401
        %v1403 = vand.u32 %v1121, 4294901760
        %v1404 = vsub.f32 %v1121, %v1403
        %v1405 = vand.u32 %v1404, 4294901760
        %1406 = vmatpush.msra.mxu0 %v1405
        %v1407 = vand.u32 %v1117, 4294901760
        %v1408 = vsub.f32 %v1117, %v1407
        %v1409 = vand.u32 %v1408, 4294901760
        %1410 = vmatpush.msra.mxu0 %v1409
        %v1411 = vand.u32 %v1113, 4294901760
        %v1412 = vsub.f32 %v1113, %v1411
        %v1413 = vand.u32 %v1412, 4294901760
        %1414 = vmatpush.msra.mxu0 %v1413
        %v1415 = vand.u32 %v1180, 4294901760
        %1416 = vmatmul.f32.gmra.mxu0 %v1415
        %v1417 = vpop.f32.mrf.mxu0
        %v1418 = vadd.f32 %v1367, %v1417
        %v1419 = vand.u32 %v1183, 4294901760
        %1420 = vmatmul.f32.gmra.mxu0 %v1419
        %v1421 = vpop.f32.mrf.mxu0
        %v1422 = vadd.f32 %v1373, %v1421
        %v1423 = vand.u32 %v1186, 4294901760
        %1424 = vmatmul.f32.gmra.mxu0 %v1423
        %v1425 = vpop.f32.mrf.mxu0
        %v1426 = vadd.f32 %v1379, %v1425
        %v1427 = vand.u32 %v1189, 4294901760
        %1428 = vmatmul.f32.gmra.mxu0 %v1427
        %v1429 = vpop.f32.mrf.mxu0
        %v1430 = vadd.f32 %v1385, %v1429
        %1431 = vdwg.mxu0
        %1432 = vmatpush.msra.mxu0 0.0
        %1433 = vmatpush.msra.mxu0 0.0
        %1434 = vmatpush.msra.mxu0 0.0
        %1435 = vmatpush.msra.mxu0 0.0
        %1436 = vmatpush.msra.mxu0 0.0
        %1437 = vmatpush.msra.mxu0 0.0
        %1438 = vmatpush.msra.mxu0 0.0
        %1439 = vmatpush.msra.mxu0 0.0
        %1440 = vmatpush.msra.mxu0 0.0
        %1441 = vmatpush.msra.mxu0 0.0
        %1442 = vmatpush.msra.mxu0 0.0
        %1443 = vmatpush.msra.mxu0 0.0
        %v1444 = vand.u32 %v1125, 4294901760
        %1445 = vmatpush.msra.mxu0 %v1444
        %v1446 = vand.u32 %v1121, 4294901760
        %1447 = vmatpush.msra.mxu0 %v1446
        %v1448 = vand.u32 %v1117, 4294901760
        %1449 = vmatpush.msra.mxu0 %v1448
        %v1450 = vand.u32 %v1113, 4294901760
        %1451 = vmatpush.msra.mxu0 %v1450
        %v1452 = vand.u32 %v1180, 4294901760
        %1453 = vmatmul.f32.gmra.mxu0 %v1452
        %v1454 = vpop.f32.mrf.mxu0
        %v1455 = vadd.f32 %v1418, %v1454
        %v1456 = vand.u32 %v1183, 4294901760
        %1457 = vmatmul.f32.gmra.mxu0 %v1456
        %v1458 = vpop.f32.mrf.mxu0
        %v1459 = vadd.f32 %v1422, %v1458
        %v1460 = vand.u32 %v1186, 4294901760
        %1461 = vmatmul.f32.gmra.mxu0 %v1460
        %v1462 = vpop.f32.mrf.mxu0
        %v1463 = vadd.f32 %v1426, %v1462
        %v1464 = vand.u32 %v1189, 4294901760
        %1465 = vmatmul.f32.gmra.mxu0 %v1464
        %v1466 = vpop.f32.mrf.mxu0
        %v1467 = vadd.f32 %v1430, %v1466
        %1468 = vdwg.mxu0
        %1469 = vst.msk [vmem:[#allocation2] sm:$0xff] %vm476, %v1455
        %1470 = vst.msk [vmem:[#allocation2 + $0x8] sm:$0xff] %vm476, %v1459
        %1471 = vst.msk [vmem:[#allocation2 + $0x10] sm:$0xff] %vm476, %v1463
        %1472 = vst.msk [vmem:[#allocation2 + $0x18] sm:$0xff] %vm476, %v1467
        %v1473 = vld [vmem:[%s344] sm:$0xff]
        %v1474 = vld [vmem:[%s344 + $0x8] sm:$0xff]
        %v1475 = vld [vmem:[%s344 + $0x10] sm:$0xff]
        %v1476 = vld [vmem:[%s344 + $0x18] sm:$0xff]
        %v1478 = vsel %vm476, %v1473, 0
        %v1481 = vsel %vm476, %v1474, 0
        %v1484 = vsel %vm476, %v1475, 0
        %v1487 = vsel %vm476, %v1476, 0
        %1489 = vmatpush.msra.mxu0 0.0
        %1490 = vmatpush.msra.mxu0 0.0
        %1491 = vmatpush.msra.mxu0 0.0
        %1492 = vmatpush.msra.mxu0 0.0
        %1493 = vmatpush.msra.mxu0 0.0
        %1494 = vmatpush.msra.mxu0 0.0
        %1495 = vmatpush.msra.mxu0 0.0
        %1496 = vmatpush.msra.mxu0 0.0
        %1497 = vmatpush.msra.mxu0 0.0
        %1498 = vmatpush.msra.mxu0 0.0
        %1499 = vmatpush.msra.mxu0 0.0
        %1500 = vmatpush.msra.mxu0 0.0
        %v1501 = vand.u32 %v1141, 4294901760
        %1502 = vmatpush.msra.mxu0 %v1501
        %v1503 = vand.u32 %v1137, 4294901760
        %1504 = vmatpush.msra.mxu0 %v1503
        %v1505 = vand.u32 %v1133, 4294901760
        %1506 = vmatpush.msra.mxu0 %v1505
        %v1507 = vand.u32 %v1129, 4294901760
        %1508 = vmatpush.msra.mxu0 %v1507
        %v1509 = vand.u32 %v1478, 4294901760
        %v1510 = vsub.f32 %v1478, %v1509
        %v1511 = vand.u32 %v1510, 4294901760
        %v1512 = vsub.f32 %v1510, %v1511
        %v1513 = vand.u32 %v1512, 4294901760
        %1514 = vmatmul.f32.gmra.mxu0 %v1513
        %v1515 = vpop.f32.mrf.mxu0
        %v1516 = vadd.f32 0.0, %v1515
        %v1517 = vand.u32 %v1481, 4294901760
        %v1518 = vsub.f32 %v1481, %v1517
        %v1519 = vand.u32 %v1518, 4294901760
        %v1520 = vsub.f32 %v1518, %v1519
        %v1521 = vand.u32 %v1520, 4294901760
        %1522 = vmatmul.f32.gmra.mxu0 %v1521
        %v1523 = vpop.f32.mrf.mxu0
        %v1524 = vadd.f32 0.0, %v1523
        %v1525 = vand.u32 %v1484, 4294901760
        %v1526 = vsub.f32 %v1484, %v1525
        %v1527 = vand.u32 %v1526, 4294901760
        %v1528 = vsub.f32 %v1526, %v1527
        %v1529 = vand.u32 %v1528, 4294901760
        %1530 = vmatmul.f32.gmra.mxu0 %v1529
        %v1531 = vpop.f32.mrf.mxu0
        %v1532 = vadd.f32 0.0, %v1531
        %v1533 = vand.u32 %v1487, 4294901760
        %v1534 = vsub.f32 %v1487, %v1533
        %v1535 = vand.u32 %v1534, 4294901760
        %v1536 = vsub.f32 %v1534, %v1535
        %v1537 = vand.u32 %v1536, 4294901760
        %1538 = vmatmul.f32.gmra.mxu0 %v1537
        %v1539 = vpop.f32.mrf.mxu0
        %v1540 = vadd.f32 0.0, %v1539
        %1541 = vdwg.mxu0
        %1542 = vmatpush.msra.mxu0 0.0
        %1543 = vmatpush.msra.mxu0 0.0
        %1544 = vmatpush.msra.mxu0 0.0
        %1545 = vmatpush.msra.mxu0 0.0
        %1546 = vmatpush.msra.mxu0 0.0
        %1547 = vmatpush.msra.mxu0 0.0
        %1548 = vmatpush.msra.mxu0 0.0
        %1549 = vmatpush.msra.mxu0 0.0
        %1550 = vmatpush.msra.mxu0 0.0
        %1551 = vmatpush.msra.mxu0 0.0
        %1552 = vmatpush.msra.mxu0 0.0
        %1553 = vmatpush.msra.mxu0 0.0
        %v1554 = vand.u32 %v1141, 4294901760
        %v1555 = vsub.f32 %v1141, %v1554
        %v1556 = vand.u32 %v1555, 4294901760
        %v1557 = vsub.f32 %v1555, %v1556
        %v1558 = vand.u32 %v1557, 4294901760
        %1559 = vmatpush.msra.mxu0 %v1558
        %v1560 = vand.u32 %v1137, 4294901760
        %v1561 = vsub.f32 %v1137, %v1560
        %v1562 = vand.u32 %v1561, 4294901760
        %v1563 = vsub.f32 %v1561, %v1562
        %v1564 = vand.u32 %v1563, 4294901760
        %1565 = vmatpush.msra.mxu0 %v1564
        %v1566 = vand.u32 %v1133, 4294901760
        %v1567 = vsub.f32 %v1133, %v1566
        %v1568 = vand.u32 %v1567, 4294901760
        %v1569 = vsub.f32 %v1567, %v1568
        %v1570 = vand.u32 %v1569, 4294901760
        %1571 = vmatpush.msra.mxu0 %v1570
        %v1572 = vand.u32 %v1129, 4294901760
        %v1573 = vsub.f32 %v1129, %v1572
        %v1574 = vand.u32 %v1573, 4294901760
        %v1575 = vsub.f32 %v1573, %v1574
        %v1576 = vand.u32 %v1575, 4294901760
        %1577 = vmatpush.msra.mxu0 %v1576
        %v1578 = vand.u32 %v1478, 4294901760
        %1579 = vmatmul.f32.gmra.mxu0 %v1578
        %v1580 = vpop.f32.mrf.mxu0
        %v1581 = vadd.f32 %v1516, %v1580
        %v1582 = vand.u32 %v1481, 4294901760
        %1583 = vmatmul.f32.gmra.mxu0 %v1582
        %v1584 = vpop.f32.mrf.mxu0
        %v1585 = vadd.f32 %v1524, %v1584
        %v1586 = vand.u32 %v1484, 4294901760
        %1587 = vmatmul.f32.gmra.mxu0 %v1586
        %v1588 = vpop.f32.mrf.mxu0
        %v1589 = vadd.f32 %v1532, %v1588
        %v1590 = vand.u32 %v1487, 4294901760
        %1591 = vmatmul.f32.gmra.mxu0 %v1590
        %v1592 = vpop.f32.mrf.mxu0
        %v1593 = vadd.f32 %v1540, %v1592
        %1594 = vdwg.mxu0
        %1595 = vmatpush.msra.mxu0 0.0
        %1596 = vmatpush.msra.mxu0 0.0
        %1597 = vmatpush.msra.mxu0 0.0
        %1598 = vmatpush.msra.mxu0 0.0
        %1599 = vmatpush.msra.mxu0 0.0
        %1600 = vmatpush.msra.mxu0 0.0
        %1601 = vmatpush.msra.mxu0 0.0
        %1602 = vmatpush.msra.mxu0 0.0
        %1603 = vmatpush.msra.mxu0 0.0
        %1604 = vmatpush.msra.mxu0 0.0
        %1605 = vmatpush.msra.mxu0 0.0
        %1606 = vmatpush.msra.mxu0 0.0
        %v1607 = vand.u32 %v1141, 4294901760
        %v1608 = vsub.f32 %v1141, %v1607
        %1609 = vmatpush.msra.mxu0 %v1608
        %v1610 = vand.u32 %v1137, 4294901760
        %v1611 = vsub.f32 %v1137, %v1610
        %1612 = vmatpush.msra.mxu0 %v1611
        %v1613 = vand.u32 %v1133, 4294901760
        %v1614 = vsub.f32 %v1133, %v1613
        %1615 = vmatpush.msra.mxu0 %v1614
        %v1616 = vand.u32 %v1129, 4294901760
        %v1617 = vsub.f32 %v1129, %v1616
        %1618 = vmatpush.msra.mxu0 %v1617
        %v1619 = vand.u32 %v1478, 4294901760
        %v1620 = vsub.f32 %v1478, %v1619
        %1621 = vmatmul.f32.gmra.mxu0 %v1620
        %v1622 = vpop.f32.mrf.mxu0
        %v1623 = vadd.f32 %v1581, %v1622
        %v1624 = vand.u32 %v1481, 4294901760
        %v1625 = vsub.f32 %v1481, %v1624
        %1626 = vmatmul.f32.gmra.mxu0 %v1625
        %v1627 = vpop.f32.mrf.mxu0
        %v1628 = vadd.f32 %v1585, %v1627
        %v1629 = vand.u32 %v1484, 4294901760
        %v1630 = vsub.f32 %v1484, %v1629
        %1631 = vmatmul.f32.gmra.mxu0 %v1630
        %v1632 = vpop.f32.mrf.mxu0
        %v1633 = vadd.f32 %v1589, %v1632
        %v1634 = vand.u32 %v1487, 4294901760
        %v1635 = vsub.f32 %v1487, %v1634
        %1636 = vmatmul.f32.gmra.mxu0 %v1635
        %v1637 = vpop.f32.mrf.mxu0
        %v1638 = vadd.f32 %v1593, %v1637
        %1639 = vdwg.mxu0
        %1640 = vmatpush.msra.mxu0 0.0
        %1641 = vmatpush.msra.mxu0 0.0
        %1642 = vmatpush.msra.mxu0 0.0
        %1643 = vmatpush.msra.mxu0 0.0
        %1644 = vmatpush.msra.mxu0 0.0
        %1645 = vmatpush.msra.mxu0 0.0
        %1646 = vmatpush.msra.mxu0 0.0
        %1647 = vmatpush.msra.mxu0 0.0
        %1648 = vmatpush.msra.mxu0 0.0
        %1649 = vmatpush.msra.mxu0 0.0
        %1650 = vmatpush.msra.mxu0 0.0
        %1651 = vmatpush.msra.mxu0 0.0
        %v1652 = vand.u32 %v1141, 4294901760
        %1653 = vmatpush.msra.mxu0 %v1652
        %v1654 = vand.u32 %v1137, 4294901760
        %1655 = vmatpush.msra.mxu0 %v1654
        %v1656 = vand.u32 %v1133, 4294901760
        %1657 = vmatpush.msra.mxu0 %v1656
        %v1658 = vand.u32 %v1129, 4294901760
        %1659 = vmatpush.msra.mxu0 %v1658
        %v1660 = vand.u32 %v1478, 4294901760
        %v1661 = vsub.f32 %v1478, %v1660
        %v1662 = vand.u32 %v1661, 4294901760
        %1663 = vmatmul.f32.gmra.mxu0 %v1662
        %v1664 = vpop.f32.mrf.mxu0
        %v1665 = vadd.f32 %v1623, %v1664
        %v1666 = vand.u32 %v1481, 4294901760
        %v1667 = vsub.f32 %v1481, %v1666
        %v1668 = vand.u32 %v1667, 4294901760
        %1669 = vmatmul.f32.gmra.mxu0 %v1668
        %v1670 = vpop.f32.mrf.mxu0
        %v1671 = vadd.f32 %v1628, %v1670
        %v1672 = vand.u32 %v1484, 4294901760
        %v1673 = vsub.f32 %v1484, %v1672
        %v1674 = vand.u32 %v1673, 4294901760
        %1675 = vmatmul.f32.gmra.mxu0 %v1674
        %v1676 = vpop.f32.mrf.mxu0
        %v1677 = vadd.f32 %v1633, %v1676
        %v1678 = vand.u32 %v1487, 4294901760
        %v1679 = vsub.f32 %v1487, %v1678
        %v1680 = vand.u32 %v1679, 4294901760
        %1681 = vmatmul.f32.gmra.mxu0 %v1680
        %v1682 = vpop.f32.mrf.mxu0
        %v1683 = vadd.f32 %v1638, %v1682
        %1684 = vdwg.mxu0
        %1685 = vmatpush.msra.mxu0 0.0
        %1686 = vmatpush.msra.mxu0 0.0
        %1687 = vmatpush.msra.mxu0 0.0
        %1688 = vmatpush.msra.mxu0 0.0
        %1689 = vmatpush.msra.mxu0 0.0
        %1690 = vmatpush.msra.mxu0 0.0
        %1691 = vmatpush.msra.mxu0 0.0
        %1692 = vmatpush.msra.mxu0 0.0
        %1693 = vmatpush.msra.mxu0 0.0
        %1694 = vmatpush.msra.mxu0 0.0
        %1695 = vmatpush.msra.mxu0 0.0
        %1696 = vmatpush.msra.mxu0 0.0
        %v1697 = vand.u32 %v1141, 4294901760
        %v1698 = vsub.f32 %v1141, %v1697
        %v1699 = vand.u32 %v1698, 4294901760
        %1700 = vmatpush.msra.mxu0 %v1699
        %v1701 = vand.u32 %v1137, 4294901760
        %v1702 = vsub.f32 %v1137, %v1701
        %v1703 = vand.u32 %v1702, 4294901760
        %1704 = vmatpush.msra.mxu0 %v1703
        %v1705 = vand.u32 %v1133, 4294901760
        %v1706 = vsub.f32 %v1133, %v1705
        %v1707 = vand.u32 %v1706, 4294901760
        %1708 = vmatpush.msra.mxu0 %v1707
        %v1709 = vand.u32 %v1129, 4294901760
        %v1710 = vsub.f32 %v1129, %v1709
        %v1711 = vand.u32 %v1710, 4294901760
        %1712 = vmatpush.msra.mxu0 %v1711
        %v1713 = vand.u32 %v1478, 4294901760
        %1714 = vmatmul.f32.gmra.mxu0 %v1713
        %v1715 = vpop.f32.mrf.mxu0
        %v1716 = vadd.f32 %v1665, %v1715
        %v1717 = vand.u32 %v1481, 4294901760
        %1718 = vmatmul.f32.gmra.mxu0 %v1717
        %v1719 = vpop.f32.mrf.mxu0
        %v1720 = vadd.f32 %v1671, %v1719
        %v1721 = vand.u32 %v1484, 4294901760
        %1722 = vmatmul.f32.gmra.mxu0 %v1721
        %v1723 = vpop.f32.mrf.mxu0
        %v1724 = vadd.f32 %v1677, %v1723
        %v1725 = vand.u32 %v1487, 4294901760
        %1726 = vmatmul.f32.gmra.mxu0 %v1725
        %v1727 = vpop.f32.mrf.mxu0
        %v1728 = vadd.f32 %v1683, %v1727
        %1729 = vdwg.mxu0
        %1730 = vmatpush.msra.mxu0 0.0
        %1731 = vmatpush.msra.mxu0 0.0
        %1732 = vmatpush.msra.mxu0 0.0
        %1733 = vmatpush.msra.mxu0 0.0
        %1734 = vmatpush.msra.mxu0 0.0
        %1735 = vmatpush.msra.mxu0 0.0
        %1736 = vmatpush.msra.mxu0 0.0
        %1737 = vmatpush.msra.mxu0 0.0
        %1738 = vmatpush.msra.mxu0 0.0
        %1739 = vmatpush.msra.mxu0 0.0
        %1740 = vmatpush.msra.mxu0 0.0
        %1741 = vmatpush.msra.mxu0 0.0
        %v1742 = vand.u32 %v1141, 4294901760
        %1743 = vmatpush.msra.mxu0 %v1742
        %v1744 = vand.u32 %v1137, 4294901760
        %1745 = vmatpush.msra.mxu0 %v1744
        %v1746 = vand.u32 %v1133, 4294901760
        %1747 = vmatpush.msra.mxu0 %v1746
        %v1748 = vand.u32 %v1129, 4294901760
        %1749 = vmatpush.msra.mxu0 %v1748
        %v1750 = vand.u32 %v1478, 4294901760
        %1751 = vmatmul.f32.gmra.mxu0 %v1750
        %v1752 = vpop.f32.mrf.mxu0
        %v1753 = vadd.f32 %v1716, %v1752
        %v1754 = vand.u32 %v1481, 4294901760
        %1755 = vmatmul.f32.gmra.mxu0 %v1754
        %v1756 = vpop.f32.mrf.mxu0
        %v1757 = vadd.f32 %v1720, %v1756
        %v1758 = vand.u32 %v1484, 4294901760
        %1759 = vmatmul.f32.gmra.mxu0 %v1758
        %v1760 = vpop.f32.mrf.mxu0
        %v1761 = vadd.f32 %v1724, %v1760
        %v1762 = vand.u32 %v1487, 4294901760
        %1763 = vmatmul.f32.gmra.mxu0 %v1762
        %v1764 = vpop.f32.mrf.mxu0
        %v1765 = vadd.f32 %v1728, %v1764
        %1766 = vdwg.mxu0
        %s1767 = scalar_lea.vmem [#allocation2], 32
        %1768 = vst.msk [vmem:[%s1767] sm:$0xff] %vm476, %v1753
        %1769 = vst.msk [vmem:[%s1767 + $0x8] sm:$0xff] %vm476, %v1757
        %1770 = vst.msk [vmem:[%s1767 + $0x10] sm:$0xff] %vm476, %v1761
        %1771 = vst.msk [vmem:[%s1767 + $0x18] sm:$0xff] %vm476, %v1765
        %v1772 = vld [vmem:[%s344] sm:$0xff]
        %v1773 = vld [vmem:[%s344 + $0x8] sm:$0xff]
        %v1774 = vld [vmem:[%s344 + $0x10] sm:$0xff]
        %v1775 = vld [vmem:[%s344 + $0x18] sm:$0xff]
        %v1777 = vsel %vm476, %v1772, 0
        %v1780 = vsel %vm476, %v1773, 0
        %v1783 = vsel %vm476, %v1774, 0
        %v1786 = vsel %vm476, %v1775, 0
        %1788 = vmatpush.msra.mxu0 0.0
        %1789 = vmatpush.msra.mxu0 0.0
        %1790 = vmatpush.msra.mxu0 0.0
        %1791 = vmatpush.msra.mxu0 0.0
        %1792 = vmatpush.msra.mxu0 0.0
        %1793 = vmatpush.msra.mxu0 0.0
        %1794 = vmatpush.msra.mxu0 0.0
        %1795 = vmatpush.msra.mxu0 0.0
        %1796 = vmatpush.msra.mxu0 0.0
        %1797 = vmatpush.msra.mxu0 0.0
        %1798 = vmatpush.msra.mxu0 0.0
        %1799 = vmatpush.msra.mxu0 0.0
        %v1800 = vand.u32 %v1157, 4294901760
        %1801 = vmatpush.msra.mxu0 %v1800
        %v1802 = vand.u32 %v1153, 4294901760
        %1803 = vmatpush.msra.mxu0 %v1802
        %v1804 = vand.u32 %v1149, 4294901760
        %1805 = vmatpush.msra.mxu0 %v1804
        %v1806 = vand.u32 %v1145, 4294901760
        %1807 = vmatpush.msra.mxu0 %v1806
        %v1808 = vand.u32 %v1777, 4294901760
        %v1809 = vsub.f32 %v1777, %v1808
        %v1810 = vand.u32 %v1809, 4294901760
        %v1811 = vsub.f32 %v1809, %v1810
        %v1812 = vand.u32 %v1811, 4294901760
        %1813 = vmatmul.f32.gmra.mxu0 %v1812
        %v1814 = vpop.f32.mrf.mxu0
        %v1815 = vadd.f32 0.0, %v1814
        %v1816 = vand.u32 %v1780, 4294901760
        %v1817 = vsub.f32 %v1780, %v1816
        %v1818 = vand.u32 %v1817, 4294901760
        %v1819 = vsub.f32 %v1817, %v1818
        %v1820 = vand.u32 %v1819, 4294901760
        %1821 = vmatmul.f32.gmra.mxu0 %v1820
        %v1822 = vpop.f32.mrf.mxu0
        %v1823 = vadd.f32 0.0, %v1822
        %v1824 = vand.u32 %v1783, 4294901760
        %v1825 = vsub.f32 %v1783, %v1824
        %v1826 = vand.u32 %v1825, 4294901760
        %v1827 = vsub.f32 %v1825, %v1826
        %v1828 = vand.u32 %v1827, 4294901760
        %1829 = vmatmul.f32.gmra.mxu0 %v1828
        %v1830 = vpop.f32.mrf.mxu0
        %v1831 = vadd.f32 0.0, %v1830
        %v1832 = vand.u32 %v1786, 4294901760
        %v1833 = vsub.f32 %v1786, %v1832
        %v1834 = vand.u32 %v1833, 4294901760
        %v1835 = vsub.f32 %v1833, %v1834
        %v1836 = vand.u32 %v1835, 4294901760
        %1837 = vmatmul.f32.gmra.mxu0 %v1836
        %v1838 = vpop.f32.mrf.mxu0
        %v1839 = vadd.f32 0.0, %v1838
        %1840 = vdwg.mxu0
        %1841 = vmatpush.msra.mxu0 0.0
        %1842 = vmatpush.msra.mxu0 0.0
        %1843 = vmatpush.msra.mxu0 0.0
        %1844 = vmatpush.msra.mxu0 0.0
        %1845 = vmatpush.msra.mxu0 0.0
        %1846 = vmatpush.msra.mxu0 0.0
        %1847 = vmatpush.msra.mxu0 0.0
        %1848 = vmatpush.msra.mxu0 0.0
        %1849 = vmatpush.msra.mxu0 0.0
        %1850 = vmatpush.msra.mxu0 0.0
        %1851 = vmatpush.msra.mxu0 0.0
        %1852 = vmatpush.msra.mxu0 0.0
        %v1853 = vand.u32 %v1157, 4294901760
        %v1854 = vsub.f32 %v1157, %v1853
        %v1855 = vand.u32 %v1854, 4294901760
        %v1856 = vsub.f32 %v1854, %v1855
        %v1857 = vand.u32 %v1856, 4294901760
        %1858 = vmatpush.msra.mxu0 %v1857
        %v1859 = vand.u32 %v1153, 4294901760
        %v1860 = vsub.f32 %v1153, %v1859
        %v1861 = vand.u32 %v1860, 4294901760
        %v1862 = vsub.f32 %v1860, %v1861
        %v1863 = vand.u32 %v1862, 4294901760
        %1864 = vmatpush.msra.mxu0 %v1863
        %v1865 = vand.u32 %v1149, 4294901760
        %v1866 = vsub.f32 %v1149, %v1865
        %v1867 = vand.u32 %v1866, 4294901760
        %v1868 = vsub.f32 %v1866, %v1867
        %v1869 = vand.u32 %v1868, 4294901760
        %1870 = vmatpush.msra.mxu0 %v1869
        %v1871 = vand.u32 %v1145, 4294901760
        %v1872 = vsub.f32 %v1145, %v1871
        %v1873 = vand.u32 %v1872, 4294901760
        %v1874 = vsub.f32 %v1872, %v1873
        %v1875 = vand.u32 %v1874, 4294901760
        %1876 = vmatpush.msra.mxu0 %v1875
        %v1877 = vand.u32 %v1777, 4294901760
        %1878 = vmatmul.f32.gmra.mxu0 %v1877
        %v1879 = vpop.f32.mrf.mxu0
        %v1880 = vadd.f32 %v1815, %v1879
        %v1881 = vand.u32 %v1780, 4294901760
        %1882 = vmatmul.f32.gmra.mxu0 %v1881
        %v1883 = vpop.f32.mrf.mxu0
        %v1884 = vadd.f32 %v1823, %v1883
        %v1885 = vand.u32 %v1783, 4294901760
        %1886 = vmatmul.f32.gmra.mxu0 %v1885
        %v1887 = vpop.f32.mrf.mxu0
        %v1888 = vadd.f32 %v1831, %v1887
        %v1889 = vand.u32 %v1786, 4294901760
        %1890 = vmatmul.f32.gmra.mxu0 %v1889
        %v1891 = vpop.f32.mrf.mxu0
        %v1892 = vadd.f32 %v1839, %v1891
        %1893 = vdwg.mxu0
        %1894 = vmatpush.msra.mxu0 0.0
        %1895 = vmatpush.msra.mxu0 0.0
        %1896 = vmatpush.msra.mxu0 0.0
        %1897 = vmatpush.msra.mxu0 0.0
        %1898 = vmatpush.msra.mxu0 0.0
        %1899 = vmatpush.msra.mxu0 0.0
        %1900 = vmatpush.msra.mxu0 0.0
        %1901 = vmatpush.msra.mxu0 0.0
        %1902 = vmatpush.msra.mxu0 0.0
        %1903 = vmatpush.msra.mxu0 0.0
        %1904 = vmatpush.msra.mxu0 0.0
        %1905 = vmatpush.msra.mxu0 0.0
        %v1906 = vand.u32 %v1157, 4294901760
        %v1907 = vsub.f32 %v1157, %v1906
        %1908 = vmatpush.msra.mxu0 %v1907
        %v1909 = vand.u32 %v1153, 4294901760
        %v1910 = vsub.f32 %v1153, %v1909
        %1911 = vmatpush.msra.mxu0 %v1910
        %v1912 = vand.u32 %v1149, 4294901760
        %v1913 = vsub.f32 %v1149, %v1912
        %1914 = vmatpush.msra.mxu0 %v1913
        %v1915 = vand.u32 %v1145, 4294901760
        %v1916 = vsub.f32 %v1145, %v1915
        %1917 = vmatpush.msra.mxu0 %v1916
        %v1918 = vand.u32 %v1777, 4294901760
        %v1919 = vsub.f32 %v1777, %v1918
        %1920 = vmatmul.f32.gmra.mxu0 %v1919
        %v1921 = vpop.f32.mrf.mxu0
        %v1922 = vadd.f32 %v1880, %v1921
        %v1923 = vand.u32 %v1780, 4294901760
        %v1924 = vsub.f32 %v1780, %v1923
        %1925 = vmatmul.f32.gmra.mxu0 %v1924
        %v1926 = vpop.f32.mrf.mxu0
        %v1927 = vadd.f32 %v1884, %v1926
        %v1928 = vand.u32 %v1783, 4294901760
        %v1929 = vsub.f32 %v1783, %v1928
        %1930 = vmatmul.f32.gmra.mxu0 %v1929
        %v1931 = vpop.f32.mrf.mxu0
        %v1932 = vadd.f32 %v1888, %v1931
        %v1933 = vand.u32 %v1786, 4294901760
        %v1934 = vsub.f32 %v1786, %v1933
        %1935 = vmatmul.f32.gmra.mxu0 %v1934
        %v1936 = vpop.f32.mrf.mxu0
        %v1937 = vadd.f32 %v1892, %v1936
        %1938 = vdwg.mxu0
        %1939 = vmatpush.msra.mxu0 0.0
        %1940 = vmatpush.msra.mxu0 0.0
        %1941 = vmatpush.msra.mxu0 0.0
        %1942 = vmatpush.msra.mxu0 0.0
        %1943 = vmatpush.msra.mxu0 0.0
        %1944 = vmatpush.msra.mxu0 0.0
        %1945 = vmatpush.msra.mxu0 0.0
        %1946 = vmatpush.msra.mxu0 0.0
        %1947 = vmatpush.msra.mxu0 0.0
        %1948 = vmatpush.msra.mxu0 0.0
        %1949 = vmatpush.msra.mxu0 0.0
        %1950 = vmatpush.msra.mxu0 0.0
        %v1951 = vand.u32 %v1157, 4294901760
        %1952 = vmatpush.msra.mxu0 %v1951
        %v1953 = vand.u32 %v1153, 4294901760
        %1954 = vmatpush.msra.mxu0 %v1953
        %v1955 = vand.u32 %v1149, 4294901760
        %1956 = vmatpush.msra.mxu0 %v1955
        %v1957 = vand.u32 %v1145, 4294901760
        %1958 = vmatpush.msra.mxu0 %v1957
        %v1959 = vand.u32 %v1777, 4294901760
        %v1960 = vsub.f32 %v1777, %v1959
        %v1961 = vand.u32 %v1960, 4294901760
        %1962 = vmatmul.f32.gmra.mxu0 %v1961
        %v1963 = vpop.f32.mrf.mxu0
        %v1964 = vadd.f32 %v1922, %v1963
        %v1965 = vand.u32 %v1780, 4294901760
        %v1966 = vsub.f32 %v1780, %v1965
        %v1967 = vand.u32 %v1966, 4294901760
        %1968 = vmatmul.f32.gmra.mxu0 %v1967
        %v1969 = vpop.f32.mrf.mxu0
        %v1970 = vadd.f32 %v1927, %v1969
        %v1971 = vand.u32 %v1783, 4294901760
        %v1972 = vsub.f32 %v1783, %v1971
        %v1973 = vand.u32 %v1972, 4294901760
        %1974 = vmatmul.f32.gmra.mxu0 %v1973
        %v1975 = vpop.f32.mrf.mxu0
        %v1976 = vadd.f32 %v1932, %v1975
        %v1977 = vand.u32 %v1786, 4294901760
        %v1978 = vsub.f32 %v1786, %v1977
        %v1979 = vand.u32 %v1978, 4294901760
        %1980 = vmatmul.f32.gmra.mxu0 %v1979
        %v1981 = vpop.f32.mrf.mxu0
        %v1982 = vadd.f32 %v1937, %v1981
        %1983 = vdwg.mxu0
        %1984 = vmatpush.msra.mxu0 0.0
        %1985 = vmatpush.msra.mxu0 0.0
        %1986 = vmatpush.msra.mxu0 0.0
        %1987 = vmatpush.msra.mxu0 0.0
        %1988 = vmatpush.msra.mxu0 0.0
        %1989 = vmatpush.msra.mxu0 0.0
        %1990 = vmatpush.msra.mxu0 0.0
        %1991 = vmatpush.msra.mxu0 0.0
        %1992 = vmatpush.msra.mxu0 0.0
        %1993 = vmatpush.msra.mxu0 0.0
        %1994 = vmatpush.msra.mxu0 0.0
        %1995 = vmatpush.msra.mxu0 0.0
        %v1996 = vand.u32 %v1157, 4294901760
        %v1997 = vsub.f32 %v1157, %v1996
        %v1998 = vand.u32 %v1997, 4294901760
        %1999 = vmatpush.msra.mxu0 %v1998
        %v2000 = vand.u32 %v1153, 4294901760
        %v2001 = vsub.f32 %v1153, %v2000
        %v2002 = vand.u32 %v2001, 4294901760
        %2003 = vmatpush.msra.mxu0 %v2002
        %v2004 = vand.u32 %v1149, 4294901760
        %v2005 = vsub.f32 %v1149, %v2004
        %v2006 = vand.u32 %v2005, 4294901760
        %2007 = vmatpush.msra.mxu0 %v2006
        %v2008 = vand.u32 %v1145, 4294901760
        %v2009 = vsub.f32 %v1145, %v2008
        %v2010 = vand.u32 %v2009, 4294901760
        %2011 = vmatpush.msra.mxu0 %v2010
        %v2012 = vand.u32 %v1777, 4294901760
        %2013 = vmatmul.f32.gmra.mxu0 %v2012
        %v2014 = vpop.f32.mrf.mxu0
        %v2015 = vadd.f32 %v1964, %v2014
        %v2016 = vand.u32 %v1780, 4294901760
        %2017 = vmatmul.f32.gmra.mxu0 %v2016
        %v2018 = vpop.f32.mrf.mxu0
        %v2019 = vadd.f32 %v1970, %v2018
        %v2020 = vand.u32 %v1783, 4294901760
        %2021 = vmatmul.f32.gmra.mxu0 %v2020
        %v2022 = vpop.f32.mrf.mxu0
        %v2023 = vadd.f32 %v1976, %v2022
        %v2024 = vand.u32 %v1786, 4294901760
        %2025 = vmatmul.f32.gmra.mxu0 %v2024
        %v2026 = vpop.f32.mrf.mxu0
        %v2027 = vadd.f32 %v1982, %v2026
        %2028 = vdwg.mxu0
        %2029 = vmatpush.msra.mxu0 0.0
        %2030 = vmatpush.msra.mxu0 0.0
        %2031 = vmatpush.msra.mxu0 0.0
        %2032 = vmatpush.msra.mxu0 0.0
        %2033 = vmatpush.msra.mxu0 0.0
        %2034 = vmatpush.msra.mxu0 0.0
        %2035 = vmatpush.msra.mxu0 0.0
        %2036 = vmatpush.msra.mxu0 0.0
        %2037 = vmatpush.msra.mxu0 0.0
        %2038 = vmatpush.msra.mxu0 0.0
        %2039 = vmatpush.msra.mxu0 0.0
        %2040 = vmatpush.msra.mxu0 0.0
        %v2041 = vand.u32 %v1157, 4294901760
        %2042 = vmatpush.msra.mxu0 %v2041
        %v2043 = vand.u32 %v1153, 4294901760
        %2044 = vmatpush.msra.mxu0 %v2043
        %v2045 = vand.u32 %v1149, 4294901760
        %2046 = vmatpush.msra.mxu0 %v2045
        %v2047 = vand.u32 %v1145, 4294901760
        %2048 = vmatpush.msra.mxu0 %v2047
        %v2049 = vand.u32 %v1777, 4294901760
        %2050 = vmatmul.f32.gmra.mxu0 %v2049
        %v2051 = vpop.f32.mrf.mxu0
        %v2052 = vadd.f32 %v2015, %v2051
        %v2053 = vand.u32 %v1780, 4294901760
        %2054 = vmatmul.f32.gmra.mxu0 %v2053
        %v2055 = vpop.f32.mrf.mxu0
        %v2056 = vadd.f32 %v2019, %v2055
        %v2057 = vand.u32 %v1783, 4294901760
        %2058 = vmatmul.f32.gmra.mxu0 %v2057
        %v2059 = vpop.f32.mrf.mxu0
        %v2060 = vadd.f32 %v2023, %v2059
        %v2061 = vand.u32 %v1786, 4294901760
        %2062 = vmatmul.f32.gmra.mxu0 %v2061
        %v2063 = vpop.f32.mrf.mxu0
        %v2064 = vadd.f32 %v2027, %v2063
        %2065 = vdwg.mxu0
        %s2066 = scalar_lea.vmem [#allocation2], 64
        %2067 = vst.msk [vmem:[%s2066] sm:$0xff] %vm476, %v2052
        %2068 = vst.msk [vmem:[%s2066 + $0x8] sm:$0xff] %vm476, %v2056
        %2069 = vst.msk [vmem:[%s2066 + $0x10] sm:$0xff] %vm476, %v2060
        %2070 = vst.msk [vmem:[%s2066 + $0x18] sm:$0xff] %vm476, %v2064
        %v2071 = vld [vmem:[%s344] sm:$0xff]
        %v2072 = vld [vmem:[%s344 + $0x8] sm:$0xff]
        %v2073 = vld [vmem:[%s344 + $0x10] sm:$0xff]
        %v2074 = vld [vmem:[%s344 + $0x18] sm:$0xff]
        %v2076 = vsel %vm476, %v2071, 0
        %v2079 = vsel %vm476, %v2072, 0
        %v2082 = vsel %vm476, %v2073, 0
        %v2085 = vsel %vm476, %v2074, 0
        %2087 = vmatpush.msra.mxu0 0.0
        %2088 = vmatpush.msra.mxu0 0.0
        %2089 = vmatpush.msra.mxu0 0.0
        %2090 = vmatpush.msra.mxu0 0.0
        %2091 = vmatpush.msra.mxu0 0.0
        %2092 = vmatpush.msra.mxu0 0.0
        %2093 = vmatpush.msra.mxu0 0.0
        %2094 = vmatpush.msra.mxu0 0.0
        %2095 = vmatpush.msra.mxu0 0.0
        %2096 = vmatpush.msra.mxu0 0.0
        %2097 = vmatpush.msra.mxu0 0.0
        %2098 = vmatpush.msra.mxu0 0.0
        %v2099 = vand.u32 %v1173, 4294901760
        %2100 = vmatpush.msra.mxu0 %v2099
        %v2101 = vand.u32 %v1169, 4294901760
        %2102 = vmatpush.msra.mxu0 %v2101
        %v2103 = vand.u32 %v1165, 4294901760
        %2104 = vmatpush.msra.mxu0 %v2103
        %v2105 = vand.u32 %v1161, 4294901760
        %2106 = vmatpush.msra.mxu0 %v2105
        %v2107 = vand.u32 %v2076, 4294901760
        %v2108 = vsub.f32 %v2076, %v2107
        %v2109 = vand.u32 %v2108, 4294901760
        %v2110 = vsub.f32 %v2108, %v2109
        %v2111 = vand.u32 %v2110, 4294901760
        %2112 = vmatmul.f32.gmra.mxu0 %v2111
        %v2113 = vpop.f32.mrf.mxu0
        %v2114 = vadd.f32 0.0, %v2113
        %v2115 = vand.u32 %v2079, 4294901760
        %v2116 = vsub.f32 %v2079, %v2115
        %v2117 = vand.u32 %v2116, 4294901760
        %v2118 = vsub.f32 %v2116, %v2117
        %v2119 = vand.u32 %v2118, 4294901760
        %2120 = vmatmul.f32.gmra.mxu0 %v2119
        %v2121 = vpop.f32.mrf.mxu0
        %v2122 = vadd.f32 0.0, %v2121
        %v2123 = vand.u32 %v2082, 4294901760
        %v2124 = vsub.f32 %v2082, %v2123
        %v2125 = vand.u32 %v2124, 4294901760
        %v2126 = vsub.f32 %v2124, %v2125
        %v2127 = vand.u32 %v2126, 4294901760
        %2128 = vmatmul.f32.gmra.mxu0 %v2127
        %v2129 = vpop.f32.mrf.mxu0
        %v2130 = vadd.f32 0.0, %v2129
        %v2131 = vand.u32 %v2085, 4294901760
        %v2132 = vsub.f32 %v2085, %v2131
        %v2133 = vand.u32 %v2132, 4294901760
        %v2134 = vsub.f32 %v2132, %v2133
        %v2135 = vand.u32 %v2134, 4294901760
        %2136 = vmatmul.f32.gmra.mxu0 %v2135
        %v2137 = vpop.f32.mrf.mxu0
        %v2138 = vadd.f32 0.0, %v2137
        %2139 = vdwg.mxu0
        %2140 = vmatpush.msra.mxu0 0.0
        %2141 = vmatpush.msra.mxu0 0.0
        %2142 = vmatpush.msra.mxu0 0.0
        %2143 = vmatpush.msra.mxu0 0.0
        %2144 = vmatpush.msra.mxu0 0.0
        %2145 = vmatpush.msra.mxu0 0.0
        %2146 = vmatpush.msra.mxu0 0.0
        %2147 = vmatpush.msra.mxu0 0.0
        %2148 = vmatpush.msra.mxu0 0.0
        %2149 = vmatpush.msra.mxu0 0.0
        %2150 = vmatpush.msra.mxu0 0.0
        %2151 = vmatpush.msra.mxu0 0.0
        %v2152 = vand.u32 %v1173, 4294901760
        %v2153 = vsub.f32 %v1173, %v2152
        %v2154 = vand.u32 %v2153, 4294901760
        %v2155 = vsub.f32 %v2153, %v2154
        %v2156 = vand.u32 %v2155, 4294901760
        %2157 = vmatpush.msra.mxu0 %v2156
        %v2158 = vand.u32 %v1169, 4294901760
        %v2159 = vsub.f32 %v1169, %v2158
        %v2160 = vand.u32 %v2159, 4294901760
        %v2161 = vsub.f32 %v2159, %v2160
        %v2162 = vand.u32 %v2161, 4294901760
        %2163 = vmatpush.msra.mxu0 %v2162
        %v2164 = vand.u32 %v1165, 4294901760
        %v2165 = vsub.f32 %v1165, %v2164
        %v2166 = vand.u32 %v2165, 4294901760
        %v2167 = vsub.f32 %v2165, %v2166
        %v2168 = vand.u32 %v2167, 4294901760
        %2169 = vmatpush.msra.mxu0 %v2168
        %v2170 = vand.u32 %v1161, 4294901760
        %v2171 = vsub.f32 %v1161, %v2170
        %v2172 = vand.u32 %v2171, 4294901760
        %v2173 = vsub.f32 %v2171, %v2172
        %v2174 = vand.u32 %v2173, 4294901760
        %2175 = vmatpush.msra.mxu0 %v2174
        %v2176 = vand.u32 %v2076, 4294901760
        %2177 = vmatmul.f32.gmra.mxu0 %v2176
        %v2178 = vpop.f32.mrf.mxu0
        %v2179 = vadd.f32 %v2114, %v2178
        %v2180 = vand.u32 %v2079, 4294901760
        %2181 = vmatmul.f32.gmra.mxu0 %v2180
        %v2182 = vpop.f32.mrf.mxu0
        %v2183 = vadd.f32 %v2122, %v2182
        %v2184 = vand.u32 %v2082, 4294901760
        %2185 = vmatmul.f32.gmra.mxu0 %v2184
        %v2186 = vpop.f32.mrf.mxu0
        %v2187 = vadd.f32 %v2130, %v2186
        %v2188 = vand.u32 %v2085, 4294901760
        %2189 = vmatmul.f32.gmra.mxu0 %v2188
        %v2190 = vpop.f32.mrf.mxu0
        %v2191 = vadd.f32 %v2138, %v2190
        %2192 = vdwg.mxu0
        %2193 = vmatpush.msra.mxu0 0.0
        %2194 = vmatpush.msra.mxu0 0.0
        %2195 = vmatpush.msra.mxu0 0.0
        %2196 = vmatpush.msra.mxu0 0.0
        %2197 = vmatpush.msra.mxu0 0.0
        %2198 = vmatpush.msra.mxu0 0.0
        %2199 = vmatpush.msra.mxu0 0.0
        %2200 = vmatpush.msra.mxu0 0.0
        %2201 = vmatpush.msra.mxu0 0.0
        %2202 = vmatpush.msra.mxu0 0.0
        %2203 = vmatpush.msra.mxu0 0.0
        %2204 = vmatpush.msra.mxu0 0.0
        %v2205 = vand.u32 %v1173, 4294901760
        %v2206 = vsub.f32 %v1173, %v2205
        %2207 = vmatpush.msra.mxu0 %v2206
        %v2208 = vand.u32 %v1169, 4294901760
        %v2209 = vsub.f32 %v1169, %v2208
        %2210 = vmatpush.msra.mxu0 %v2209
        %v2211 = vand.u32 %v1165, 4294901760
        %v2212 = vsub.f32 %v1165, %v2211
        %2213 = vmatpush.msra.mxu0 %v2212
        %v2214 = vand.u32 %v1161, 4294901760
        %v2215 = vsub.f32 %v1161, %v2214
        %2216 = vmatpush.msra.mxu0 %v2215
        %v2217 = vand.u32 %v2076, 4294901760
        %v2218 = vsub.f32 %v2076, %v2217
        %2219 = vmatmul.f32.gmra.mxu0 %v2218
        %v2220 = vpop.f32.mrf.mxu0
        %v2221 = vadd.f32 %v2179, %v2220
        %v2222 = vand.u32 %v2079, 4294901760
        %v2223 = vsub.f32 %v2079, %v2222
        %2224 = vmatmul.f32.gmra.mxu0 %v2223
        %v2225 = vpop.f32.mrf.mxu0
        %v2226 = vadd.f32 %v2183, %v2225
        %v2227 = vand.u32 %v2082, 4294901760
        %v2228 = vsub.f32 %v2082, %v2227
        %2229 = vmatmul.f32.gmra.mxu0 %v2228
        %v2230 = vpop.f32.mrf.mxu0
        %v2231 = vadd.f32 %v2187, %v2230
        %v2232 = vand.u32 %v2085, 4294901760
        %v2233 = vsub.f32 %v2085, %v2232
        %2234 = vmatmul.f32.gmra.mxu0 %v2233
        %v2235 = vpop.f32.mrf.mxu0
        %v2236 = vadd.f32 %v2191, %v2235
        %2237 = vdwg.mxu0
        %2238 = vmatpush.msra.mxu0 0.0
        %2239 = vmatpush.msra.mxu0 0.0
        %2240 = vmatpush.msra.mxu0 0.0
        %2241 = vmatpush.msra.mxu0 0.0
        %2242 = vmatpush.msra.mxu0 0.0
        %2243 = vmatpush.msra.mxu0 0.0
        %2244 = vmatpush.msra.mxu0 0.0
        %2245 = vmatpush.msra.mxu0 0.0
        %2246 = vmatpush.msra.mxu0 0.0
        %2247 = vmatpush.msra.mxu0 0.0
        %2248 = vmatpush.msra.mxu0 0.0
        %2249 = vmatpush.msra.mxu0 0.0
        %v2250 = vand.u32 %v1173, 4294901760
        %2251 = vmatpush.msra.mxu0 %v2250
        %v2252 = vand.u32 %v1169, 4294901760
        %2253 = vmatpush.msra.mxu0 %v2252
        %v2254 = vand.u32 %v1165, 4294901760
        %2255 = vmatpush.msra.mxu0 %v2254
        %v2256 = vand.u32 %v1161, 4294901760
        %2257 = vmatpush.msra.mxu0 %v2256
        %v2258 = vand.u32 %v2076, 4294901760
        %v2259 = vsub.f32 %v2076, %v2258
        %v2260 = vand.u32 %v2259, 4294901760
        %2261 = vmatmul.f32.gmra.mxu0 %v2260
        %v2262 = vpop.f32.mrf.mxu0
        %v2263 = vadd.f32 %v2221, %v2262
        %v2264 = vand.u32 %v2079, 4294901760
        %v2265 = vsub.f32 %v2079, %v2264
        %v2266 = vand.u32 %v2265, 4294901760
        %2267 = vmatmul.f32.gmra.mxu0 %v2266
        %v2268 = vpop.f32.mrf.mxu0
        %v2269 = vadd.f32 %v2226, %v2268
        %v2270 = vand.u32 %v2082, 4294901760
        %v2271 = vsub.f32 %v2082, %v2270
        %v2272 = vand.u32 %v2271, 4294901760
        %2273 = vmatmul.f32.gmra.mxu0 %v2272
        %v2274 = vpop.f32.mrf.mxu0
        %v2275 = vadd.f32 %v2231, %v2274
        %v2276 = vand.u32 %v2085, 4294901760
        %v2277 = vsub.f32 %v2085, %v2276
        %v2278 = vand.u32 %v2277, 4294901760
        %2279 = vmatmul.f32.gmra.mxu0 %v2278
        %v2280 = vpop.f32.mrf.mxu0
        %v2281 = vadd.f32 %v2236, %v2280
        %2282 = vdwg.mxu0
        %2283 = vmatpush.msra.mxu0 0.0
        %2284 = vmatpush.msra.mxu0 0.0
        %2285 = vmatpush.msra.mxu0 0.0
        %2286 = vmatpush.msra.mxu0 0.0
        %2287 = vmatpush.msra.mxu0 0.0
        %2288 = vmatpush.msra.mxu0 0.0
        %2289 = vmatpush.msra.mxu0 0.0
        %2290 = vmatpush.msra.mxu0 0.0
        %2291 = vmatpush.msra.mxu0 0.0
        %2292 = vmatpush.msra.mxu0 0.0
        %2293 = vmatpush.msra.mxu0 0.0
        %2294 = vmatpush.msra.mxu0 0.0
        %v2295 = vand.u32 %v1173, 4294901760
        %v2296 = vsub.f32 %v1173, %v2295
        %v2297 = vand.u32 %v2296, 4294901760
        %2298 = vmatpush.msra.mxu0 %v2297
        %v2299 = vand.u32 %v1169, 4294901760
        %v2300 = vsub.f32 %v1169, %v2299
        %v2301 = vand.u32 %v2300, 4294901760
        %2302 = vmatpush.msra.mxu0 %v2301
        %v2303 = vand.u32 %v1165, 4294901760
        %v2304 = vsub.f32 %v1165, %v2303
        %v2305 = vand.u32 %v2304, 4294901760
        %2306 = vmatpush.msra.mxu0 %v2305
        %v2307 = vand.u32 %v1161, 4294901760
        %v2308 = vsub.f32 %v1161, %v2307
        %v2309 = vand.u32 %v2308, 4294901760
        %2310 = vmatpush.msra.mxu0 %v2309
        %v2311 = vand.u32 %v2076, 4294901760
        %2312 = vmatmul.f32.gmra.mxu0 %v2311
        %v2313 = vpop.f32.mrf.mxu0
        %v2314 = vadd.f32 %v2263, %v2313
        %v2315 = vand.u32 %v2079, 4294901760
        %2316 = vmatmul.f32.gmra.mxu0 %v2315
        %v2317 = vpop.f32.mrf.mxu0
        %v2318 = vadd.f32 %v2269, %v2317
        %v2319 = vand.u32 %v2082, 4294901760
        %2320 = vmatmul.f32.gmra.mxu0 %v2319
        %v2321 = vpop.f32.mrf.mxu0
        %v2322 = vadd.f32 %v2275, %v2321
        %v2323 = vand.u32 %v2085, 4294901760
        %2324 = vmatmul.f32.gmra.mxu0 %v2323
        %v2325 = vpop.f32.mrf.mxu0
        %v2326 = vadd.f32 %v2281, %v2325
        %2327 = vdwg.mxu0
        %2328 = vmatpush.msra.mxu0 0.0
        %2329 = vmatpush.msra.mxu0 0.0
        %2330 = vmatpush.msra.mxu0 0.0
        %2331 = vmatpush.msra.mxu0 0.0
        %2332 = vmatpush.msra.mxu0 0.0
        %2333 = vmatpush.msra.mxu0 0.0
        %2334 = vmatpush.msra.mxu0 0.0
        %2335 = vmatpush.msra.mxu0 0.0
        %2336 = vmatpush.msra.mxu0 0.0
        %2337 = vmatpush.msra.mxu0 0.0
        %2338 = vmatpush.msra.mxu0 0.0
        %2339 = vmatpush.msra.mxu0 0.0
        %v2340 = vand.u32 %v1173, 4294901760
        %2341 = vmatpush.msra.mxu0 %v2340
        %v2342 = vand.u32 %v1169, 4294901760
        %2343 = vmatpush.msra.mxu0 %v2342
        %v2344 = vand.u32 %v1165, 4294901760
        %2345 = vmatpush.msra.mxu0 %v2344
        %v2346 = vand.u32 %v1161, 4294901760
        %2347 = vmatpush.msra.mxu0 %v2346
        %v2348 = vand.u32 %v2076, 4294901760
        %2349 = vmatmul.f32.gmra.mxu0 %v2348
        %v2350 = vpop.f32.mrf.mxu0
        %v2351 = vadd.f32 %v2314, %v2350
        %v2352 = vand.u32 %v2079, 4294901760
        %2353 = vmatmul.f32.gmra.mxu0 %v2352
        %v2354 = vpop.f32.mrf.mxu0
        %v2355 = vadd.f32 %v2318, %v2354
        %v2356 = vand.u32 %v2082, 4294901760
        %2357 = vmatmul.f32.gmra.mxu0 %v2356
        %v2358 = vpop.f32.mrf.mxu0
        %v2359 = vadd.f32 %v2322, %v2358
        %v2360 = vand.u32 %v2085, 4294901760
        %2361 = vmatmul.f32.gmra.mxu0 %v2360
        %v2362 = vpop.f32.mrf.mxu0
        %v2363 = vadd.f32 %v2326, %v2362
        %2364 = vdwg.mxu0
        %s2365 = scalar_lea.vmem [#allocation2], 96
        %2366 = vst.msk [vmem:[%s2365] sm:$0xff] %vm476, %v2351
        %2367 = vst.msk [vmem:[%s2365 + $0x8] sm:$0xff] %vm476, %v2355
        %2368 = vst.msk [vmem:[%s2365 + $0x10] sm:$0xff] %vm476, %v2359
        %2369 = vst.msk [vmem:[%s2365 + $0x18] sm:$0xff] %vm476, %v2363
        %v2370 = vld [vmem:[#allocation2] sm:$0xff]
        %v2371 = vld [vmem:[#allocation2 + $0x8] sm:$0xff]
        %v2372 = vld [vmem:[#allocation2 + $0x10] sm:$0xff]
        %v2373 = vld [vmem:[#allocation2 + $0x18] sm:$0xff]
        %v2374 = vld [vmem:[#allocation2 + $0x20] sm:$0xff]
        %v2375 = vld [vmem:[#allocation2 + $0x28] sm:$0xff]
        %v2376 = vld [vmem:[#allocation2 + $0x30] sm:$0xff]
        %v2377 = vld [vmem:[#allocation2 + $0x38] sm:$0xff]
        %v2378 = vld [vmem:[#allocation2 + $0x40] sm:$0xff]
        %v2379 = vld [vmem:[#allocation2 + $0x48] sm:$0xff]
        %v2380 = vld [vmem:[#allocation2 + $0x50] sm:$0xff]
        %v2381 = vld [vmem:[#allocation2 + $0x58] sm:$0xff]
        %v2382 = vld [vmem:[#allocation2 + $0x60] sm:$0xff]
        %v2383 = vld [vmem:[#allocation2 + $0x68] sm:$0xff]
        %v2384 = vld [vmem:[#allocation2 + $0x70] sm:$0xff]
        %v2385 = vld [vmem:[#allocation2 + $0x78] sm:$0xff]
        %2386 = vst.msk [vmem:[%s401] sm:$0xff] %vm476, %v2370
        %2387 = vst.msk [vmem:[%s401 + $0x8] sm:$0xff] %vm476, %v2371
        %2388 = vst.msk [vmem:[%s401 + $0x10] sm:$0xff] %vm476, %v2372
        %2389 = vst.msk [vmem:[%s401 + $0x18] sm:$0xff] %vm476, %v2373
        %2390 = vst.msk [vmem:[%s401 + $0x20] sm:$0xff] %vm476, %v2374
        %2391 = vst.msk [vmem:[%s401 + $0x28] sm:$0xff] %vm476, %v2375
        %2392 = vst.msk [vmem:[%s401 + $0x30] sm:$0xff] %vm476, %v2376
        %2393 = vst.msk [vmem:[%s401 + $0x38] sm:$0xff] %vm476, %v2377
        %2394 = vst.msk [vmem:[%s401 + $0x40] sm:$0xff] %vm476, %v2378
        %2395 = vst.msk [vmem:[%s401 + $0x48] sm:$0xff] %vm476, %v2379
        %2396 = vst.msk [vmem:[%s401 + $0x50] sm:$0xff] %vm476, %v2380
        %2397 = vst.msk [vmem:[%s401 + $0x58] sm:$0xff] %vm476, %v2381
        %2398 = vst.msk [vmem:[%s401 + $0x60] sm:$0xff] %vm476, %v2382
        %2399 = vst.msk [vmem:[%s401 + $0x68] sm:$0xff] %vm476, %v2383
        %2400 = vst.msk [vmem:[%s401 + $0x70] sm:$0xff] %vm476, %v2384
        %2401 = vst.msk [vmem:[%s401 + $0x78] sm:$0xff] %vm476, %v2385
        %p2402 = scmp.eq.s32.totalorder %s33, 3
        // Predicated region
        $region65: #{fwd.2} parent=39 // pred_check
          %p2403 = pneg %p2402
        $region66: #{fwd.2} parent=39 // pred_check_branch
          %2405 = sbr.rel (%p2403) target = $region68
        $region67: #{fwd.2} parent=39 // pred_region
          %v2406 = vld [vmem:[#allocation9] sm:$0xff]
          %v2407 = vld [vmem:[#allocation9 + $0x8] sm:$0xff]
          %v2408 = vld [vmem:[#allocation2] sm:$0xff]
          %v2409 = vld [vmem:[#allocation2 + $0x8] sm:$0xff]
          %v2410 = vld [vmem:[#allocation2 + $0x10] sm:$0xff]
          %v2411 = vld [vmem:[#allocation2 + $0x18] sm:$0xff]
          %v2413 = vsel %vm476, %v2406, 0
          %v2416 = vsel %vm476, %v2407, 0
          %2418 = vmatpush.msra.mxu0 0.0
          %2419 = vmatpush.msra.mxu0 0.0
          %2420 = vmatpush.msra.mxu0 0.0
          %2421 = vmatpush.msra.mxu0 0.0
          %2422 = vmatpush.msra.mxu0 0.0
          %2423 = vmatpush.msra.mxu0 0.0
          %2424 = vmatpush.msra.mxu0 0.0
          %2425 = vmatpush.msra.mxu0 0.0
          %2426 = vmatpush.msra.mxu0 0.0
          %2427 = vmatpush.msra.mxu0 0.0
          %2428 = vmatpush.msra.mxu0 0.0
          %2429 = vmatpush.msra.mxu0 0.0
          %v2430 = vand.u32 %v2411, 4294901760
          %2431 = vmatpush.msra.mxu0 %v2430
          %v2432 = vand.u32 %v2410, 4294901760
          %2433 = vmatpush.msra.mxu0 %v2432
          %v2434 = vand.u32 %v2409, 4294901760
          %2435 = vmatpush.msra.mxu0 %v2434
          %v2436 = vand.u32 %v2408, 4294901760
          %2437 = vmatpush.msra.mxu0 %v2436
          %v2438 = vand.u32 %v2413, 4294901760
          %v2439 = vsub.f32 %v2413, %v2438
          %v2440 = vand.u32 %v2439, 4294901760
          %v2441 = vsub.f32 %v2439, %v2440
          %v2442 = vand.u32 %v2441, 4294901760
          %2443 = vmatmul.f32.gmra.mxu0 %v2442
          %v2444 = vpop.f32.mrf.mxu0
          %v2445 = vadd.f32 0.0, %v2444
          %v2446 = vand.u32 %v2416, 4294901760
          %v2447 = vsub.f32 %v2416, %v2446
          %v2448 = vand.u32 %v2447, 4294901760
          %v2449 = vsub.f32 %v2447, %v2448
          %v2450 = vand.u32 %v2449, 4294901760
          %2451 = vmatmul.f32.gmra.mxu0 %v2450
          %v2452 = vpop.f32.mrf.mxu0
          %v2453 = vadd.f32 0.0, %v2452
          %2454 = vdwg.mxu0
          %2455 = vmatpush.msra.mxu0 0.0
          %2456 = vmatpush.msra.mxu0 0.0
          %2457 = vmatpush.msra.mxu0 0.0
          %2458 = vmatpush.msra.mxu0 0.0
          %2459 = vmatpush.msra.mxu0 0.0
          %2460 = vmatpush.msra.mxu0 0.0
          %2461 = vmatpush.msra.mxu0 0.0
          %2462 = vmatpush.msra.mxu0 0.0
          %2463 = vmatpush.msra.mxu0 0.0
          %2464 = vmatpush.msra.mxu0 0.0
          %2465 = vmatpush.msra.mxu0 0.0
          %2466 = vmatpush.msra.mxu0 0.0
          %v2467 = vand.u32 %v2411, 4294901760
          %v2468 = vsub.f32 %v2411, %v2467
          %v2469 = vand.u32 %v2468, 4294901760
          %v2470 = vsub.f32 %v2468, %v2469
          %v2471 = vand.u32 %v2470, 4294901760
          %2472 = vmatpush.msra.mxu0 %v2471
          %v2473 = vand.u32 %v2410, 4294901760
          %v2474 = vsub.f32 %v2410, %v2473
          %v2475 = vand.u32 %v2474, 4294901760
          %v2476 = vsub.f32 %v2474, %v2475
          %v2477 = vand.u32 %v2476, 4294901760
          %2478 = vmatpush.msra.mxu0 %v2477
          %v2479 = vand.u32 %v2409, 4294901760
          %v2480 = vsub.f32 %v2409, %v2479
          %v2481 = vand.u32 %v2480, 4294901760
          %v2482 = vsub.f32 %v2480, %v2481
          %v2483 = vand.u32 %v2482, 4294901760
          %2484 = vmatpush.msra.mxu0 %v2483
          %v2485 = vand.u32 %v2408, 4294901760
          %v2486 = vsub.f32 %v2408, %v2485
          %v2487 = vand.u32 %v2486, 4294901760
          %v2488 = vsub.f32 %v2486, %v2487
          %v2489 = vand.u32 %v2488, 4294901760
          %2490 = vmatpush.msra.mxu0 %v2489
          %v2491 = vand.u32 %v2413, 4294901760
          %2492 = vmatmul.f32.gmra.mxu0 %v2491
          %v2493 = vpop.f32.mrf.mxu0
          %v2494 = vadd.f32 %v2445, %v2493
          %v2495 = vand.u32 %v2416, 4294901760
          %2496 = vmatmul.f32.gmra.mxu0 %v2495
          %v2497 = vpop.f32.mrf.mxu0
          %v2498 = vadd.f32 %v2453, %v2497
          %2499 = vdwg.mxu0
          %2500 = vmatpush.msra.mxu0 0.0
          %2501 = vmatpush.msra.mxu0 0.0
          %2502 = vmatpush.msra.mxu0 0.0
          %2503 = vmatpush.msra.mxu0 0.0
          %2504 = vmatpush.msra.mxu0 0.0
          %2505 = vmatpush.msra.mxu0 0.0
          %2506 = vmatpush.msra.mxu0 0.0
          %2507 = vmatpush.msra.mxu0 0.0
          %2508 = vmatpush.msra.mxu0 0.0
          %2509 = vmatpush.msra.mxu0 0.0
          %2510 = vmatpush.msra.mxu0 0.0
          %2511 = vmatpush.msra.mxu0 0.0
          %v2512 = vand.u32 %v2411, 4294901760
          %v2513 = vsub.f32 %v2411, %v2512
          %2514 = vmatpush.msra.mxu0 %v2513
          %v2515 = vand.u32 %v2410, 4294901760
          %v2516 = vsub.f32 %v2410, %v2515
          %2517 = vmatpush.msra.mxu0 %v2516
          %v2518 = vand.u32 %v2409, 4294901760
          %v2519 = vsub.f32 %v2409, %v2518
          %2520 = vmatpush.msra.mxu0 %v2519
          %v2521 = vand.u32 %v2408, 4294901760
          %v2522 = vsub.f32 %v2408, %v2521
          %2523 = vmatpush.msra.mxu0 %v2522
          %v2524 = vand.u32 %v2413, 4294901760
          %v2525 = vsub.f32 %v2413, %v2524
          %2526 = vmatmul.f32.gmra.mxu0 %v2525
          %v2527 = vpop.f32.mrf.mxu0
          %v2528 = vadd.f32 %v2494, %v2527
          %v2529 = vand.u32 %v2416, 4294901760
          %v2530 = vsub.f32 %v2416, %v2529
          %2531 = vmatmul.f32.gmra.mxu0 %v2530
          %v2532 = vpop.f32.mrf.mxu0
          %v2533 = vadd.f32 %v2498, %v2532
          %2534 = vdwg.mxu0
          %2535 = vmatpush.msra.mxu0 0.0
          %2536 = vmatpush.msra.mxu0 0.0
          %2537 = vmatpush.msra.mxu0 0.0
          %2538 = vmatpush.msra.mxu0 0.0
          %2539 = vmatpush.msra.mxu0 0.0
          %2540 = vmatpush.msra.mxu0 0.0
          %2541 = vmatpush.msra.mxu0 0.0
          %2542 = vmatpush.msra.mxu0 0.0
          %2543 = vmatpush.msra.mxu0 0.0
          %2544 = vmatpush.msra.mxu0 0.0
          %2545 = vmatpush.msra.mxu0 0.0
          %2546 = vmatpush.msra.mxu0 0.0
          %v2547 = vand.u32 %v2411, 4294901760
          %2548 = vmatpush.msra.mxu0 %v2547
          %v2549 = vand.u32 %v2410, 4294901760
          %2550 = vmatpush.msra.mxu0 %v2549
          %v2551 = vand.u32 %v2409, 4294901760
          %2552 = vmatpush.msra.mxu0 %v2551
          %v2553 = vand.u32 %v2408, 4294901760
          %2554 = vmatpush.msra.mxu0 %v2553
          %v2555 = vand.u32 %v2413, 4294901760
          %v2556 = vsub.f32 %v2413, %v2555
          %v2557 = vand.u32 %v2556, 4294901760
          %2558 = vmatmul.f32.gmra.mxu0 %v2557
          %v2559 = vpop.f32.mrf.mxu0
          %v2560 = vadd.f32 %v2528, %v2559
          %v2561 = vand.u32 %v2416, 4294901760
          %v2562 = vsub.f32 %v2416, %v2561
          %v2563 = vand.u32 %v2562, 4294901760
          %2564 = vmatmul.f32.gmra.mxu0 %v2563
          %v2565 = vpop.f32.mrf.mxu0
          %v2566 = vadd.f32 %v2533, %v2565
          %2567 = vdwg.mxu0
          %2568 = vmatpush.msra.mxu0 0.0
          %2569 = vmatpush.msra.mxu0 0.0
          %2570 = vmatpush.msra.mxu0 0.0
          %2571 = vmatpush.msra.mxu0 0.0
          %2572 = vmatpush.msra.mxu0 0.0
          %2573 = vmatpush.msra.mxu0 0.0
          %2574 = vmatpush.msra.mxu0 0.0
          %2575 = vmatpush.msra.mxu0 0.0
          %2576 = vmatpush.msra.mxu0 0.0
          %2577 = vmatpush.msra.mxu0 0.0
          %2578 = vmatpush.msra.mxu0 0.0
          %2579 = vmatpush.msra.mxu0 0.0
          %v2580 = vand.u32 %v2411, 4294901760
          %v2581 = vsub.f32 %v2411, %v2580
          %v2582 = vand.u32 %v2581, 4294901760
          %2583 = vmatpush.msra.mxu0 %v2582
          %v2584 = vand.u32 %v2410, 4294901760
          %v2585 = vsub.f32 %v2410, %v2584
          %v2586 = vand.u32 %v2585, 4294901760
          %2587 = vmatpush.msra.mxu0 %v2586
          %v2588 = vand.u32 %v2409, 4294901760
          %v2589 = vsub.f32 %v2409, %v2588
          %v2590 = vand.u32 %v2589, 4294901760
          %2591 = vmatpush.msra.mxu0 %v2590
          %v2592 = vand.u32 %v2408, 4294901760
          %v2593 = vsub.f32 %v2408, %v2592
          %v2594 = vand.u32 %v2593, 4294901760
          %2595 = vmatpush.msra.mxu0 %v2594
          %v2596 = vand.u32 %v2413, 4294901760
          %2597 = vmatmul.f32.gmra.mxu0 %v2596
          %v2598 = vpop.f32.mrf.mxu0
          %v2599 = vadd.f32 %v2560, %v2598
          %v2600 = vand.u32 %v2416, 4294901760
          %2601 = vmatmul.f32.gmra.mxu0 %v2600
          %v2602 = vpop.f32.mrf.mxu0
          %v2603 = vadd.f32 %v2566, %v2602
          %2604 = vdwg.mxu0
          %2605 = vmatpush.msra.mxu0 0.0
          %2606 = vmatpush.msra.mxu0 0.0
          %2607 = vmatpush.msra.mxu0 0.0
          %2608 = vmatpush.msra.mxu0 0.0
          %2609 = vmatpush.msra.mxu0 0.0
          %2610 = vmatpush.msra.mxu0 0.0
          %2611 = vmatpush.msra.mxu0 0.0
          %2612 = vmatpush.msra.mxu0 0.0
          %2613 = vmatpush.msra.mxu0 0.0
          %2614 = vmatpush.msra.mxu0 0.0
          %2615 = vmatpush.msra.mxu0 0.0
          %2616 = vmatpush.msra.mxu0 0.0
          %v2617 = vand.u32 %v2411, 4294901760
          %2618 = vmatpush.msra.mxu0 %v2617
          %v2619 = vand.u32 %v2410, 4294901760
          %2620 = vmatpush.msra.mxu0 %v2619
          %v2621 = vand.u32 %v2409, 4294901760
          %2622 = vmatpush.msra.mxu0 %v2621
          %v2623 = vand.u32 %v2408, 4294901760
          %2624 = vmatpush.msra.mxu0 %v2623
          %v2625 = vand.u32 %v2413, 4294901760
          %2626 = vmatmul.f32.gmra.mxu0 %v2625
          %v2627 = vpop.f32.mrf.mxu0
          %v2628 = vadd.f32 %v2599, %v2627
          %v2629 = vand.u32 %v2416, 4294901760
          %2630 = vmatmul.f32.gmra.mxu0 %v2629
          %v2631 = vpop.f32.mrf.mxu0
          %v2632 = vadd.f32 %v2603, %v2631
          %2633 = vdwg.mxu0
          %v2634 = vld [vmem:[#allocation11] sm:$0xff]
          %v2635 = vld [vmem:[#allocation11 + $0x8] sm:$0xff]
          %v2636 = vld [vmem:[#allocation11 + $0x10] sm:$0xff]
          %v2637 = vld [vmem:[#allocation11 + $0x18] sm:$0xff]
          %v2639 = vsel %vm476, %v2628, 0
          %v2642 = vsel %vm476, %v2632, 0
          %2644 = vmatpush.msra.mxu0 0.0
          %2645 = vmatpush.msra.mxu0 0.0
          %2646 = vmatpush.msra.mxu0 0.0
          %2647 = vmatpush.msra.mxu0 0.0
          %2648 = vmatpush.msra.mxu0 0.0
          %2649 = vmatpush.msra.mxu0 0.0
          %2650 = vmatpush.msra.mxu0 0.0
          %2651 = vmatpush.msra.mxu0 0.0
          %2652 = vmatpush.msra.mxu0 0.0
          %2653 = vmatpush.msra.mxu0 0.0
          %2654 = vmatpush.msra.mxu0 0.0
          %2655 = vmatpush.msra.mxu0 0.0
          %v2656 = vand.u32 %v2637, 4294901760
          %2657 = vmatpush.msra.mxu0 %v2656
          %v2658 = vand.u32 %v2636, 4294901760
          %2659 = vmatpush.msra.mxu0 %v2658
          %v2660 = vand.u32 %v2635, 4294901760
          %2661 = vmatpush.msra.mxu0 %v2660
          %v2662 = vand.u32 %v2634, 4294901760
          %2663 = vmatpush.msra.mxu0 %v2662
          %v2664 = vand.u32 %v2639, 4294901760
          %v2665 = vsub.f32 %v2639, %v2664
          %v2666 = vand.u32 %v2665, 4294901760
          %v2667 = vsub.f32 %v2665, %v2666
          %v2668 = vand.u32 %v2667, 4294901760
          %2669 = vmatmul.f32.gmra.mxu0 %v2668
          %v2670 = vpop.f32.mrf.mxu0
          %v2671 = vadd.f32 0.0, %v2670
          %v2672 = vand.u32 %v2642, 4294901760
          %v2673 = vsub.f32 %v2642, %v2672
          %v2674 = vand.u32 %v2673, 4294901760
          %v2675 = vsub.f32 %v2673, %v2674
          %v2676 = vand.u32 %v2675, 4294901760
          %2677 = vmatmul.f32.gmra.mxu0 %v2676
          %v2678 = vpop.f32.mrf.mxu0
          %v2679 = vadd.f32 0.0, %v2678
          %2680 = vdwg.mxu0
          %2681 = vmatpush.msra.mxu0 0.0
          %2682 = vmatpush.msra.mxu0 0.0
          %2683 = vmatpush.msra.mxu0 0.0
          %2684 = vmatpush.msra.mxu0 0.0
          %2685 = vmatpush.msra.mxu0 0.0
          %2686 = vmatpush.msra.mxu0 0.0
          %2687 = vmatpush.msra.mxu0 0.0
          %2688 = vmatpush.msra.mxu0 0.0
          %2689 = vmatpush.msra.mxu0 0.0
          %2690 = vmatpush.msra.mxu0 0.0
          %2691 = vmatpush.msra.mxu0 0.0
          %2692 = vmatpush.msra.mxu0 0.0
          %v2693 = vand.u32 %v2637, 4294901760
          %v2694 = vsub.f32 %v2637, %v2693
          %v2695 = vand.u32 %v2694, 4294901760
          %v2696 = vsub.f32 %v2694, %v2695
          %v2697 = vand.u32 %v2696, 4294901760
          %2698 = vmatpush.msra.mxu0 %v2697
          %v2699 = vand.u32 %v2636, 4294901760
          %v2700 = vsub.f32 %v2636, %v2699
          %v2701 = vand.u32 %v2700, 4294901760
          %v2702 = vsub.f32 %v2700, %v2701
          %v2703 = vand.u32 %v2702, 4294901760
          %2704 = vmatpush.msra.mxu0 %v2703
          %v2705 = vand.u32 %v2635, 4294901760
          %v2706 = vsub.f32 %v2635, %v2705
          %v2707 = vand.u32 %v2706, 4294901760
          %v2708 = vsub.f32 %v2706, %v2707
          %v2709 = vand.u32 %v2708, 4294901760
          %2710 = vmatpush.msra.mxu0 %v2709
          %v2711 = vand.u32 %v2634, 4294901760
          %v2712 = vsub.f32 %v2634, %v2711
          %v2713 = vand.u32 %v2712, 4294901760
          %v2714 = vsub.f32 %v2712, %v2713
          %v2715 = vand.u32 %v2714, 4294901760
          %2716 = vmatpush.msra.mxu0 %v2715
          %v2717 = vand.u32 %v2639, 4294901760
          %2718 = vmatmul.f32.gmra.mxu0 %v2717
          %v2719 = vpop.f32.mrf.mxu0
          %v2720 = vadd.f32 %v2671, %v2719
          %v2721 = vand.u32 %v2642, 4294901760
          %2722 = vmatmul.f32.gmra.mxu0 %v2721
          %v2723 = vpop.f32.mrf.mxu0
          %v2724 = vadd.f32 %v2679, %v2723
          %2725 = vdwg.mxu0
          %2726 = vmatpush.msra.mxu0 0.0
          %2727 = vmatpush.msra.mxu0 0.0
          %2728 = vmatpush.msra.mxu0 0.0
          %2729 = vmatpush.msra.mxu0 0.0
          %2730 = vmatpush.msra.mxu0 0.0
          %2731 = vmatpush.msra.mxu0 0.0
          %2732 = vmatpush.msra.mxu0 0.0
          %2733 = vmatpush.msra.mxu0 0.0
          %2734 = vmatpush.msra.mxu0 0.0
          %2735 = vmatpush.msra.mxu0 0.0
          %2736 = vmatpush.msra.mxu0 0.0
          %2737 = vmatpush.msra.mxu0 0.0
          %v2738 = vand.u32 %v2637, 4294901760
          %v2739 = vsub.f32 %v2637, %v2738
          %2740 = vmatpush.msra.mxu0 %v2739
          %v2741 = vand.u32 %v2636, 4294901760
          %v2742 = vsub.f32 %v2636, %v2741
          %2743 = vmatpush.msra.mxu0 %v2742
          %v2744 = vand.u32 %v2635, 4294901760
          %v2745 = vsub.f32 %v2635, %v2744
          %2746 = vmatpush.msra.mxu0 %v2745
          %v2747 = vand.u32 %v2634, 4294901760
          %v2748 = vsub.f32 %v2634, %v2747
          %2749 = vmatpush.msra.mxu0 %v2748
          %v2750 = vand.u32 %v2639, 4294901760
          %v2751 = vsub.f32 %v2639, %v2750
          %2752 = vmatmul.f32.gmra.mxu0 %v2751
          %v2753 = vpop.f32.mrf.mxu0
          %v2754 = vadd.f32 %v2720, %v2753
          %v2755 = vand.u32 %v2642, 4294901760
          %v2756 = vsub.f32 %v2642, %v2755
          %2757 = vmatmul.f32.gmra.mxu0 %v2756
          %v2758 = vpop.f32.mrf.mxu0
          %v2759 = vadd.f32 %v2724, %v2758
          %2760 = vdwg.mxu0
          %2761 = vmatpush.msra.mxu0 0.0
          %2762 = vmatpush.msra.mxu0 0.0
          %2763 = vmatpush.msra.mxu0 0.0
          %2764 = vmatpush.msra.mxu0 0.0
          %2765 = vmatpush.msra.mxu0 0.0
          %2766 = vmatpush.msra.mxu0 0.0
          %2767 = vmatpush.msra.mxu0 0.0
          %2768 = vmatpush.msra.mxu0 0.0
          %2769 = vmatpush.msra.mxu0 0.0
          %2770 = vmatpush.msra.mxu0 0.0
          %2771 = vmatpush.msra.mxu0 0.0
          %2772 = vmatpush.msra.mxu0 0.0
          %v2773 = vand.u32 %v2637, 4294901760
          %2774 = vmatpush.msra.mxu0 %v2773
          %v2775 = vand.u32 %v2636, 4294901760
          %2776 = vmatpush.msra.mxu0 %v2775
          %v2777 = vand.u32 %v2635, 4294901760
          %2778 = vmatpush.msra.mxu0 %v2777
          %v2779 = vand.u32 %v2634, 4294901760
          %2780 = vmatpush.msra.mxu0 %v2779
          %v2781 = vand.u32 %v2639, 4294901760
          %v2782 = vsub.f32 %v2639, %v2781
          %v2783 = vand.u32 %v2782, 4294901760
          %2784 = vmatmul.f32.gmra.mxu0 %v2783
          %v2785 = vpop.f32.mrf.mxu0
          %v2786 = vadd.f32 %v2754, %v2785
          %v2787 = vand.u32 %v2642, 4294901760
          %v2788 = vsub.f32 %v2642, %v2787
          %v2789 = vand.u32 %v2788, 4294901760
          %2790 = vmatmul.f32.gmra.mxu0 %v2789
          %v2791 = vpop.f32.mrf.mxu0
          %v2792 = vadd.f32 %v2759, %v2791
          %2793 = vdwg.mxu0
          %2794 = vmatpush.msra.mxu0 0.0
          %2795 = vmatpush.msra.mxu0 0.0
          %2796 = vmatpush.msra.mxu0 0.0
          %2797 = vmatpush.msra.mxu0 0.0
          %2798 = vmatpush.msra.mxu0 0.0
          %2799 = vmatpush.msra.mxu0 0.0
          %2800 = vmatpush.msra.mxu0 0.0
          %2801 = vmatpush.msra.mxu0 0.0
          %2802 = vmatpush.msra.mxu0 0.0
          %2803 = vmatpush.msra.mxu0 0.0
          %2804 = vmatpush.msra.mxu0 0.0
          %2805 = vmatpush.msra.mxu0 0.0
          %v2806 = vand.u32 %v2637, 4294901760
          %v2807 = vsub.f32 %v2637, %v2806
          %v2808 = vand.u32 %v2807, 4294901760
          %2809 = vmatpush.msra.mxu0 %v2808
          %v2810 = vand.u32 %v2636, 4294901760
          %v2811 = vsub.f32 %v2636, %v2810
          %v2812 = vand.u32 %v2811, 4294901760
          %2813 = vmatpush.msra.mxu0 %v2812
          %v2814 = vand.u32 %v2635, 4294901760
          %v2815 = vsub.f32 %v2635, %v2814
          %v2816 = vand.u32 %v2815, 4294901760
          %2817 = vmatpush.msra.mxu0 %v2816
          %v2818 = vand.u32 %v2634, 4294901760
          %v2819 = vsub.f32 %v2634, %v2818
          %v2820 = vand.u32 %v2819, 4294901760
          %2821 = vmatpush.msra.mxu0 %v2820
          %v2822 = vand.u32 %v2639, 4294901760
          %2823 = vmatmul.f32.gmra.mxu0 %v2822
          %v2824 = vpop.f32.mrf.mxu0
          %v2825 = vadd.f32 %v2786, %v2824
          %v2826 = vand.u32 %v2642, 4294901760
          %2827 = vmatmul.f32.gmra.mxu0 %v2826
          %v2828 = vpop.f32.mrf.mxu0
          %v2829 = vadd.f32 %v2792, %v2828
          %2830 = vdwg.mxu0
          %2831 = vmatpush.msra.mxu0 0.0
          %2832 = vmatpush.msra.mxu0 0.0
          %2833 = vmatpush.msra.mxu0 0.0
          %2834 = vmatpush.msra.mxu0 0.0
          %2835 = vmatpush.msra.mxu0 0.0
          %2836 = vmatpush.msra.mxu0 0.0
          %2837 = vmatpush.msra.mxu0 0.0
          %2838 = vmatpush.msra.mxu0 0.0
          %2839 = vmatpush.msra.mxu0 0.0
          %2840 = vmatpush.msra.mxu0 0.0
          %2841 = vmatpush.msra.mxu0 0.0
          %2842 = vmatpush.msra.mxu0 0.0
          %v2843 = vand.u32 %v2637, 4294901760
          %2844 = vmatpush.msra.mxu0 %v2843
          %v2845 = vand.u32 %v2636, 4294901760
          %2846 = vmatpush.msra.mxu0 %v2845
          %v2847 = vand.u32 %v2635, 4294901760
          %2848 = vmatpush.msra.mxu0 %v2847
          %v2849 = vand.u32 %v2634, 4294901760
          %2850 = vmatpush.msra.mxu0 %v2849
          %v2851 = vand.u32 %v2639, 4294901760
          %2852 = vmatmul.f32.gmra.mxu0 %v2851
          %v2853 = vpop.f32.mrf.mxu0
          %v2854 = vadd.f32 %v2825, %v2853
          %v2855 = vand.u32 %v2642, 4294901760
          %2856 = vmatmul.f32.gmra.mxu0 %v2855
          %v2857 = vpop.f32.mrf.mxu0
          %v2858 = vadd.f32 %v2829, %v2857
          %2859 = vdwg.mxu0
          %vm2860 = vcmask 130048
          %2861 = vst.msk [vmem:[%s417] sm:$0xff] %vm2860, %v2854
          %2862 = vst.msk [vmem:[%s417 + $0x8] sm:$0xff] %vm2860, %v2858
          %v2863 = vld [vmem:[#allocation9] sm:$0xff]
          %v2864 = vld [vmem:[#allocation9 + $0x8] sm:$0xff]
          %v2865 = vld [vmem:[%s1767] sm:$0xff]
          %v2866 = vld [vmem:[%s1767 + $0x8] sm:$0xff]
          %v2867 = vld [vmem:[%s1767 + $0x10] sm:$0xff]
          %v2868 = vld [vmem:[%s1767 + $0x18] sm:$0xff]
          %v2870 = vsel %vm476, %v2863, 0
          %v2873 = vsel %vm476, %v2864, 0
          %2875 = vmatpush.msra.mxu0 0.0
          %2876 = vmatpush.msra.mxu0 0.0
          %2877 = vmatpush.msra.mxu0 0.0
          %2878 = vmatpush.msra.mxu0 0.0
          %2879 = vmatpush.msra.mxu0 0.0
          %2880 = vmatpush.msra.mxu0 0.0
          %2881 = vmatpush.msra.mxu0 0.0
          %2882 = vmatpush.msra.mxu0 0.0
          %2883 = vmatpush.msra.mxu0 0.0
          %2884 = vmatpush.msra.mxu0 0.0
          %2885 = vmatpush.msra.mxu0 0.0
          %2886 = vmatpush.msra.mxu0 0.0
          %v2887 = vand.u32 %v2868, 4294901760
          %2888 = vmatpush.msra.mxu0 %v2887
          %v2889 = vand.u32 %v2867, 4294901760
          %2890 = vmatpush.msra.mxu0 %v2889
          %v2891 = vand.u32 %v2866, 4294901760
          %2892 = vmatpush.msra.mxu0 %v2891
          %v2893 = vand.u32 %v2865, 4294901760
          %2894 = vmatpush.msra.mxu0 %v2893
          %v2895 = vand.u32 %v2870, 4294901760
          %v2896 = vsub.f32 %v2870, %v2895
          %v2897 = vand.u32 %v2896, 4294901760
          %v2898 = vsub.f32 %v2896, %v2897
          %v2899 = vand.u32 %v2898, 4294901760
          %2900 = vmatmul.f32.gmra.mxu0 %v2899
          %v2901 = vpop.f32.mrf.mxu0
          %v2902 = vadd.f32 0.0, %v2901
          %v2903 = vand.u32 %v2873, 4294901760
          %v2904 = vsub.f32 %v2873, %v2903
          %v2905 = vand.u32 %v2904, 4294901760
          %v2906 = vsub.f32 %v2904, %v2905
          %v2907 = vand.u32 %v2906, 4294901760
          %2908 = vmatmul.f32.gmra.mxu0 %v2907
          %v2909 = vpop.f32.mrf.mxu0
          %v2910 = vadd.f32 0.0, %v2909
          %2911 = vdwg.mxu0
          %2912 = vmatpush.msra.mxu0 0.0
          %2913 = vmatpush.msra.mxu0 0.0
          %2914 = vmatpush.msra.mxu0 0.0
          %2915 = vmatpush.msra.mxu0 0.0
          %2916 = vmatpush.msra.mxu0 0.0
          %2917 = vmatpush.msra.mxu0 0.0
          %2918 = vmatpush.msra.mxu0 0.0
          %2919 = vmatpush.msra.mxu0 0.0
          %2920 = vmatpush.msra.mxu0 0.0
          %2921 = vmatpush.msra.mxu0 0.0
          %2922 = vmatpush.msra.mxu0 0.0
          %2923 = vmatpush.msra.mxu0 0.0
          %v2924 = vand.u32 %v2868, 4294901760
          %v2925 = vsub.f32 %v2868, %v2924
          %v2926 = vand.u32 %v2925, 4294901760
          %v2927 = vsub.f32 %v2925, %v2926
          %v2928 = vand.u32 %v2927, 4294901760
          %2929 = vmatpush.msra.mxu0 %v2928
          %v2930 = vand.u32 %v2867, 4294901760
          %v2931 = vsub.f32 %v2867, %v2930
          %v2932 = vand.u32 %v2931, 4294901760
          %v2933 = vsub.f32 %v2931, %v2932
          %v2934 = vand.u32 %v2933, 4294901760
          %2935 = vmatpush.msra.mxu0 %v2934
          %v2936 = vand.u32 %v2866, 4294901760
          %v2937 = vsub.f32 %v2866, %v2936
          %v2938 = vand.u32 %v2937, 4294901760
          %v2939 = vsub.f32 %v2937, %v2938
          %v2940 = vand.u32 %v2939, 4294901760
          %2941 = vmatpush.msra.mxu0 %v2940
          %v2942 = vand.u32 %v2865, 4294901760
          %v2943 = vsub.f32 %v2865, %v2942
          %v2944 = vand.u32 %v2943, 4294901760
          %v2945 = vsub.f32 %v2943, %v2944
          %v2946 = vand.u32 %v2945, 4294901760
          %2947 = vmatpush.msra.mxu0 %v2946
          %v2948 = vand.u32 %v2870, 4294901760
          %2949 = vmatmul.f32.gmra.mxu0 %v2948
          %v2950 = vpop.f32.mrf.mxu0
          %v2951 = vadd.f32 %v2902, %v2950
          %v2952 = vand.u32 %v2873, 4294901760
          %2953 = vmatmul.f32.gmra.mxu0 %v2952
          %v2954 = vpop.f32.mrf.mxu0
          %v2955 = vadd.f32 %v2910, %v2954
          %2956 = vdwg.mxu0
          %2957 = vmatpush.msra.mxu0 0.0
          %2958 = vmatpush.msra.mxu0 0.0
          %2959 = vmatpush.msra.mxu0 0.0
          %2960 = vmatpush.msra.mxu0 0.0
          %2961 = vmatpush.msra.mxu0 0.0
          %2962 = vmatpush.msra.mxu0 0.0
          %2963 = vmatpush.msra.mxu0 0.0
          %2964 = vmatpush.msra.mxu0 0.0
          %2965 = vmatpush.msra.mxu0 0.0
          %2966 = vmatpush.msra.mxu0 0.0
          %2967 = vmatpush.msra.mxu0 0.0
          %2968 = vmatpush.msra.mxu0 0.0
          %v2969 = vand.u32 %v2868, 4294901760
          %v2970 = vsub.f32 %v2868, %v2969
          %2971 = vmatpush.msra.mxu0 %v2970
          %v2972 = vand.u32 %v2867, 4294901760
          %v2973 = vsub.f32 %v2867, %v2972
          %2974 = vmatpush.msra.mxu0 %v2973
          %v2975 = vand.u32 %v2866, 4294901760
          %v2976 = vsub.f32 %v2866, %v2975
          %2977 = vmatpush.msra.mxu0 %v2976
          %v2978 = vand.u32 %v2865, 4294901760
          %v2979 = vsub.f32 %v2865, %v2978
          %2980 = vmatpush.msra.mxu0 %v2979
          %v2981 = vand.u32 %v2870, 4294901760
          %v2982 = vsub.f32 %v2870, %v2981
          %2983 = vmatmul.f32.gmra.mxu0 %v2982
          %v2984 = vpop.f32.mrf.mxu0
          %v2985 = vadd.f32 %v2951, %v2984
          %v2986 = vand.u32 %v2873, 4294901760
          %v2987 = vsub.f32 %v2873, %v2986
          %2988 = vmatmul.f32.gmra.mxu0 %v2987
          %v2989 = vpop.f32.mrf.mxu0
          %v2990 = vadd.f32 %v2955, %v2989
          %2991 = vdwg.mxu0
          %2992 = vmatpush.msra.mxu0 0.0
          %2993 = vmatpush.msra.mxu0 0.0
          %2994 = vmatpush.msra.mxu0 0.0
          %2995 = vmatpush.msra.mxu0 0.0
          %2996 = vmatpush.msra.mxu0 0.0
          %2997 = vmatpush.msra.mxu0 0.0
          %2998 = vmatpush.msra.mxu0 0.0
          %2999 = vmatpush.msra.mxu0 0.0
          %3000 = vmatpush.msra.mxu0 0.0
          %3001 = vmatpush.msra.mxu0 0.0
          %3002 = vmatpush.msra.mxu0 0.0
          %3003 = vmatpush.msra.mxu0 0.0
          %v3004 = vand.u32 %v2868, 4294901760
          %3005 = vmatpush.msra.mxu0 %v3004
          %v3006 = vand.u32 %v2867, 4294901760
          %3007 = vmatpush.msra.mxu0 %v3006
          %v3008 = vand.u32 %v2866, 4294901760
          %3009 = vmatpush.msra.mxu0 %v3008
          %v3010 = vand.u32 %v2865, 4294901760
          %3011 = vmatpush.msra.mxu0 %v3010
          %v3012 = vand.u32 %v2870, 4294901760
          %v3013 = vsub.f32 %v2870, %v3012
          %v3014 = vand.u32 %v3013, 4294901760
          %3015 = vmatmul.f32.gmra.mxu0 %v3014
          %v3016 = vpop.f32.mrf.mxu0
          %v3017 = vadd.f32 %v2985, %v3016
          %v3018 = vand.u32 %v2873, 4294901760
          %v3019 = vsub.f32 %v2873, %v3018
          %v3020 = vand.u32 %v3019, 4294901760
          %3021 = vmatmul.f32.gmra.mxu0 %v3020
          %v3022 = vpop.f32.mrf.mxu0
          %v3023 = vadd.f32 %v2990, %v3022
          %3024 = vdwg.mxu0
          %3025 = vmatpush.msra.mxu0 0.0
          %3026 = vmatpush.msra.mxu0 0.0
          %3027 = vmatpush.msra.mxu0 0.0
          %3028 = vmatpush.msra.mxu0 0.0
          %3029 = vmatpush.msra.mxu0 0.0
          %3030 = vmatpush.msra.mxu0 0.0
          %3031 = vmatpush.msra.mxu0 0.0
          %3032 = vmatpush.msra.mxu0 0.0
          %3033 = vmatpush.msra.mxu0 0.0
          %3034 = vmatpush.msra.mxu0 0.0
          %3035 = vmatpush.msra.mxu0 0.0
          %3036 = vmatpush.msra.mxu0 0.0
          %v3037 = vand.u32 %v2868, 4294901760
          %v3038 = vsub.f32 %v2868, %v3037
          %v3039 = vand.u32 %v3038, 4294901760
          %3040 = vmatpush.msra.mxu0 %v3039
          %v3041 = vand.u32 %v2867, 4294901760
          %v3042 = vsub.f32 %v2867, %v3041
          %v3043 = vand.u32 %v3042, 4294901760
          %3044 = vmatpush.msra.mxu0 %v3043
          %v3045 = vand.u32 %v2866, 4294901760
          %v3046 = vsub.f32 %v2866, %v3045
          %v3047 = vand.u32 %v3046, 4294901760
          %3048 = vmatpush.msra.mxu0 %v3047
          %v3049 = vand.u32 %v2865, 4294901760
          %v3050 = vsub.f32 %v2865, %v3049
          %v3051 = vand.u32 %v3050, 4294901760
          %3052 = vmatpush.msra.mxu0 %v3051
          %v3053 = vand.u32 %v2870, 4294901760
          %3054 = vmatmul.f32.gmra.mxu0 %v3053
          %v3055 = vpop.f32.mrf.mxu0
          %v3056 = vadd.f32 %v3017, %v3055
          %v3057 = vand.u32 %v2873, 4294901760
          %3058 = vmatmul.f32.gmra.mxu0 %v3057
          %v3059 = vpop.f32.mrf.mxu0
          %v3060 = vadd.f32 %v3023, %v3059
          %3061 = vdwg.mxu0
          %3062 = vmatpush.msra.mxu0 0.0
          %3063 = vmatpush.msra.mxu0 0.0
          %3064 = vmatpush.msra.mxu0 0.0
          %3065 = vmatpush.msra.mxu0 0.0
          %3066 = vmatpush.msra.mxu0 0.0
          %3067 = vmatpush.msra.mxu0 0.0
          %3068 = vmatpush.msra.mxu0 0.0
          %3069 = vmatpush.msra.mxu0 0.0
          %3070 = vmatpush.msra.mxu0 0.0
          %3071 = vmatpush.msra.mxu0 0.0
          %3072 = vmatpush.msra.mxu0 0.0
          %3073 = vmatpush.msra.mxu0 0.0
          %v3074 = vand.u32 %v2868, 4294901760
          %3075 = vmatpush.msra.mxu0 %v3074
          %v3076 = vand.u32 %v2867, 4294901760
          %3077 = vmatpush.msra.mxu0 %v3076
          %v3078 = vand.u32 %v2866, 4294901760
          %3079 = vmatpush.msra.mxu0 %v3078
          %v3080 = vand.u32 %v2865, 4294901760
          %3081 = vmatpush.msra.mxu0 %v3080
          %v3082 = vand.u32 %v2870, 4294901760
          %3083 = vmatmul.f32.gmra.mxu0 %v3082
          %v3084 = vpop.f32.mrf.mxu0
          %v3085 = vadd.f32 %v3056, %v3084
          %v3086 = vand.u32 %v2873, 4294901760
          %3087 = vmatmul.f32.gmra.mxu0 %v3086
          %v3088 = vpop.f32.mrf.mxu0
          %v3089 = vadd.f32 %v3060, %v3088
          %3090 = vdwg.mxu0
          %v3091 = vld [vmem:[#allocation11] sm:$0xff]
          %v3092 = vld [vmem:[#allocation11 + $0x8] sm:$0xff]
          %v3093 = vld [vmem:[#allocation11 + $0x10] sm:$0xff]
          %v3094 = vld [vmem:[#allocation11 + $0x18] sm:$0xff]
          %v3096 = vsel %vm476, %v3085, 0
          %v3099 = vsel %vm476, %v3089, 0
          %3101 = vmatpush.msra.mxu0 0.0
          %3102 = vmatpush.msra.mxu0 0.0
          %3103 = vmatpush.msra.mxu0 0.0
          %3104 = vmatpush.msra.mxu0 0.0
          %3105 = vmatpush.msra.mxu0 0.0
          %3106 = vmatpush.msra.mxu0 0.0
          %3107 = vmatpush.msra.mxu0 0.0
          %3108 = vmatpush.msra.mxu0 0.0
          %3109 = vmatpush.msra.mxu0 0.0
          %3110 = vmatpush.msra.mxu0 0.0
          %3111 = vmatpush.msra.mxu0 0.0
          %3112 = vmatpush.msra.mxu0 0.0
          %v3113 = vand.u32 %v3094, 4294901760
          %3114 = vmatpush.msra.mxu0 %v3113
          %v3115 = vand.u32 %v3093, 4294901760
          %3116 = vmatpush.msra.mxu0 %v3115
          %v3117 = vand.u32 %v3092, 4294901760
          %3118 = vmatpush.msra.mxu0 %v3117
          %v3119 = vand.u32 %v3091, 4294901760
          %3120 = vmatpush.msra.mxu0 %v3119
          %v3121 = vand.u32 %v3096, 4294901760
          %v3122 = vsub.f32 %v3096, %v3121
          %v3123 = vand.u32 %v3122, 4294901760
          %v3124 = vsub.f32 %v3122, %v3123
          %v3125 = vand.u32 %v3124, 4294901760
          %3126 = vmatmul.f32.gmra.mxu0 %v3125
          %v3127 = vpop.f32.mrf.mxu0
          %v3128 = vadd.f32 0.0, %v3127
          %v3129 = vand.u32 %v3099, 4294901760
          %v3130 = vsub.f32 %v3099, %v3129
          %v3131 = vand.u32 %v3130, 4294901760
          %v3132 = vsub.f32 %v3130, %v3131
          %v3133 = vand.u32 %v3132, 4294901760
          %3134 = vmatmul.f32.gmra.mxu0 %v3133
          %v3135 = vpop.f32.mrf.mxu0
          %v3136 = vadd.f32 0.0, %v3135
          %3137 = vdwg.mxu0
          %3138 = vmatpush.msra.mxu0 0.0
          %3139 = vmatpush.msra.mxu0 0.0
          %3140 = vmatpush.msra.mxu0 0.0
          %3141 = vmatpush.msra.mxu0 0.0
          %3142 = vmatpush.msra.mxu0 0.0
          %3143 = vmatpush.msra.mxu0 0.0
          %3144 = vmatpush.msra.mxu0 0.0
          %3145 = vmatpush.msra.mxu0 0.0
          %3146 = vmatpush.msra.mxu0 0.0
          %3147 = vmatpush.msra.mxu0 0.0
          %3148 = vmatpush.msra.mxu0 0.0
          %3149 = vmatpush.msra.mxu0 0.0
          %v3150 = vand.u32 %v3094, 4294901760
          %v3151 = vsub.f32 %v3094, %v3150
          %v3152 = vand.u32 %v3151, 4294901760
          %v3153 = vsub.f32 %v3151, %v3152
          %v3154 = vand.u32 %v3153, 4294901760
          %3155 = vmatpush.msra.mxu0 %v3154
          %v3156 = vand.u32 %v3093, 4294901760
          %v3157 = vsub.f32 %v3093, %v3156
          %v3158 = vand.u32 %v3157, 4294901760
          %v3159 = vsub.f32 %v3157, %v3158
          %v3160 = vand.u32 %v3159, 4294901760
          %3161 = vmatpush.msra.mxu0 %v3160
          %v3162 = vand.u32 %v3092, 4294901760
          %v3163 = vsub.f32 %v3092, %v3162
          %v3164 = vand.u32 %v3163, 4294901760
          %v3165 = vsub.f32 %v3163, %v3164
          %v3166 = vand.u32 %v3165, 4294901760
          %3167 = vmatpush.msra.mxu0 %v3166
          %v3168 = vand.u32 %v3091, 4294901760
          %v3169 = vsub.f32 %v3091, %v3168
          %v3170 = vand.u32 %v3169, 4294901760
          %v3171 = vsub.f32 %v3169, %v3170
          %v3172 = vand.u32 %v3171, 4294901760
          %3173 = vmatpush.msra.mxu0 %v3172
          %v3174 = vand.u32 %v3096, 4294901760
          %3175 = vmatmul.f32.gmra.mxu0 %v3174
          %v3176 = vpop.f32.mrf.mxu0
          %v3177 = vadd.f32 %v3128, %v3176
          %v3178 = vand.u32 %v3099, 4294901760
          %3179 = vmatmul.f32.gmra.mxu0 %v3178
          %v3180 = vpop.f32.mrf.mxu0
          %v3181 = vadd.f32 %v3136, %v3180
          %3182 = vdwg.mxu0
          %3183 = vmatpush.msra.mxu0 0.0
          %3184 = vmatpush.msra.mxu0 0.0
          %3185 = vmatpush.msra.mxu0 0.0
          %3186 = vmatpush.msra.mxu0 0.0
          %3187 = vmatpush.msra.mxu0 0.0
          %3188 = vmatpush.msra.mxu0 0.0
          %3189 = vmatpush.msra.mxu0 0.0
          %3190 = vmatpush.msra.mxu0 0.0
          %3191 = vmatpush.msra.mxu0 0.0
          %3192 = vmatpush.msra.mxu0 0.0
          %3193 = vmatpush.msra.mxu0 0.0
          %3194 = vmatpush.msra.mxu0 0.0
          %v3195 = vand.u32 %v3094, 4294901760
          %v3196 = vsub.f32 %v3094, %v3195
          %3197 = vmatpush.msra.mxu0 %v3196
          %v3198 = vand.u32 %v3093, 4294901760
          %v3199 = vsub.f32 %v3093, %v3198
          %3200 = vmatpush.msra.mxu0 %v3199
          %v3201 = vand.u32 %v3092, 4294901760
          %v3202 = vsub.f32 %v3092, %v3201
          %3203 = vmatpush.msra.mxu0 %v3202
          %v3204 = vand.u32 %v3091, 4294901760
          %v3205 = vsub.f32 %v3091, %v3204
          %3206 = vmatpush.msra.mxu0 %v3205
          %v3207 = vand.u32 %v3096, 4294901760
          %v3208 = vsub.f32 %v3096, %v3207
          %3209 = vmatmul.f32.gmra.mxu0 %v3208
          %v3210 = vpop.f32.mrf.mxu0
          %v3211 = vadd.f32 %v3177, %v3210
          %v3212 = vand.u32 %v3099, 4294901760
          %v3213 = vsub.f32 %v3099, %v3212
          %3214 = vmatmul.f32.gmra.mxu0 %v3213
          %v3215 = vpop.f32.mrf.mxu0
          %v3216 = vadd.f32 %v3181, %v3215
          %3217 = vdwg.mxu0
          %3218 = vmatpush.msra.mxu0 0.0
          %3219 = vmatpush.msra.mxu0 0.0
          %3220 = vmatpush.msra.mxu0 0.0
          %3221 = vmatpush.msra.mxu0 0.0
          %3222 = vmatpush.msra.mxu0 0.0
          %3223 = vmatpush.msra.mxu0 0.0
          %3224 = vmatpush.msra.mxu0 0.0
          %3225 = vmatpush.msra.mxu0 0.0
          %3226 = vmatpush.msra.mxu0 0.0
          %3227 = vmatpush.msra.mxu0 0.0
          %3228 = vmatpush.msra.mxu0 0.0
          %3229 = vmatpush.msra.mxu0 0.0
          %v3230 = vand.u32 %v3094, 4294901760
          %3231 = vmatpush.msra.mxu0 %v3230
          %v3232 = vand.u32 %v3093, 4294901760
          %3233 = vmatpush.msra.mxu0 %v3232
          %v3234 = vand.u32 %v3092, 4294901760
          %3235 = vmatpush.msra.mxu0 %v3234
          %v3236 = vand.u32 %v3091, 4294901760
          %3237 = vmatpush.msra.mxu0 %v3236
          %v3238 = vand.u32 %v3096, 4294901760
          %v3239 = vsub.f32 %v3096, %v3238
          %v3240 = vand.u32 %v3239, 4294901760
          %3241 = vmatmul.f32.gmra.mxu0 %v3240
          %v3242 = vpop.f32.mrf.mxu0
          %v3243 = vadd.f32 %v3211, %v3242
          %v3244 = vand.u32 %v3099, 4294901760
          %v3245 = vsub.f32 %v3099, %v3244
          %v3246 = vand.u32 %v3245, 4294901760
          %3247 = vmatmul.f32.gmra.mxu0 %v3246
          %v3248 = vpop.f32.mrf.mxu0
          %v3249 = vadd.f32 %v3216, %v3248
          %3250 = vdwg.mxu0
          %3251 = vmatpush.msra.mxu0 0.0
          %3252 = vmatpush.msra.mxu0 0.0
          %3253 = vmatpush.msra.mxu0 0.0
          %3254 = vmatpush.msra.mxu0 0.0
          %3255 = vmatpush.msra.mxu0 0.0
          %3256 = vmatpush.msra.mxu0 0.0
          %3257 = vmatpush.msra.mxu0 0.0
          %3258 = vmatpush.msra.mxu0 0.0
          %3259 = vmatpush.msra.mxu0 0.0
          %3260 = vmatpush.msra.mxu0 0.0
          %3261 = vmatpush.msra.mxu0 0.0
          %3262 = vmatpush.msra.mxu0 0.0
          %v3263 = vand.u32 %v3094, 4294901760
          %v3264 = vsub.f32 %v3094, %v3263
          %v3265 = vand.u32 %v3264, 4294901760
          %3266 = vmatpush.msra.mxu0 %v3265
          %v3267 = vand.u32 %v3093, 4294901760
          %v3268 = vsub.f32 %v3093, %v3267
          %v3269 = vand.u32 %v3268, 4294901760
          %3270 = vmatpush.msra.mxu0 %v3269
          %v3271 = vand.u32 %v3092, 4294901760
          %v3272 = vsub.f32 %v3092, %v3271
          %v3273 = vand.u32 %v3272, 4294901760
          %3274 = vmatpush.msra.mxu0 %v3273
          %v3275 = vand.u32 %v3091, 4294901760
          %v3276 = vsub.f32 %v3091, %v3275
          %v3277 = vand.u32 %v3276, 4294901760
          %3278 = vmatpush.msra.mxu0 %v3277
          %v3279 = vand.u32 %v3096, 4294901760
          %3280 = vmatmul.f32.gmra.mxu0 %v3279
          %v3281 = vpop.f32.mrf.mxu0
          %v3282 = vadd.f32 %v3243, %v3281
          %v3283 = vand.u32 %v3099, 4294901760
          %3284 = vmatmul.f32.gmra.mxu0 %v3283
          %v3285 = vpop.f32.mrf.mxu0
          %v3286 = vadd.f32 %v3249, %v3285
          %3287 = vdwg.mxu0
          %3288 = vmatpush.msra.mxu0 0.0
          %3289 = vmatpush.msra.mxu0 0.0
          %3290 = vmatpush.msra.mxu0 0.0
          %3291 = vmatpush.msra.mxu0 0.0
          %3292 = vmatpush.msra.mxu0 0.0
          %3293 = vmatpush.msra.mxu0 0.0
          %3294 = vmatpush.msra.mxu0 0.0
          %3295 = vmatpush.msra.mxu0 0.0
          %3296 = vmatpush.msra.mxu0 0.0
          %3297 = vmatpush.msra.mxu0 0.0
          %3298 = vmatpush.msra.mxu0 0.0
          %3299 = vmatpush.msra.mxu0 0.0
          %v3300 = vand.u32 %v3094, 4294901760
          %3301 = vmatpush.msra.mxu0 %v3300
          %v3302 = vand.u32 %v3093, 4294901760
          %3303 = vmatpush.msra.mxu0 %v3302
          %v3304 = vand.u32 %v3092, 4294901760
          %3305 = vmatpush.msra.mxu0 %v3304
          %v3306 = vand.u32 %v3091, 4294901760
          %3307 = vmatpush.msra.mxu0 %v3306
          %v3308 = vand.u32 %v3096, 4294901760
          %3309 = vmatmul.f32.gmra.mxu0 %v3308
          %v3310 = vpop.f32.mrf.mxu0
          %v3311 = vadd.f32 %v3282, %v3310
          %v3312 = vand.u32 %v3099, 4294901760
          %3313 = vmatmul.f32.gmra.mxu0 %v3312
          %v3314 = vpop.f32.mrf.mxu0
          %v3315 = vadd.f32 %v3286, %v3314
          %3316 = vdwg.mxu0
          %s3317 = scalar_lea.vmem %s417, 16
          %3318 = vst.msk [vmem:[%s3317] sm:$0xff] %vm2860, %v3311
          %3319 = vst.msk [vmem:[%s3317 + $0x8] sm:$0xff] %vm2860, %v3315
          %v3320 = vld [vmem:[#allocation9] sm:$0xff]
          %v3321 = vld [vmem:[#allocation9 + $0x8] sm:$0xff]
          %v3322 = vld [vmem:[%s2066] sm:$0xff]
          %v3323 = vld [vmem:[%s2066 + $0x8] sm:$0xff]
          %v3324 = vld [vmem:[%s2066 + $0x10] sm:$0xff]
          %v3325 = vld [vmem:[%s2066 + $0x18] sm:$0xff]
          %v3327 = vsel %vm476, %v3320, 0
          %v3330 = vsel %vm476, %v3321, 0
          %3332 = vmatpush.msra.mxu0 0.0
          %3333 = vmatpush.msra.mxu0 0.0
          %3334 = vmatpush.msra.mxu0 0.0
          %3335 = vmatpush.msra.mxu0 0.0
          %3336 = vmatpush.msra.mxu0 0.0
          %3337 = vmatpush.msra.mxu0 0.0
          %3338 = vmatpush.msra.mxu0 0.0
          %3339 = vmatpush.msra.mxu0 0.0
          %3340 = vmatpush.msra.mxu0 0.0
          %3341 = vmatpush.msra.mxu0 0.0
          %3342 = vmatpush.msra.mxu0 0.0
          %3343 = vmatpush.msra.mxu0 0.0
          %v3344 = vand.u32 %v3325, 4294901760
          %3345 = vmatpush.msra.mxu0 %v3344
          %v3346 = vand.u32 %v3324, 4294901760
          %3347 = vmatpush.msra.mxu0 %v3346
          %v3348 = vand.u32 %v3323, 4294901760
          %3349 = vmatpush.msra.mxu0 %v3348
          %v3350 = vand.u32 %v3322, 4294901760
          %3351 = vmatpush.msra.mxu0 %v3350
          %v3352 = vand.u32 %v3327, 4294901760
          %v3353 = vsub.f32 %v3327, %v3352
          %v3354 = vand.u32 %v3353, 4294901760
          %v3355 = vsub.f32 %v3353, %v3354
          %v3356 = vand.u32 %v3355, 4294901760
          %3357 = vmatmul.f32.gmra.mxu0 %v3356
          %v3358 = vpop.f32.mrf.mxu0
          %v3359 = vadd.f32 0.0, %v3358
          %v3360 = vand.u32 %v3330, 4294901760
          %v3361 = vsub.f32 %v3330, %v3360
          %v3362 = vand.u32 %v3361, 4294901760
          %v3363 = vsub.f32 %v3361, %v3362
          %v3364 = vand.u32 %v3363, 4294901760
          %3365 = vmatmul.f32.gmra.mxu0 %v3364
          %v3366 = vpop.f32.mrf.mxu0
          %v3367 = vadd.f32 0.0, %v3366
          %3368 = vdwg.mxu0
          %3369 = vmatpush.msra.mxu0 0.0
          %3370 = vmatpush.msra.mxu0 0.0
          %3371 = vmatpush.msra.mxu0 0.0
          %3372 = vmatpush.msra.mxu0 0.0
          %3373 = vmatpush.msra.mxu0 0.0
          %3374 = vmatpush.msra.mxu0 0.0
          %3375 = vmatpush.msra.mxu0 0.0
          %3376 = vmatpush.msra.mxu0 0.0
          %3377 = vmatpush.msra.mxu0 0.0
          %3378 = vmatpush.msra.mxu0 0.0
          %3379 = vmatpush.msra.mxu0 0.0
          %3380 = vmatpush.msra.mxu0 0.0
          %v3381 = vand.u32 %v3325, 4294901760
          %v3382 = vsub.f32 %v3325, %v3381
          %v3383 = vand.u32 %v3382, 4294901760
          %v3384 = vsub.f32 %v3382, %v3383
          %v3385 = vand.u32 %v3384, 4294901760
          %3386 = vmatpush.msra.mxu0 %v3385
          %v3387 = vand.u32 %v3324, 4294901760
          %v3388 = vsub.f32 %v3324, %v3387
          %v3389 = vand.u32 %v3388, 4294901760
          %v3390 = vsub.f32 %v3388, %v3389
          %v3391 = vand.u32 %v3390, 4294901760
          %3392 = vmatpush.msra.mxu0 %v3391
          %v3393 = vand.u32 %v3323, 4294901760
          %v3394 = vsub.f32 %v3323, %v3393
          %v3395 = vand.u32 %v3394, 4294901760
          %v3396 = vsub.f32 %v3394, %v3395
          %v3397 = vand.u32 %v3396, 4294901760
          %3398 = vmatpush.msra.mxu0 %v3397
          %v3399 = vand.u32 %v3322, 4294901760
          %v3400 = vsub.f32 %v3322, %v3399
          %v3401 = vand.u32 %v3400, 4294901760
          %v3402 = vsub.f32 %v3400, %v3401
          %v3403 = vand.u32 %v3402, 4294901760
          %3404 = vmatpush.msra.mxu0 %v3403
          %v3405 = vand.u32 %v3327, 4294901760
          %3406 = vmatmul.f32.gmra.mxu0 %v3405
          %v3407 = vpop.f32.mrf.mxu0
          %v3408 = vadd.f32 %v3359, %v3407
          %v3409 = vand.u32 %v3330, 4294901760
          %3410 = vmatmul.f32.gmra.mxu0 %v3409
          %v3411 = vpop.f32.mrf.mxu0
          %v3412 = vadd.f32 %v3367, %v3411
          %3413 = vdwg.mxu0
          %3414 = vmatpush.msra.mxu0 0.0
          %3415 = vmatpush.msra.mxu0 0.0
          %3416 = vmatpush.msra.mxu0 0.0
          %3417 = vmatpush.msra.mxu0 0.0
          %3418 = vmatpush.msra.mxu0 0.0
          %3419 = vmatpush.msra.mxu0 0.0
          %3420 = vmatpush.msra.mxu0 0.0
          %3421 = vmatpush.msra.mxu0 0.0
          %3422 = vmatpush.msra.mxu0 0.0
          %3423 = vmatpush.msra.mxu0 0.0
          %3424 = vmatpush.msra.mxu0 0.0
          %3425 = vmatpush.msra.mxu0 0.0
          %v3426 = vand.u32 %v3325, 4294901760
          %v3427 = vsub.f32 %v3325, %v3426
          %3428 = vmatpush.msra.mxu0 %v3427
          %v3429 = vand.u32 %v3324, 4294901760
          %v3430 = vsub.f32 %v3324, %v3429
          %3431 = vmatpush.msra.mxu0 %v3430
          %v3432 = vand.u32 %v3323, 4294901760
          %v3433 = vsub.f32 %v3323, %v3432
          %3434 = vmatpush.msra.mxu0 %v3433
          %v3435 = vand.u32 %v3322, 4294901760
          %v3436 = vsub.f32 %v3322, %v3435
          %3437 = vmatpush.msra.mxu0 %v3436
          %v3438 = vand.u32 %v3327, 4294901760
          %v3439 = vsub.f32 %v3327, %v3438
          %3440 = vmatmul.f32.gmra.mxu0 %v3439
          %v3441 = vpop.f32.mrf.mxu0
          %v3442 = vadd.f32 %v3408, %v3441
          %v3443 = vand.u32 %v3330, 4294901760
          %v3444 = vsub.f32 %v3330, %v3443
          %3445 = vmatmul.f32.gmra.mxu0 %v3444
          %v3446 = vpop.f32.mrf.mxu0
          %v3447 = vadd.f32 %v3412, %v3446
          %3448 = vdwg.mxu0
          %3449 = vmatpush.msra.mxu0 0.0
          %3450 = vmatpush.msra.mxu0 0.0
          %3451 = vmatpush.msra.mxu0 0.0
          %3452 = vmatpush.msra.mxu0 0.0
          %3453 = vmatpush.msra.mxu0 0.0
          %3454 = vmatpush.msra.mxu0 0.0
          %3455 = vmatpush.msra.mxu0 0.0
          %3456 = vmatpush.msra.mxu0 0.0
          %3457 = vmatpush.msra.mxu0 0.0
          %3458 = vmatpush.msra.mxu0 0.0
          %3459 = vmatpush.msra.mxu0 0.0
          %3460 = vmatpush.msra.mxu0 0.0
          %v3461 = vand.u32 %v3325, 4294901760
          %3462 = vmatpush.msra.mxu0 %v3461
          %v3463 = vand.u32 %v3324, 4294901760
          %3464 = vmatpush.msra.mxu0 %v3463
          %v3465 = vand.u32 %v3323, 4294901760
          %3466 = vmatpush.msra.mxu0 %v3465
          %v3467 = vand.u32 %v3322, 4294901760
          %3468 = vmatpush.msra.mxu0 %v3467
          %v3469 = vand.u32 %v3327, 4294901760
          %v3470 = vsub.f32 %v3327, %v3469
          %v3471 = vand.u32 %v3470, 4294901760
          %3472 = vmatmul.f32.gmra.mxu0 %v3471
          %v3473 = vpop.f32.mrf.mxu0
          %v3474 = vadd.f32 %v3442, %v3473
          %v3475 = vand.u32 %v3330, 4294901760
          %v3476 = vsub.f32 %v3330, %v3475
          %v3477 = vand.u32 %v3476, 4294901760
          %3478 = vmatmul.f32.gmra.mxu0 %v3477
          %v3479 = vpop.f32.mrf.mxu0
          %v3480 = vadd.f32 %v3447, %v3479
          %3481 = vdwg.mxu0
          %3482 = vmatpush.msra.mxu0 0.0
          %3483 = vmatpush.msra.mxu0 0.0
          %3484 = vmatpush.msra.mxu0 0.0
          %3485 = vmatpush.msra.mxu0 0.0
          %3486 = vmatpush.msra.mxu0 0.0
          %3487 = vmatpush.msra.mxu0 0.0
          %3488 = vmatpush.msra.mxu0 0.0
          %3489 = vmatpush.msra.mxu0 0.0
          %3490 = vmatpush.msra.mxu0 0.0
          %3491 = vmatpush.msra.mxu0 0.0
          %3492 = vmatpush.msra.mxu0 0.0
          %3493 = vmatpush.msra.mxu0 0.0
          %v3494 = vand.u32 %v3325, 4294901760
          %v3495 = vsub.f32 %v3325, %v3494
          %v3496 = vand.u32 %v3495, 4294901760
          %3497 = vmatpush.msra.mxu0 %v3496
          %v3498 = vand.u32 %v3324, 4294901760
          %v3499 = vsub.f32 %v3324, %v3498
          %v3500 = vand.u32 %v3499, 4294901760
          %3501 = vmatpush.msra.mxu0 %v3500
          %v3502 = vand.u32 %v3323, 4294901760
          %v3503 = vsub.f32 %v3323, %v3502
          %v3504 = vand.u32 %v3503, 4294901760
          %3505 = vmatpush.msra.mxu0 %v3504
          %v3506 = vand.u32 %v3322, 4294901760
          %v3507 = vsub.f32 %v3322, %v3506
          %v3508 = vand.u32 %v3507, 4294901760
          %3509 = vmatpush.msra.mxu0 %v3508
          %v3510 = vand.u32 %v3327, 4294901760
          %3511 = vmatmul.f32.gmra.mxu0 %v3510
          %v3512 = vpop.f32.mrf.mxu0
          %v3513 = vadd.f32 %v3474, %v3512
          %v3514 = vand.u32 %v3330, 4294901760
          %3515 = vmatmul.f32.gmra.mxu0 %v3514
          %v3516 = vpop.f32.mrf.mxu0
          %v3517 = vadd.f32 %v3480, %v3516
          %3518 = vdwg.mxu0
          %3519 = vmatpush.msra.mxu0 0.0
          %3520 = vmatpush.msra.mxu0 0.0
          %3521 = vmatpush.msra.mxu0 0.0
          %3522 = vmatpush.msra.mxu0 0.0
          %3523 = vmatpush.msra.mxu0 0.0
          %3524 = vmatpush.msra.mxu0 0.0
          %3525 = vmatpush.msra.mxu0 0.0
          %3526 = vmatpush.msra.mxu0 0.0
          %3527 = vmatpush.msra.mxu0 0.0
          %3528 = vmatpush.msra.mxu0 0.0
          %3529 = vmatpush.msra.mxu0 0.0
          %3530 = vmatpush.msra.mxu0 0.0
          %v3531 = vand.u32 %v3325, 4294901760
          %3532 = vmatpush.msra.mxu0 %v3531
          %v3533 = vand.u32 %v3324, 4294901760
          %3534 = vmatpush.msra.mxu0 %v3533
          %v3535 = vand.u32 %v3323, 4294901760
          %3536 = vmatpush.msra.mxu0 %v3535
          %v3537 = vand.u32 %v3322, 4294901760
          %3538 = vmatpush.msra.mxu0 %v3537
          %v3539 = vand.u32 %v3327, 4294901760
          %3540 = vmatmul.f32.gmra.mxu0 %v3539
          %v3541 = vpop.f32.mrf.mxu0
          %v3542 = vadd.f32 %v3513, %v3541
          %v3543 = vand.u32 %v3330, 4294901760
          %3544 = vmatmul.f32.gmra.mxu0 %v3543
          %v3545 = vpop.f32.mrf.mxu0
          %v3546 = vadd.f32 %v3517, %v3545
          %3547 = vdwg.mxu0
          %v3548 = vld [vmem:[#allocation11] sm:$0xff]
          %v3549 = vld [vmem:[#allocation11 + $0x8] sm:$0xff]
          %v3550 = vld [vmem:[#allocation11 + $0x10] sm:$0xff]
          %v3551 = vld [vmem:[#allocation11 + $0x18] sm:$0xff]
          %v3553 = vsel %vm476, %v3542, 0
          %v3556 = vsel %vm476, %v3546, 0
          %3558 = vmatpush.msra.mxu0 0.0
          %3559 = vmatpush.msra.mxu0 0.0
          %3560 = vmatpush.msra.mxu0 0.0
          %3561 = vmatpush.msra.mxu0 0.0
          %3562 = vmatpush.msra.mxu0 0.0
          %3563 = vmatpush.msra.mxu0 0.0
          %3564 = vmatpush.msra.mxu0 0.0
          %3565 = vmatpush.msra.mxu0 0.0
          %3566 = vmatpush.msra.mxu0 0.0
          %3567 = vmatpush.msra.mxu0 0.0
          %3568 = vmatpush.msra.mxu0 0.0
          %3569 = vmatpush.msra.mxu0 0.0
          %v3570 = vand.u32 %v3551, 4294901760
          %3571 = vmatpush.msra.mxu0 %v3570
          %v3572 = vand.u32 %v3550, 4294901760
          %3573 = vmatpush.msra.mxu0 %v3572
          %v3574 = vand.u32 %v3549, 4294901760
          %3575 = vmatpush.msra.mxu0 %v3574
          %v3576 = vand.u32 %v3548, 4294901760
          %3577 = vmatpush.msra.mxu0 %v3576
          %v3578 = vand.u32 %v3553, 4294901760
          %v3579 = vsub.f32 %v3553, %v3578
          %v3580 = vand.u32 %v3579, 4294901760
          %v3581 = vsub.f32 %v3579, %v3580
          %v3582 = vand.u32 %v3581, 4294901760
          %3583 = vmatmul.f32.gmra.mxu0 %v3582
          %v3584 = vpop.f32.mrf.mxu0
          %v3585 = vadd.f32 0.0, %v3584
          %v3586 = vand.u32 %v3556, 4294901760
          %v3587 = vsub.f32 %v3556, %v3586
          %v3588 = vand.u32 %v3587, 4294901760
          %v3589 = vsub.f32 %v3587, %v3588
          %v3590 = vand.u32 %v3589, 4294901760
          %3591 = vmatmul.f32.gmra.mxu0 %v3590
          %v3592 = vpop.f32.mrf.mxu0
          %v3593 = vadd.f32 0.0, %v3592
          %3594 = vdwg.mxu0
          %3595 = vmatpush.msra.mxu0 0.0
          %3596 = vmatpush.msra.mxu0 0.0
          %3597 = vmatpush.msra.mxu0 0.0
          %3598 = vmatpush.msra.mxu0 0.0
          %3599 = vmatpush.msra.mxu0 0.0
          %3600 = vmatpush.msra.mxu0 0.0
          %3601 = vmatpush.msra.mxu0 0.0
          %3602 = vmatpush.msra.mxu0 0.0
          %3603 = vmatpush.msra.mxu0 0.0
          %3604 = vmatpush.msra.mxu0 0.0
          %3605 = vmatpush.msra.mxu0 0.0
          %3606 = vmatpush.msra.mxu0 0.0
          %v3607 = vand.u32 %v3551, 4294901760
          %v3608 = vsub.f32 %v3551, %v3607
          %v3609 = vand.u32 %v3608, 4294901760
          %v3610 = vsub.f32 %v3608, %v3609
          %v3611 = vand.u32 %v3610, 4294901760
          %3612 = vmatpush.msra.mxu0 %v3611
          %v3613 = vand.u32 %v3550, 4294901760
          %v3614 = vsub.f32 %v3550, %v3613
          %v3615 = vand.u32 %v3614, 4294901760
          %v3616 = vsub.f32 %v3614, %v3615
          %v3617 = vand.u32 %v3616, 4294901760
          %3618 = vmatpush.msra.mxu0 %v3617
          %v3619 = vand.u32 %v3549, 4294901760
          %v3620 = vsub.f32 %v3549, %v3619
          %v3621 = vand.u32 %v3620, 4294901760
          %v3622 = vsub.f32 %v3620, %v3621
          %v3623 = vand.u32 %v3622, 4294901760
          %3624 = vmatpush.msra.mxu0 %v3623
          %v3625 = vand.u32 %v3548, 4294901760
          %v3626 = vsub.f32 %v3548, %v3625
          %v3627 = vand.u32 %v3626, 4294901760
          %v3628 = vsub.f32 %v3626, %v3627
          %v3629 = vand.u32 %v3628, 4294901760
          %3630 = vmatpush.msra.mxu0 %v3629
          %v3631 = vand.u32 %v3553, 4294901760
          %3632 = vmatmul.f32.gmra.mxu0 %v3631
          %v3633 = vpop.f32.mrf.mxu0
          %v3634 = vadd.f32 %v3585, %v3633
          %v3635 = vand.u32 %v3556, 4294901760
          %3636 = vmatmul.f32.gmra.mxu0 %v3635
          %v3637 = vpop.f32.mrf.mxu0
          %v3638 = vadd.f32 %v3593, %v3637
          %3639 = vdwg.mxu0
          %3640 = vmatpush.msra.mxu0 0.0
          %3641 = vmatpush.msra.mxu0 0.0
          %3642 = vmatpush.msra.mxu0 0.0
          %3643 = vmatpush.msra.mxu0 0.0
          %3644 = vmatpush.msra.mxu0 0.0
          %3645 = vmatpush.msra.mxu0 0.0
          %3646 = vmatpush.msra.mxu0 0.0
          %3647 = vmatpush.msra.mxu0 0.0
          %3648 = vmatpush.msra.mxu0 0.0
          %3649 = vmatpush.msra.mxu0 0.0
          %3650 = vmatpush.msra.mxu0 0.0
          %3651 = vmatpush.msra.mxu0 0.0
          %v3652 = vand.u32 %v3551, 4294901760
          %v3653 = vsub.f32 %v3551, %v3652
          %3654 = vmatpush.msra.mxu0 %v3653
          %v3655 = vand.u32 %v3550, 4294901760
          %v3656 = vsub.f32 %v3550, %v3655
          %3657 = vmatpush.msra.mxu0 %v3656
          %v3658 = vand.u32 %v3549, 4294901760
          %v3659 = vsub.f32 %v3549, %v3658
          %3660 = vmatpush.msra.mxu0 %v3659
          %v3661 = vand.u32 %v3548, 4294901760
          %v3662 = vsub.f32 %v3548, %v3661
          %3663 = vmatpush.msra.mxu0 %v3662
          %v3664 = vand.u32 %v3553, 4294901760
          %v3665 = vsub.f32 %v3553, %v3664
          %3666 = vmatmul.f32.gmra.mxu0 %v3665
          %v3667 = vpop.f32.mrf.mxu0
          %v3668 = vadd.f32 %v3634, %v3667
          %v3669 = vand.u32 %v3556, 4294901760
          %v3670 = vsub.f32 %v3556, %v3669
          %3671 = vmatmul.f32.gmra.mxu0 %v3670
          %v3672 = vpop.f32.mrf.mxu0
          %v3673 = vadd.f32 %v3638, %v3672
          %3674 = vdwg.mxu0
          %3675 = vmatpush.msra.mxu0 0.0
          %3676 = vmatpush.msra.mxu0 0.0
          %3677 = vmatpush.msra.mxu0 0.0
          %3678 = vmatpush.msra.mxu0 0.0
          %3679 = vmatpush.msra.mxu0 0.0
          %3680 = vmatpush.msra.mxu0 0.0
          %3681 = vmatpush.msra.mxu0 0.0
          %3682 = vmatpush.msra.mxu0 0.0
          %3683 = vmatpush.msra.mxu0 0.0
          %3684 = vmatpush.msra.mxu0 0.0
          %3685 = vmatpush.msra.mxu0 0.0
          %3686 = vmatpush.msra.mxu0 0.0
          %v3687 = vand.u32 %v3551, 4294901760
          %3688 = vmatpush.msra.mxu0 %v3687
          %v3689 = vand.u32 %v3550, 4294901760
          %3690 = vmatpush.msra.mxu0 %v3689
          %v3691 = vand.u32 %v3549, 4294901760
          %3692 = vmatpush.msra.mxu0 %v3691
          %v3693 = vand.u32 %v3548, 4294901760
          %3694 = vmatpush.msra.mxu0 %v3693
          %v3695 = vand.u32 %v3553, 4294901760
          %v3696 = vsub.f32 %v3553, %v3695
          %v3697 = vand.u32 %v3696, 4294901760
          %3698 = vmatmul.f32.gmra.mxu0 %v3697
          %v3699 = vpop.f32.mrf.mxu0
          %v3700 = vadd.f32 %v3668, %v3699
          %v3701 = vand.u32 %v3556, 4294901760
          %v3702 = vsub.f32 %v3556, %v3701
          %v3703 = vand.u32 %v3702, 4294901760
          %3704 = vmatmul.f32.gmra.mxu0 %v3703
          %v3705 = vpop.f32.mrf.mxu0
          %v3706 = vadd.f32 %v3673, %v3705
          %3707 = vdwg.mxu0
          %3708 = vmatpush.msra.mxu0 0.0
          %3709 = vmatpush.msra.mxu0 0.0
          %3710 = vmatpush.msra.mxu0 0.0
          %3711 = vmatpush.msra.mxu0 0.0
          %3712 = vmatpush.msra.mxu0 0.0
          %3713 = vmatpush.msra.mxu0 0.0
          %3714 = vmatpush.msra.mxu0 0.0
          %3715 = vmatpush.msra.mxu0 0.0
          %3716 = vmatpush.msra.mxu0 0.0
          %3717 = vmatpush.msra.mxu0 0.0
          %3718 = vmatpush.msra.mxu0 0.0
          %3719 = vmatpush.msra.mxu0 0.0
          %v3720 = vand.u32 %v3551, 4294901760
          %v3721 = vsub.f32 %v3551, %v3720
          %v3722 = vand.u32 %v3721, 4294901760
          %3723 = vmatpush.msra.mxu0 %v3722
          %v3724 = vand.u32 %v3550, 4294901760
          %v3725 = vsub.f32 %v3550, %v3724
          %v3726 = vand.u32 %v3725, 4294901760
          %3727 = vmatpush.msra.mxu0 %v3726
          %v3728 = vand.u32 %v3549, 4294901760
          %v3729 = vsub.f32 %v3549, %v3728
          %v3730 = vand.u32 %v3729, 4294901760
          %3731 = vmatpush.msra.mxu0 %v3730
          %v3732 = vand.u32 %v3548, 4294901760
          %v3733 = vsub.f32 %v3548, %v3732
          %v3734 = vand.u32 %v3733, 4294901760
          %3735 = vmatpush.msra.mxu0 %v3734
          %v3736 = vand.u32 %v3553, 4294901760
          %3737 = vmatmul.f32.gmra.mxu0 %v3736
          %v3738 = vpop.f32.mrf.mxu0
          %v3739 = vadd.f32 %v3700, %v3738
          %v3740 = vand.u32 %v3556, 4294901760
          %3741 = vmatmul.f32.gmra.mxu0 %v3740
          %v3742 = vpop.f32.mrf.mxu0
          %v3743 = vadd.f32 %v3706, %v3742
          %3744 = vdwg.mxu0
          %3745 = vmatpush.msra.mxu0 0.0
          %3746 = vmatpush.msra.mxu0 0.0
          %3747 = vmatpush.msra.mxu0 0.0
          %3748 = vmatpush.msra.mxu0 0.0
          %3749 = vmatpush.msra.mxu0 0.0
          %3750 = vmatpush.msra.mxu0 0.0
          %3751 = vmatpush.msra.mxu0 0.0
          %3752 = vmatpush.msra.mxu0 0.0
          %3753 = vmatpush.msra.mxu0 0.0
          %3754 = vmatpush.msra.mxu0 0.0
          %3755 = vmatpush.msra.mxu0 0.0
          %3756 = vmatpush.msra.mxu0 0.0
          %v3757 = vand.u32 %v3551, 4294901760
          %3758 = vmatpush.msra.mxu0 %v3757
          %v3759 = vand.u32 %v3550, 4294901760
          %3760 = vmatpush.msra.mxu0 %v3759
          %v3761 = vand.u32 %v3549, 4294901760
          %3762 = vmatpush.msra.mxu0 %v3761
          %v3763 = vand.u32 %v3548, 4294901760
          %3764 = vmatpush.msra.mxu0 %v3763
          %v3765 = vand.u32 %v3553, 4294901760
          %3766 = vmatmul.f32.gmra.mxu0 %v3765
          %v3767 = vpop.f32.mrf.mxu0
          %v3768 = vadd.f32 %v3739, %v3767
          %v3769 = vand.u32 %v3556, 4294901760
          %3770 = vmatmul.f32.gmra.mxu0 %v3769
          %v3771 = vpop.f32.mrf.mxu0
          %v3772 = vadd.f32 %v3743, %v3771
          %3773 = vdwg.mxu0
          %s3774 = scalar_lea.vmem %s417, 32
          %3775 = vst.msk [vmem:[%s3774] sm:$0xff] %vm2860, %v3768
          %3776 = vst.msk [vmem:[%s3774 + $0x8] sm:$0xff] %vm2860, %v3772
          %v3777 = vld [vmem:[#allocation9] sm:$0xff]
          %v3778 = vld [vmem:[#allocation9 + $0x8] sm:$0xff]
          %v3779 = vld [vmem:[%s2365] sm:$0xff]
          %v3780 = vld [vmem:[%s2365 + $0x8] sm:$0xff]
          %v3781 = vld [vmem:[%s2365 + $0x10] sm:$0xff]
          %v3782 = vld [vmem:[%s2365 + $0x18] sm:$0xff]
          %v3784 = vsel %vm476, %v3777, 0
          %v3787 = vsel %vm476, %v3778, 0
          %3789 = vmatpush.msra.mxu0 0.0
          %3790 = vmatpush.msra.mxu0 0.0
          %3791 = vmatpush.msra.mxu0 0.0
          %3792 = vmatpush.msra.mxu0 0.0
          %3793 = vmatpush.msra.mxu0 0.0
          %3794 = vmatpush.msra.mxu0 0.0
          %3795 = vmatpush.msra.mxu0 0.0
          %3796 = vmatpush.msra.mxu0 0.0
          %3797 = vmatpush.msra.mxu0 0.0
          %3798 = vmatpush.msra.mxu0 0.0
          %3799 = vmatpush.msra.mxu0 0.0
          %3800 = vmatpush.msra.mxu0 0.0
          %v3801 = vand.u32 %v3782, 4294901760
          %3802 = vmatpush.msra.mxu0 %v3801
          %v3803 = vand.u32 %v3781, 4294901760
          %3804 = vmatpush.msra.mxu0 %v3803
          %v3805 = vand.u32 %v3780, 4294901760
          %3806 = vmatpush.msra.mxu0 %v3805
          %v3807 = vand.u32 %v3779, 4294901760
          %3808 = vmatpush.msra.mxu0 %v3807
          %v3809 = vand.u32 %v3784, 4294901760
          %v3810 = vsub.f32 %v3784, %v3809
          %v3811 = vand.u32 %v3810, 4294901760
          %v3812 = vsub.f32 %v3810, %v3811
          %v3813 = vand.u32 %v3812, 4294901760
          %3814 = vmatmul.f32.gmra.mxu0 %v3813
          %v3815 = vpop.f32.mrf.mxu0
          %v3816 = vadd.f32 0.0, %v3815
          %v3817 = vand.u32 %v3787, 4294901760
          %v3818 = vsub.f32 %v3787, %v3817
          %v3819 = vand.u32 %v3818, 4294901760
          %v3820 = vsub.f32 %v3818, %v3819
          %v3821 = vand.u32 %v3820, 4294901760
          %3822 = vmatmul.f32.gmra.mxu0 %v3821
          %v3823 = vpop.f32.mrf.mxu0
          %v3824 = vadd.f32 0.0, %v3823
          %3825 = vdwg.mxu0
          %3826 = vmatpush.msra.mxu0 0.0
          %3827 = vmatpush.msra.mxu0 0.0
          %3828 = vmatpush.msra.mxu0 0.0
          %3829 = vmatpush.msra.mxu0 0.0
          %3830 = vmatpush.msra.mxu0 0.0
          %3831 = vmatpush.msra.mxu0 0.0
          %3832 = vmatpush.msra.mxu0 0.0
          %3833 = vmatpush.msra.mxu0 0.0
          %3834 = vmatpush.msra.mxu0 0.0
          %3835 = vmatpush.msra.mxu0 0.0
          %3836 = vmatpush.msra.mxu0 0.0
          %3837 = vmatpush.msra.mxu0 0.0
          %v3838 = vand.u32 %v3782, 4294901760
          %v3839 = vsub.f32 %v3782, %v3838
          %v3840 = vand.u32 %v3839, 4294901760
          %v3841 = vsub.f32 %v3839, %v3840
          %v3842 = vand.u32 %v3841, 4294901760
          %3843 = vmatpush.msra.mxu0 %v3842
          %v3844 = vand.u32 %v3781, 4294901760
          %v3845 = vsub.f32 %v3781, %v3844
          %v3846 = vand.u32 %v3845, 4294901760
          %v3847 = vsub.f32 %v3845, %v3846
          %v3848 = vand.u32 %v3847, 4294901760
          %3849 = vmatpush.msra.mxu0 %v3848
          %v3850 = vand.u32 %v3780, 4294901760
          %v3851 = vsub.f32 %v3780, %v3850
          %v3852 = vand.u32 %v3851, 4294901760
          %v3853 = vsub.f32 %v3851, %v3852
          %v3854 = vand.u32 %v3853, 4294901760
          %3855 = vmatpush.msra.mxu0 %v3854
          %v3856 = vand.u32 %v3779, 4294901760
          %v3857 = vsub.f32 %v3779, %v3856
          %v3858 = vand.u32 %v3857, 4294901760
          %v3859 = vsub.f32 %v3857, %v3858
          %v3860 = vand.u32 %v3859, 4294901760
          %3861 = vmatpush.msra.mxu0 %v3860
          %v3862 = vand.u32 %v3784, 4294901760
          %3863 = vmatmul.f32.gmra.mxu0 %v3862
          %v3864 = vpop.f32.mrf.mxu0
          %v3865 = vadd.f32 %v3816, %v3864
          %v3866 = vand.u32 %v3787, 4294901760
          %3867 = vmatmul.f32.gmra.mxu0 %v3866
          %v3868 = vpop.f32.mrf.mxu0
          %v3869 = vadd.f32 %v3824, %v3868
          %3870 = vdwg.mxu0
          %3871 = vmatpush.msra.mxu0 0.0
          %3872 = vmatpush.msra.mxu0 0.0
          %3873 = vmatpush.msra.mxu0 0.0
          %3874 = vmatpush.msra.mxu0 0.0
          %3875 = vmatpush.msra.mxu0 0.0
          %3876 = vmatpush.msra.mxu0 0.0
          %3877 = vmatpush.msra.mxu0 0.0
          %3878 = vmatpush.msra.mxu0 0.0
          %3879 = vmatpush.msra.mxu0 0.0
          %3880 = vmatpush.msra.mxu0 0.0
          %3881 = vmatpush.msra.mxu0 0.0
          %3882 = vmatpush.msra.mxu0 0.0
          %v3883 = vand.u32 %v3782, 4294901760
          %v3884 = vsub.f32 %v3782, %v3883
          %3885 = vmatpush.msra.mxu0 %v3884
          %v3886 = vand.u32 %v3781, 4294901760
          %v3887 = vsub.f32 %v3781, %v3886
          %3888 = vmatpush.msra.mxu0 %v3887
          %v3889 = vand.u32 %v3780, 4294901760
          %v3890 = vsub.f32 %v3780, %v3889
          %3891 = vmatpush.msra.mxu0 %v3890
          %v3892 = vand.u32 %v3779, 4294901760
          %v3893 = vsub.f32 %v3779, %v3892
          %3894 = vmatpush.msra.mxu0 %v3893
          %v3895 = vand.u32 %v3784, 4294901760
          %v3896 = vsub.f32 %v3784, %v3895
          %3897 = vmatmul.f32.gmra.mxu0 %v3896
          %v3898 = vpop.f32.mrf.mxu0
          %v3899 = vadd.f32 %v3865, %v3898
          %v3900 = vand.u32 %v3787, 4294901760
          %v3901 = vsub.f32 %v3787, %v3900
          %3902 = vmatmul.f32.gmra.mxu0 %v3901
          %v3903 = vpop.f32.mrf.mxu0
          %v3904 = vadd.f32 %v3869, %v3903
          %3905 = vdwg.mxu0
          %3906 = vmatpush.msra.mxu0 0.0
          %3907 = vmatpush.msra.mxu0 0.0
          %3908 = vmatpush.msra.mxu0 0.0
          %3909 = vmatpush.msra.mxu0 0.0
          %3910 = vmatpush.msra.mxu0 0.0
          %3911 = vmatpush.msra.mxu0 0.0
          %3912 = vmatpush.msra.mxu0 0.0
          %3913 = vmatpush.msra.mxu0 0.0
          %3914 = vmatpush.msra.mxu0 0.0
          %3915 = vmatpush.msra.mxu0 0.0
          %3916 = vmatpush.msra.mxu0 0.0
          %3917 = vmatpush.msra.mxu0 0.0
          %v3918 = vand.u32 %v3782, 4294901760
          %3919 = vmatpush.msra.mxu0 %v3918
          %v3920 = vand.u32 %v3781, 4294901760
          %3921 = vmatpush.msra.mxu0 %v3920
          %v3922 = vand.u32 %v3780, 4294901760
          %3923 = vmatpush.msra.mxu0 %v3922
          %v3924 = vand.u32 %v3779, 4294901760
          %3925 = vmatpush.msra.mxu0 %v3924
          %v3926 = vand.u32 %v3784, 4294901760
          %v3927 = vsub.f32 %v3784, %v3926
          %v3928 = vand.u32 %v3927, 4294901760
          %3929 = vmatmul.f32.gmra.mxu0 %v3928
          %v3930 = vpop.f32.mrf.mxu0
          %v3931 = vadd.f32 %v3899, %v3930
          %v3932 = vand.u32 %v3787, 4294901760
          %v3933 = vsub.f32 %v3787, %v3932
          %v3934 = vand.u32 %v3933, 4294901760
          %3935 = vmatmul.f32.gmra.mxu0 %v3934
          %v3936 = vpop.f32.mrf.mxu0
          %v3937 = vadd.f32 %v3904, %v3936
          %3938 = vdwg.mxu0
          %3939 = vmatpush.msra.mxu0 0.0
          %3940 = vmatpush.msra.mxu0 0.0
          %3941 = vmatpush.msra.mxu0 0.0
          %3942 = vmatpush.msra.mxu0 0.0
          %3943 = vmatpush.msra.mxu0 0.0
          %3944 = vmatpush.msra.mxu0 0.0
          %3945 = vmatpush.msra.mxu0 0.0
          %3946 = vmatpush.msra.mxu0 0.0
          %3947 = vmatpush.msra.mxu0 0.0
          %3948 = vmatpush.msra.mxu0 0.0
          %3949 = vmatpush.msra.mxu0 0.0
          %3950 = vmatpush.msra.mxu0 0.0
          %v3951 = vand.u32 %v3782, 4294901760
          %v3952 = vsub.f32 %v3782, %v3951
          %v3953 = vand.u32 %v3952, 4294901760
          %3954 = vmatpush.msra.mxu0 %v3953
          %v3955 = vand.u32 %v3781, 4294901760
          %v3956 = vsub.f32 %v3781, %v3955
          %v3957 = vand.u32 %v3956, 4294901760
          %3958 = vmatpush.msra.mxu0 %v3957
          %v3959 = vand.u32 %v3780, 4294901760
          %v3960 = vsub.f32 %v3780, %v3959
          %v3961 = vand.u32 %v3960, 4294901760
          %3962 = vmatpush.msra.mxu0 %v3961
          %v3963 = vand.u32 %v3779, 4294901760
          %v3964 = vsub.f32 %v3779, %v3963
          %v3965 = vand.u32 %v3964, 4294901760
          %3966 = vmatpush.msra.mxu0 %v3965
          %v3967 = vand.u32 %v3784, 4294901760
          %3968 = vmatmul.f32.gmra.mxu0 %v3967
          %v3969 = vpop.f32.mrf.mxu0
          %v3970 = vadd.f32 %v3931, %v3969
          %v3971 = vand.u32 %v3787, 4294901760
          %3972 = vmatmul.f32.gmra.mxu0 %v3971
          %v3973 = vpop.f32.mrf.mxu0
          %v3974 = vadd.f32 %v3937, %v3973
          %3975 = vdwg.mxu0
          %3976 = vmatpush.msra.mxu0 0.0
          %3977 = vmatpush.msra.mxu0 0.0
          %3978 = vmatpush.msra.mxu0 0.0
          %3979 = vmatpush.msra.mxu0 0.0
          %3980 = vmatpush.msra.mxu0 0.0
          %3981 = vmatpush.msra.mxu0 0.0
          %3982 = vmatpush.msra.mxu0 0.0
          %3983 = vmatpush.msra.mxu0 0.0
          %3984 = vmatpush.msra.mxu0 0.0
          %3985 = vmatpush.msra.mxu0 0.0
          %3986 = vmatpush.msra.mxu0 0.0
          %3987 = vmatpush.msra.mxu0 0.0
          %v3988 = vand.u32 %v3782, 4294901760
          %3989 = vmatpush.msra.mxu0 %v3988
          %v3990 = vand.u32 %v3781, 4294901760
          %3991 = vmatpush.msra.mxu0 %v3990
          %v3992 = vand.u32 %v3780, 4294901760
          %3993 = vmatpush.msra.mxu0 %v3992
          %v3994 = vand.u32 %v3779, 4294901760
          %3995 = vmatpush.msra.mxu0 %v3994
          %v3996 = vand.u32 %v3784, 4294901760
          %3997 = vmatmul.f32.gmra.mxu0 %v3996
          %v3998 = vpop.f32.mrf.mxu0
          %v3999 = vadd.f32 %v3970, %v3998
          %v4000 = vand.u32 %v3787, 4294901760
          %4001 = vmatmul.f32.gmra.mxu0 %v4000
          %v4002 = vpop.f32.mrf.mxu0
          %v4003 = vadd.f32 %v3974, %v4002
          %4004 = vdwg.mxu0
          %v4005 = vld [vmem:[#allocation11] sm:$0xff]
          %v4006 = vld [vmem:[#allocation11 + $0x8] sm:$0xff]
          %v4007 = vld [vmem:[#allocation11 + $0x10] sm:$0xff]
          %v4008 = vld [vmem:[#allocation11 + $0x18] sm:$0xff]
          %v4010 = vsel %vm476, %v3999, 0
          %v4013 = vsel %vm476, %v4003, 0
          %4015 = vmatpush.msra.mxu0 0.0
          %4016 = vmatpush.msra.mxu0 0.0
          %4017 = vmatpush.msra.mxu0 0.0
          %4018 = vmatpush.msra.mxu0 0.0
          %4019 = vmatpush.msra.mxu0 0.0
          %4020 = vmatpush.msra.mxu0 0.0
          %4021 = vmatpush.msra.mxu0 0.0
          %4022 = vmatpush.msra.mxu0 0.0
          %4023 = vmatpush.msra.mxu0 0.0
          %4024 = vmatpush.msra.mxu0 0.0
          %4025 = vmatpush.msra.mxu0 0.0
          %4026 = vmatpush.msra.mxu0 0.0
          %v4027 = vand.u32 %v4008, 4294901760
          %4028 = vmatpush.msra.mxu0 %v4027
          %v4029 = vand.u32 %v4007, 4294901760
          %4030 = vmatpush.msra.mxu0 %v4029
          %v4031 = vand.u32 %v4006, 4294901760
          %4032 = vmatpush.msra.mxu0 %v4031
          %v4033 = vand.u32 %v4005, 4294901760
          %4034 = vmatpush.msra.mxu0 %v4033
          %v4035 = vand.u32 %v4010, 4294901760
          %v4036 = vsub.f32 %v4010, %v4035
          %v4037 = vand.u32 %v4036, 4294901760
          %v4038 = vsub.f32 %v4036, %v4037
          %v4039 = vand.u32 %v4038, 4294901760
          %4040 = vmatmul.f32.gmra.mxu0 %v4039
          %v4041 = vpop.f32.mrf.mxu0
          %v4042 = vadd.f32 0.0, %v4041
          %v4043 = vand.u32 %v4013, 4294901760
          %v4044 = vsub.f32 %v4013, %v4043
          %v4045 = vand.u32 %v4044, 4294901760
          %v4046 = vsub.f32 %v4044, %v4045
          %v4047 = vand.u32 %v4046, 4294901760
          %4048 = vmatmul.f32.gmra.mxu0 %v4047
          %v4049 = vpop.f32.mrf.mxu0
          %v4050 = vadd.f32 0.0, %v4049
          %4051 = vdwg.mxu0
          %4052 = vmatpush.msra.mxu0 0.0
          %4053 = vmatpush.msra.mxu0 0.0
          %4054 = vmatpush.msra.mxu0 0.0
          %4055 = vmatpush.msra.mxu0 0.0
          %4056 = vmatpush.msra.mxu0 0.0
          %4057 = vmatpush.msra.mxu0 0.0
          %4058 = vmatpush.msra.mxu0 0.0
          %4059 = vmatpush.msra.mxu0 0.0
          %4060 = vmatpush.msra.mxu0 0.0
          %4061 = vmatpush.msra.mxu0 0.0
          %4062 = vmatpush.msra.mxu0 0.0
          %4063 = vmatpush.msra.mxu0 0.0
          %v4064 = vand.u32 %v4008, 4294901760
          %v4065 = vsub.f32 %v4008, %v4064
          %v4066 = vand.u32 %v4065, 4294901760
          %v4067 = vsub.f32 %v4065, %v4066
          %v4068 = vand.u32 %v4067, 4294901760
          %4069 = vmatpush.msra.mxu0 %v4068
          %v4070 = vand.u32 %v4007, 4294901760
          %v4071 = vsub.f32 %v4007, %v4070
          %v4072 = vand.u32 %v4071, 4294901760
          %v4073 = vsub.f32 %v4071, %v4072
          %v4074 = vand.u32 %v4073, 4294901760
          %4075 = vmatpush.msra.mxu0 %v4074
          %v4076 = vand.u32 %v4006, 4294901760
          %v4077 = vsub.f32 %v4006, %v4076
          %v4078 = vand.u32 %v4077, 4294901760
          %v4079 = vsub.f32 %v4077, %v4078
          %v4080 = vand.u32 %v4079, 4294901760
          %4081 = vmatpush.msra.mxu0 %v4080
          %v4082 = vand.u32 %v4005, 4294901760
          %v4083 = vsub.f32 %v4005, %v4082
          %v4084 = vand.u32 %v4083, 4294901760
          %v4085 = vsub.f32 %v4083, %v4084
          %v4086 = vand.u32 %v4085, 4294901760
          %4087 = vmatpush.msra.mxu0 %v4086
          %v4088 = vand.u32 %v4010, 4294901760
          %4089 = vmatmul.f32.gmra.mxu0 %v4088
          %v4090 = vpop.f32.mrf.mxu0
          %v4091 = vadd.f32 %v4042, %v4090
          %v4092 = vand.u32 %v4013, 4294901760
          %4093 = vmatmul.f32.gmra.mxu0 %v4092
          %v4094 = vpop.f32.mrf.mxu0
          %v4095 = vadd.f32 %v4050, %v4094
          %4096 = vdwg.mxu0
          %4097 = vmatpush.msra.mxu0 0.0
          %4098 = vmatpush.msra.mxu0 0.0
          %4099 = vmatpush.msra.mxu0 0.0
          %4100 = vmatpush.msra.mxu0 0.0
          %4101 = vmatpush.msra.mxu0 0.0
          %4102 = vmatpush.msra.mxu0 0.0
          %4103 = vmatpush.msra.mxu0 0.0
          %4104 = vmatpush.msra.mxu0 0.0
          %4105 = vmatpush.msra.mxu0 0.0
          %4106 = vmatpush.msra.mxu0 0.0
          %4107 = vmatpush.msra.mxu0 0.0
          %4108 = vmatpush.msra.mxu0 0.0
          %v4109 = vand.u32 %v4008, 4294901760
          %v4110 = vsub.f32 %v4008, %v4109
          %4111 = vmatpush.msra.mxu0 %v4110
          %v4112 = vand.u32 %v4007, 4294901760
          %v4113 = vsub.f32 %v4007, %v4112
          %4114 = vmatpush.msra.mxu0 %v4113
          %v4115 = vand.u32 %v4006, 4294901760
          %v4116 = vsub.f32 %v4006, %v4115
          %4117 = vmatpush.msra.mxu0 %v4116
          %v4118 = vand.u32 %v4005, 4294901760
          %v4119 = vsub.f32 %v4005, %v4118
          %4120 = vmatpush.msra.mxu0 %v4119
          %v4121 = vand.u32 %v4010, 4294901760
          %v4122 = vsub.f32 %v4010, %v4121
          %4123 = vmatmul.f32.gmra.mxu0 %v4122
          %v4124 = vpop.f32.mrf.mxu0
          %v4125 = vadd.f32 %v4091, %v4124
          %v4126 = vand.u32 %v4013, 4294901760
          %v4127 = vsub.f32 %v4013, %v4126
          %4128 = vmatmul.f32.gmra.mxu0 %v4127
          %v4129 = vpop.f32.mrf.mxu0
          %v4130 = vadd.f32 %v4095, %v4129
          %4131 = vdwg.mxu0
          %4132 = vmatpush.msra.mxu0 0.0
          %4133 = vmatpush.msra.mxu0 0.0
          %4134 = vmatpush.msra.mxu0 0.0
          %4135 = vmatpush.msra.mxu0 0.0
          %4136 = vmatpush.msra.mxu0 0.0
          %4137 = vmatpush.msra.mxu0 0.0
          %4138 = vmatpush.msra.mxu0 0.0
          %4139 = vmatpush.msra.mxu0 0.0
          %4140 = vmatpush.msra.mxu0 0.0
          %4141 = vmatpush.msra.mxu0 0.0
          %4142 = vmatpush.msra.mxu0 0.0
          %4143 = vmatpush.msra.mxu0 0.0
          %v4144 = vand.u32 %v4008, 4294901760
          %4145 = vmatpush.msra.mxu0 %v4144
          %v4146 = vand.u32 %v4007, 4294901760
          %4147 = vmatpush.msra.mxu0 %v4146
          %v4148 = vand.u32 %v4006, 4294901760
          %4149 = vmatpush.msra.mxu0 %v4148
          %v4150 = vand.u32 %v4005, 4294901760
          %4151 = vmatpush.msra.mxu0 %v4150
          %v4152 = vand.u32 %v4010, 4294901760
          %v4153 = vsub.f32 %v4010, %v4152
          %v4154 = vand.u32 %v4153, 4294901760
          %4155 = vmatmul.f32.gmra.mxu0 %v4154
          %v4156 = vpop.f32.mrf.mxu0
          %v4157 = vadd.f32 %v4125, %v4156
          %v4158 = vand.u32 %v4013, 4294901760
          %v4159 = vsub.f32 %v4013, %v4158
          %v4160 = vand.u32 %v4159, 4294901760
          %4161 = vmatmul.f32.gmra.mxu0 %v4160
          %v4162 = vpop.f32.mrf.mxu0
          %v4163 = vadd.f32 %v4130, %v4162
          %4164 = vdwg.mxu0
          %4165 = vmatpush.msra.mxu0 0.0
          %4166 = vmatpush.msra.mxu0 0.0
          %4167 = vmatpush.msra.mxu0 0.0
          %4168 = vmatpush.msra.mxu0 0.0
          %4169 = vmatpush.msra.mxu0 0.0
          %4170 = vmatpush.msra.mxu0 0.0
          %4171 = vmatpush.msra.mxu0 0.0
          %4172 = vmatpush.msra.mxu0 0.0
          %4173 = vmatpush.msra.mxu0 0.0
          %4174 = vmatpush.msra.mxu0 0.0
          %4175 = vmatpush.msra.mxu0 0.0
          %4176 = vmatpush.msra.mxu0 0.0
          %v4177 = vand.u32 %v4008, 4294901760
          %v4178 = vsub.f32 %v4008, %v4177
          %v4179 = vand.u32 %v4178, 4294901760
          %4180 = vmatpush.msra.mxu0 %v4179
          %v4181 = vand.u32 %v4007, 4294901760
          %v4182 = vsub.f32 %v4007, %v4181
          %v4183 = vand.u32 %v4182, 4294901760
          %4184 = vmatpush.msra.mxu0 %v4183
          %v4185 = vand.u32 %v4006, 4294901760
          %v4186 = vsub.f32 %v4006, %v4185
          %v4187 = vand.u32 %v4186, 4294901760
          %4188 = vmatpush.msra.mxu0 %v4187
          %v4189 = vand.u32 %v4005, 4294901760
          %v4190 = vsub.f32 %v4005, %v4189
          %v4191 = vand.u32 %v4190, 4294901760
          %4192 = vmatpush.msra.mxu0 %v4191
          %v4193 = vand.u32 %v4010, 4294901760
          %4194 = vmatmul.f32.gmra.mxu0 %v4193
          %v4195 = vpop.f32.mrf.mxu0
          %v4196 = vadd.f32 %v4157, %v4195
          %v4197 = vand.u32 %v4013, 4294901760
          %4198 = vmatmul.f32.gmra.mxu0 %v4197
          %v4199 = vpop.f32.mrf.mxu0
          %v4200 = vadd.f32 %v4163, %v4199
          %4201 = vdwg.mxu0
          %4202 = vmatpush.msra.mxu0 0.0
          %4203 = vmatpush.msra.mxu0 0.0
          %4204 = vmatpush.msra.mxu0 0.0
          %4205 = vmatpush.msra.mxu0 0.0
          %4206 = vmatpush.msra.mxu0 0.0
          %4207 = vmatpush.msra.mxu0 0.0
          %4208 = vmatpush.msra.mxu0 0.0
          %4209 = vmatpush.msra.mxu0 0.0
          %4210 = vmatpush.msra.mxu0 0.0
          %4211 = vmatpush.msra.mxu0 0.0
          %4212 = vmatpush.msra.mxu0 0.0
          %4213 = vmatpush.msra.mxu0 0.0
          %v4214 = vand.u32 %v4008, 4294901760
          %4215 = vmatpush.msra.mxu0 %v4214
          %v4216 = vand.u32 %v4007, 4294901760
          %4217 = vmatpush.msra.mxu0 %v4216
          %v4218 = vand.u32 %v4006, 4294901760
          %4219 = vmatpush.msra.mxu0 %v4218
          %v4220 = vand.u32 %v4005, 4294901760
          %4221 = vmatpush.msra.mxu0 %v4220
          %v4222 = vand.u32 %v4010, 4294901760
          %4223 = vmatmul.f32.gmra.mxu0 %v4222
          %v4224 = vpop.f32.mrf.mxu0
          %v4225 = vadd.f32 %v4196, %v4224
          %v4226 = vand.u32 %v4013, 4294901760
          %4227 = vmatmul.f32.gmra.mxu0 %v4226
          %v4228 = vpop.f32.mrf.mxu0
          %v4229 = vadd.f32 %v4200, %v4228
          %4230 = vdwg.mxu0
          %s4231 = scalar_lea.vmem %s417, 48
          %4232 = vst.msk [vmem:[%s4231] sm:$0xff] %vm2860, %v4225
          %4233 = vst.msk [vmem:[%s4231 + $0x8] sm:$0xff] %vm2860, %v4229
        $region68: #{fwd.2} parent=39 // pred_fallthru
          _
        %s4234 = sand.u32 %s170, 1
        %s4235 = scalar_lea.sflag [#allocation5], %s4234
        %s4236 = sand.u32 %s170, 1
        %s4237 = smul.addr %s4236, 128
        %s4238 = scalar_lea.vmem [#allocation12], %s4237
        %s4239 = smul.u32 4, %s32
        %p4240 = scmp.lt.s32.totalorder %s4239, 7
        %s4241 = scalar_select %p4240, %s4239, 7
        %s4242 = smul.addr %s4241, 2
        %s4243 = smul.addr %s4242, 8
        %s4244 = scalar_lea.vmem %s6, %s4243
        // Predicated region
        $region69: #{fwd.2} parent=39 // pred_check
          %p4245 = pneg %p180
        $region70: #{fwd.2} parent=39 // pred_check_branch
          %4247 = sbr.rel (%p4245) target = $region72
        $region71: #{fwd.2} parent=39 // pred_region
          #allocation14 [shape = 'u32[6]{0}', space=smem, size = 0x18, scoped, tag = 'DMA stride descriptor']
          %s4248 = smul.u32 4, %s32
          %4250 = vsyncadd %s4235, 0
          %s4251 = smul.addr %s33, 4
          %s4252 = smul.addr %s4248, 24
          %s4253 = sadd.s32 %s4251, %s4252
          %s4254 = smul.addr %s4253, 8
          %s4255 = scalar_lea.hbm %s5, %s4254
          %s4257 = sshll.u32 1, 14
          %s4258 = sxor.u32 4294967295, %s4257
          %s4261 = sshll.u32 7, 18
          %s4262 = sxor.u32 4294967295, %s4261
          %s4263 = sand.u32 0, %s4262
          %s4265 = sor.u32 %s4263, 0
          %s4266 = sshll.u32 %s4238, 4
          %s4267 = int_to_ptr.vmem [resolvable:$true] %s4266
          %s4268 = sshll.u32 %s4255, 4
          %s4269 = int_to_ptr.hbm [resolvable:$true] %s4268
          %4275 = sst [smem:[#allocation14]] 512
          %s4276 = scalar_lea.smem [#allocation14], 1
          %4277 = sst [smem:[%s4276]] 3072
          %s4278 = scalar_lea.smem [#allocation14], 2
          %4279 = sst [smem:[%s4278]] 4
          %s4280 = scalar_lea.smem [#allocation14], 3
          %4281 = sst [smem:[%s4280]] 128
          %s4282 = scalar_lea.smem [#allocation14], 4
          %4283 = sst [smem:[%s4282]] 128
          %s4284 = scalar_lea.smem [#allocation14], 5
          %4285 = sst [smem:[%s4284]] 8
          %4287 = dma.general %s4267, 2048, %s4269, %s4235, [#allocation13], [#allocation14], %s4265, 0
        $region72: #{fwd.2} parent=39 // pred_fallthru
          _
        // Predicated region
        $region73: #{fwd.2} parent=39 // pred_check
          %p4288 = pneg %p206
        $region74: #{fwd.2} parent=39 // pred_check_branch
          %4290 = sbr.rel (%p4288) target = $region76
        $region75: #{fwd.2} parent=39 // pred_region
          %s4291 = smul.u32 4, %s32
        $region76: #{fwd.2} parent=39 // pred_fallthru
          _
      $region40: #{fwd.2} parent=5 // pred_fallthru
        _
      %p4292 = scmp.le.s32.totalorder 2, %s23
      // Predicated region
      $region77: #{fwd.2} parent=5 // pred_check
        %p4293 = pneg %p4292
      $region78: #{fwd.2} parent=5 // pred_check_branch
        %4295 = sbr.rel (%p4293) target = $region80
      $region79: #{fwd.2} parent=5 // pred_region
        %s4296 = ssub.s32 %s23, 2
        // Predicated region
        $region81: #{fwd.2} parent=79 // pred_check
          %p4297 = pneg %p186
        $region82: #{fwd.2} parent=79 // pred_check_branch
          %4299 = sbr.rel (%p4297) target = $region84
        $region83: #{fwd.2} parent=79 // pred_region
          %s4300 = sand.u32 %s171, 1
          %s4301 = scalar_lea.sflag [#allocation5], %s4300
          %s4302 = sand.u32 %s171, 1
          %s4303 = smul.addr %s4302, 128
          %s4304 = scalar_lea.vmem [#allocation12], %s4303
          %4306 = dma.done %s4301, 2048
        $region84: #{fwd.2} parent=79 // pred_fallthru
          _
        // Predicated region
        $region85: #{fwd.2} parent=79 // pred_check
          %p4307 = pneg %p212
        $region86: #{fwd.2} parent=79 // pred_check_branch
          %4309 = sbr.rel (%p4307) target = $region88
        $region87: #{fwd.2} parent=79 // pred_region
          %s4310 = smul.u32 4, %s34
          %p4311 = scmp.lt.s32.totalorder %s4310, 7
          %s4312 = scalar_select %p4311, %s4310, 7
          %s4313 = smul.addr %s4312, 2
          %s4314 = smul.addr %s4313, 8
          %s4315 = scalar_lea.vmem %s6, %s4314
        $region88: #{fwd.2} parent=79 // pred_fallthru
          _
      $region80: #{fwd.2} parent=5 // pred_fallthru
        _
    $region6: #{fwd.2} parent=1 // loop_footer
      %s27 = sadd.s32 1, %s23
    $region7: #{fwd.2} parent=1 // loop_footer_branch
      %22 = sbr.rel target = $region3
    $region8: #{fwd.2} parent=1 // loop_exit
      _
    %4316 = vsyncpa [#allocation4], 1
    %s4317 = scalar_lea.sflag [#allocation4], 1
    %4318 = vsyncpa %s4317, 1
    %4319 = vsyncpa [#allocation7], 1
    %s4320 = scalar_lea.sflag [#allocation7], 1
    %4321 = vsyncpa %s4320, 1
    %4322 = vsyncpa [#allocation10], 1
    %4323 = vsyncpa [#allocation5], 1
    %s4324 = scalar_lea.sflag [#allocation5], 1
    %4325 = vsyncpa %s4324, 1

</llo_original>
